<compile_context>
chip_gen: v6e
topology: v6e:2x2x1
jax: 0.10.0
libtpu: 0.0.40
codegen_flags: <defaults>
</compile_context>

<pallas_src>
import functools

import jax
import jax.numpy as jnp
import numpy as np
from jax import lax
from jax.experimental import pallas as pl
from jax.experimental.pallas import tpu as pltpu


def _mxu_dot(a, b):
    # Single-pass MXU matmul: bf16 operands, f32 accumulation.
    return jnp.dot(a.astype(jnp.bfloat16), b, preferred_element_type=jnp.float32)


def _lstm_cell(gates, c_prev, h2):
    i = jax.nn.sigmoid(gates[:, 0 * h2:1 * h2])
    f = jax.nn.sigmoid(gates[:, 1 * h2:2 * h2])
    g = jnp.tanh(gates[:, 2 * h2:3 * h2])
    o = jax.nn.sigmoid(gates[:, 3 * h2:4 * h2])
    c_new = f * c_prev + i * g
    h_new = o * jnp.tanh(c_new)
    return h_new, c_new


def decoder_kernel(
    # inputs
    emb_ref,     # [T*Bp, E]     bf16  embedded targets, time-major rows
    enc_ref,     # [Bp, S, 2H]   f32   encoder outputs
    h0_ref,      # [L, Bp, 2H]   f32   initial hidden
    c0_ref,      # [L, Bp, 2H]   f32   initial cell
    w_ih0_ref,   # [E+2H, 8H]    bf16  layer0 W_ih^T (full, fused)
    w_hh0_ref,   # [2H, 8H]      bf16  layer0 W_hh^T
    b0_ref,      # [1,  8H]      f32   b_ih0 + b_hh0
    w_ih1_ref,   # [2H, 8H]      bf16  layer1 W_ih^T
    w_hh1_ref,   # [2H, 8H]      bf16  layer1 W_hh^T
    b1_ref,      # [1,  8H]      f32   b_ih1 + b_hh1
    w_fc_ref,    # [2H, Vp]      bf16  fc.weight^T (vocab zero-padded)
    b_fc_ref,    # [1,  Vp]      f32   fc.bias (-1e30 in padded vocab cols)
    # outputs
    logp_ref,    # [T*Bp, Vp]    f32   log-softmax(fc(h1))
    c0_out_ref,  # [T*Bp, 2H]    f32   layer-0 cell state per step
    c1_out_ref,  # [T*Bp, 2H]    f32   layer-1 cell state per step
    dech_ref,    # [L, Bp, 2H]   f32   dec_hidden from t == 0
    # scratch
    xcat_ref,    # VMEM [T*Bp, E+2H]      bf16  [emb | tiled context]
    gin0_ref,    # VMEM [T*Bp, 8H]        f32   fused input gate pre-acts
    act0_ref,    # VMEM [T-1, Bp, 3*2H]   f32   layer-0 [f | i*g | o]
    h0all_ref,   # VMEM [(T-1)*Bp, 2H]    f32   layer-0 hidden, t >= 1
    act1_ref,    # VMEM [T-1, Bp, 3*2H]   f32   layer-1 [f | i*g | o]
    h1all_ref,   # VMEM [T*Bp, 2H]        f32   layer-1 hidden, all t
    *, seq_len, batch_pad, emb_size,
):
    h2 = h0_ref.shape[-1]
    g8 = 4 * h2
    bp = batch_pad
    T = seq_len
    E = emb_size
    f32 = jnp.float32
    bf16 = jnp.bfloat16

    # ---------------- loop-invariant hoists --------------------------------
    # "Attention": softmax over a size-1 dim -> weights exactly 1.0, so the
    # context is just sum_S(encoder_outputs) and never changes across t.
    context = jnp.sum(enc_ref[...], axis=1)                          # [Bp, 2H]

    # Fused input transform for ALL timesteps: X = [emb | context], one MXU
    # pass with K = E + 2H (fills the systolic depth); b0 folded in once.
    xcat_ref[:, 0:E] = emb_ref[...]
    ctx_tiled = jnp.broadcast_to(context[None], (T, bp, h2)).reshape(T * bp, h2)
    xcat_ref[:, E:E + h2] = ctx_tiled.astype(bf16)
    gin0_ref[...] = jnp.dot(xcat_ref[...], w_ih0_ref[...],
                            preferred_element_type=f32) + b0_ref[...]

    # ---------------- t == 0 : uses the random initial hidden/cell ---------
    rec0 = _mxu_dot(h0_ref[0], w_hh0_ref[...])                       # [Bp, 8H]
    rec1 = _mxu_dot(h0_ref[1], w_hh1_ref[...]) + b1_ref[...]         # [Bp, 8H]

    g0 = gin0_ref[0:bp, :] + rec0
    h0n, c0n = _lstm_cell(g0, c0_ref[0], h2)
    # inter-layer LSTM dropout is identity in eval mode
    g1 = _mxu_dot(h0n, w_ih1_ref[...]) + rec1
    h1n, c1n = _lstm_cell(g1, c0_ref[1], h2)

    dech_ref[0] = h0n
    dech_ref[1] = h1n
    c0_out_ref[0:bp, :] = c0n
    c1_out_ref[0:bp, :] = c1n
    h1all_ref[0:bp, :] = h1n

    if T > 1:
        nrest = T - 1
        unroll_amt = True if nrest <= 16 else 8

        # PyTorch quirk: every later step re-feeds t==0's dec_hidden, so the
        # recurrent matmuls are loop-invariant for t >= 1, and no gate
        # pre-activation depends on the carried cell -> batch everything.
        rec0_frozen = _mxu_dot(h0n, w_hh0_ref[...])                  # [Bp, 8H]
        g0_rest = (gin0_ref[pl.ds(bp, nrest * bp), :]
                   .reshape(nrest, bp, g8) + rec0_frozen[None])
        # batched nonlinearities (EUP pipelines off the critical path)
        act0_ref[:, :, 0:h2] = jax.nn.sigmoid(g0_rest[..., h2:2 * h2])        # f
        act0_ref[:, :, h2:2 * h2] = (jax.nn.sigmoid(g0_rest[..., 0:h2]) *
                                     jnp.tanh(g0_rest[..., 2 * h2:3 * h2]))   # i*g
        act0_ref[:, :, 2 * h2:3 * h2] = jax.nn.sigmoid(g0_rest[..., 3 * h2:])  # o

        # layer-0 cell recurrence: pure elementwise, 1 tanh per step
        def step0(s, c_prev):
            a = act0_ref[s]                                          # [Bp, 3*2H]
            c_new = a[:, 0:h2] * c_prev + a[:, h2:2 * h2]
            h_new = a[:, 2 * h2:3 * h2] * jnp.tanh(c_new)
            c0_out_ref[pl.ds(pl.multiple_of((s + 1) * bp, bp), bp), :] = c_new
            h0all_ref[pl.ds(pl.multiple_of(s * bp, bp), bp), :] = h_new
            return c_new

        c0_last = lax.fori_loop(0, nrest, step0, c0n, unroll=unroll_amt)
        del c0_last

        # ONE batched layer-1 input matmul (M = (T-1)*Bp instead of T-1
        # tiny M=Bp matmuls on the serial chain).
        rec1_frozen = b1_ref[...] + _mxu_dot(h1n, w_hh1_ref[...])    # [Bp, 8H]
        g1_rest = (_mxu_dot(h0all_ref[...], w_ih1_ref[...])
                   .reshape(nrest, bp, g8) + rec1_frozen[None])
        act1_ref[:, :, 0:h2] = jax.nn.sigmoid(g1_rest[..., h2:2 * h2])
        act1_ref[:, :, h2:2 * h2] = (jax.nn.sigmoid(g1_rest[..., 0:h2]) *
                                     jnp.tanh(g1_rest[..., 2 * h2:3 * h2]))
        act1_ref[:, :, 2 * h2:3 * h2] = jax.nn.sigmoid(g1_rest[..., 3 * h2:])

        # layer-1 cell recurrence: pure elementwise, 1 tanh per step
        def step1(s, c_prev):
            a = act1_ref[s]
            c_new = a[:, 0:h2] * c_prev + a[:, h2:2 * h2]
            h_new = a[:, 2 * h2:3 * h2] * jnp.tanh(c_new)
            off = pl.multiple_of((s + 1) * bp, bp)
            c1_out_ref[pl.ds(off, bp), :] = c_new
            h1all_ref[pl.ds(off, bp), :] = h_new
            return c_new

        lax.fori_loop(0, nrest, step1, c1n, unroll=unroll_amt)

    # ---------------- fc + log-softmax, batched over all timesteps ---------
    logits = _mxu_dot(h1all_ref[...], w_fc_ref[...]) + b_fc_ref[...]  # [T*Bp, Vp]
    m = jnp.max(logits, axis=-1, keepdims=True)
    lse = m + jnp.log(jnp.sum(jnp.exp(logits - m), axis=-1, keepdims=True))
    logp_ref[...] = logits - lse


def _round_up(x, m):
    return ((x + m - 1) // m) * m


def decoder_forward(x_ids, encoder_hidden, encoder_outputs, params,
                    initial_hidden, initial_cell):
    """Mirrors Decoder.forward (teacher_forcing_ratio=1.0, eval-mode dropout).

    encoder_hidden is accepted but unused, exactly as in the PyTorch forward.
    """
    del encoder_hidden  # unused by the reference forward
    B, T = x_ids.shape
    L, _, H2 = initial_hidden.shape
    assert L == 2, "kernel is specialized to the module's num_layers=2"
    V, E = params["embedding"].shape

    Bp = max(8, _round_up(B, 8))      # sublane-pad the batch
    Vp = _round_up(V, 128)            # lane-dense vocab padding
    G8 = 4 * H2
    nrest = max(T - 1, 1)
    f32, bf16 = jnp.float32, jnp.bfloat16

    # ---- glue: embedding lookup (gather) + batch pad; dropout == identity
    emb = params["embedding"][x_ids].astype(f32)                     # [B, T, E]
    emb_tm = jnp.transpose(emb, (1, 0, 2))                           # [T, B, E]
    emb_tm = jnp.pad(emb_tm, ((0, 0), (0, Bp - B), (0, 0)))
    emb2d = emb_tm.reshape(T * Bp, E).astype(bf16)

    enc = jnp.pad(encoder_outputs.astype(f32), ((0, Bp - B), (0, 0), (0, 0)))
    h0 = jnp.pad(initial_hidden.astype(f32), ((0, 0), (0, Bp - B), (0, 0)))
    c0 = jnp.pad(initial_cell.astype(f32), ((0, 0), (0, Bp - B), (0, 0)))

    # ---- glue: weight layout prep (PyTorch stores W as [4*2H, in]); pass W^T
    w_ih0_t = params["w_ih0"].T.astype(bf16)                         # [E+2H, 8H]
    w_hh0 = params["w_hh0"].T.astype(bf16)
    b0 = (params["b_ih0"] + params["b_hh0"]).reshape(1, G8).astype(f32)
    w_ih1 = params["w_ih1"].T.astype(bf16)
    w_hh1 = params["w_hh1"].T.astype(bf16)
    b1 = (params["b_ih1"] + params["b_hh1"]).reshape(1, G8).astype(f32)
    w_fc = jnp.pad(params["w_fc"].T.astype(f32),
                   ((0, 0), (0, Vp - V))).astype(bf16)               # [2H, Vp]
    b_fc = jnp.pad(params["b_fc"].astype(f32), (0, Vp - V),
                   constant_values=-1e30).reshape(1, Vp)

    inputs = (emb2d, enc, h0, c0, w_ih0_t, w_hh0, b0,
              w_ih1, w_hh1, b1, w_fc, b_fc)

    vmem_spec = pl.BlockSpec(memory_space=pltpu.MemorySpace.VMEM)

    out_shapes = (
        jax.ShapeDtypeStruct((T * Bp, Vp), f32),     # log-probs
        jax.ShapeDtypeStruct((T * Bp, H2), f32),     # layer-0 cell per step
        jax.ShapeDtypeStruct((T * Bp, H2), f32),     # layer-1 cell per step
        jax.ShapeDtypeStruct((L, Bp, H2), f32),      # dec_hidden from t == 0
    )

    kernel = functools.partial(decoder_kernel, seq_len=T, batch_pad=Bp,
                               emb_size=E)

    # No grid: the whole problem is one latency-bound invocation; everything
    # is pinned to VMEM.  (Keep vmem_limit_bytes explicit: v5e's scoped
    # default is 16 MiB; raise toward ~100 MiB on v6e for production vocab,
    # or tile the epilogue over Vp on v7x — see TODO above.)
    logp2d, c0_all, c1_all, dec_h = pl.pallas_call(
        kernel,
        in_specs=[vmem_spec] * len(inputs),
        out_specs=(vmem_spec,) * len(out_shapes),
        out_shape=out_shapes,
        scratch_shapes=[
            pltpu.VMEM((T * Bp, E + H2), bf16),      # [emb | context]
            pltpu.VMEM((T * Bp, G8), f32),           # fused input gate pre-acts
            pltpu.VMEM((nrest, Bp, 3 * H2), f32),    # layer-0 [f | i*g | o]
            pltpu.VMEM((nrest * Bp, H2), f32),       # layer-0 hidden, t >= 1
            pltpu.VMEM((nrest, Bp, 3 * H2), f32),    # layer-1 [f | i*g | o]
            pltpu.VMEM((T * Bp, H2), f32),           # layer-1 hidden, all t
        ],
        compiler_params=pltpu.CompilerParams(
            vmem_limit_bytes=32 * 1024 * 1024),
    )(*inputs)

    # ---- glue: strip padding, reassemble PyTorch output conventions
    outputs = logp2d.reshape(T, Bp, Vp)[:, :B, :V]
    outputs = jnp.transpose(outputs, (1, 0, 2))                      # [B, T, V]
    c0_t = c0_all.reshape(T, Bp, H2)[:, :B]
    c1_t = c1_all.reshape(T, Bp, H2)[:, :B]
    cell_states = jnp.stack([c0_t, c1_t], axis=0)                    # [L, T, B, 2H]
    dec_h = dec_h[:, :B]
    hidden_states = jnp.stack([initial_hidden] + [dec_h] * T, axis=1)  # [L,T+1,B,2H]
    return outputs, hidden_states, cell_states


# ---------------------------------------------------------------------------
# pure-JAX reference (mirrors the PyTorch forward, for verification only)
# ---------------------------------------------------------------------------
def _ref_dot(a, b):
    return jnp.dot(a, b, preferred_element_type=jnp.float32,
                   precision=jax.lax.Precision.HIGHEST)


def decoder_forward_ref(x_ids, encoder_outputs, params, h_init, c_init):
    B, T = x_ids.shape
    emb = params["embedding"][x_ids].astype(jnp.float32)
    context = jnp.sum(encoder_outputs, axis=1)

    def lstm_step(x, h, c, w_ih, w_hh, b_ih, b_hh):
        gates = _ref_dot(x, w_ih.T) + b_ih + _ref_dot(h, w_hh.T) + b_hh
        i, f, g, o = jnp.split(gates, 4, axis=-1)
        c_new = jax.nn.sigmoid(f) * c + jax.nn.sigmoid(i) * jnp.tanh(g)
        h_new = jax.nn.sigmoid(o) * jnp.tanh(c_new)
        return h_new, c_new

    outputs, cells = [], []
    h_use, c_prev, dec_h = h_init, c_init, None
    for t in range(T):
        x0 = jnp.concatenate([emb[:, t, :], context], axis=-1)
        h0n, c0n = lstm_step(x0, h_use[0], c_prev[0], params["w_ih0"],
                             params["w_hh0"], params["b_ih0"], params["b_hh0"])
        h1n, c1n = lstm_step(h0n, h_use[1], c_prev[1], params["w_ih1"],
                             params["w_hh1"], params["b_ih1"], params["b_hh1"])
        outputs.append(_ref_dot(h1n, params["w_fc"].T) + params["b_fc"])
        c_prev = jnp.stack([c0n, c1n], axis=0)
        cells.append(c_prev)
        if t == 0:
            dec_h = jnp.stack([h0n, h1n], axis=0)
            h_use = dec_h
    outputs = jax.nn.log_softmax(jnp.stack(outputs, axis=1), axis=2)
    hidden_states = jnp.stack([h_init] + [dec_h] * T, axis=1)
    cell_states = jnp.stack(cells, axis=1)
    return outputs, hidden_states, cell_states


def make_params(key, vocab, emb_size, hidden2):
    ks = jax.random.split(key, 12)
    k = 1.0 / np.sqrt(hidden2)
    u = lambda kk, shp, b: jax.random.uniform(kk, shp, jnp.float32, -b, b)
    return {
        "embedding": jax.random.normal(ks[0], (vocab, emb_size), jnp.float32),
        "w_ih0": u(ks[1], (4 * hidden2, emb_size + hidden2), k),
        "w_hh0": u(ks[2], (4 * hidden2, hidden2), k),
        "b_ih0": u(ks[3], (4 * hidden2,), k),
        "b_hh0": u(ks[4], (4 * hidden2,), k),
        "w_ih1": u(ks[5], (4 * hidden2, hidden2), k),
        "w_hh1": u(ks[6], (4 * hidden2, hidden2), k),
        "b_ih1": u(ks[7], (4 * hidden2,), k),
        "b_hh1": u(ks[8], (4 * hidden2,), k),
        "w_fc": u(ks[9], (vocab, hidden2), k),
        "b_fc": u(ks[10], (vocab,), k),
    }


if __name__ == "__main__":
    # small shapes consistent with the module (hidden*2 is the LSTM width)
    B, T, S = 2, 8, 8
    V, E, H = 50, 128, 64       # output_size, embedding_size, hidden_size
    H2, L = 2 * H, 2            # LSTM width, num_layers

    key = jax.random.PRNGKey(0)
    kp, kx, ke, kh, kc = jax.random.split(key, 5)

    params = make_params(kp, V, E, H2)
    x_ids = jax.random.randint(kx, (B, T), 0, V, dtype=jnp.int32)
    encoder_outputs = jax.random.normal(ke, (B, S, H2), jnp.float32)
    encoder_hidden = jax.random.normal(kh, (L, B, H2), jnp.float32)  # unused (as in PyTorch)
    # deterministic stand-ins for torch.randn initial states
    initial_hidden = jax.random.normal(kh, (L, B, H2), jnp.float32)
    initial_cell = jax.random.normal(kc, (L, B, H2), jnp.float32)

    outs, hids, cells = decoder_forward(
        x_ids, encoder_hidden, encoder_outputs, params,
        initial_hidden, initial_cell)
    jax.block_until_ready((outs, hids, cells))

    # verify against pure-JAX reference (kernel matmuls are bf16/f32-acc)
    r_outs, r_hids, r_cells = decoder_forward_ref(
        x_ids, encoder_outputs, params, initial_hidden, initial_cell)
    assert outs.shape == (B, T, V)
    assert hids.shape == (L, T + 1, B, H2)
    assert cells.shape == (L, T, B, H2)
    assert np.max(np.abs(np.asarray(outs) - np.asarray(r_outs))) < 5e-2
    assert np.max(np.abs(np.asarray(hids) - np.asarray(r_hids))) < 5e-2
    assert np.max(np.abs(np.asarray(cells) - np.asarray(r_cells))) < 5e-2

    print("KERNEL_OK")
</pallas_src>

<mosaic_0001>
module attributes {stable_mosaic.version = 11 : i64} {
  func.func @decoder_kernel(%arg0: memref<64x128xbf16, #tpu.memory_space<vmem>>, %arg1: memref<8x8x128xf32, #tpu.memory_space<vmem>>, %arg2: memref<2x8x128xf32, #tpu.memory_space<vmem>>, %arg3: memref<2x8x128xf32, #tpu.memory_space<vmem>>, %arg4: memref<256x512xbf16, #tpu.memory_space<vmem>>, %arg5: memref<128x512xbf16, #tpu.memory_space<vmem>>, %arg6: memref<1x512xf32, #tpu.memory_space<vmem>>, %arg7: memref<128x512xbf16, #tpu.memory_space<vmem>>, %arg8: memref<128x512xbf16, #tpu.memory_space<vmem>>, %arg9: memref<1x512xf32, #tpu.memory_space<vmem>>, %arg10: memref<128x128xbf16, #tpu.memory_space<vmem>>, %arg11: memref<1x128xf32, #tpu.memory_space<vmem>>, %arg12: memref<64x128xf32, #tpu.memory_space<vmem>>, %arg13: memref<64x128xf32, #tpu.memory_space<vmem>>, %arg14: memref<64x128xf32, #tpu.memory_space<vmem>>, %arg15: memref<2x8x128xf32, #tpu.memory_space<vmem>>, %arg16: memref<64x256xbf16, #tpu.memory_space<vmem>>, %arg17: memref<64x512xf32, #tpu.memory_space<vmem>>, %arg18: memref<7x8x384xf32, #tpu.memory_space<vmem>>, %arg19: memref<56x128xf32, #tpu.memory_space<vmem>>, %arg20: memref<7x8x384xf32, #tpu.memory_space<vmem>>, %arg21: memref<64x128xf32, #tpu.memory_space<vmem>>) attributes {dimension_semantics = [], scalar_prefetch = 0 : i64, scratch_operands = 6 : i64, tpu.core_type = #tpu.core_type<tc>} {
    %c0 = arith.constant 0 : index
    %c0_0 = arith.constant 0 : index
    %c0_1 = arith.constant 0 : index
    %0 = vector.load %arg1[%c0, %c0_0, %c0_1] : memref<8x8x128xf32, #tpu.memory_space<vmem>>, vector<8x8x128xf32>
    %cst = arith.constant dense<0.000000e+00> : vector<8x128xf32>
    %1 = vector.multi_reduction <add>, %0, %cst [1] : vector<8x8x128xf32> to vector<8x128xf32>
    %c0_2 = arith.constant 0 : index
    %c0_3 = arith.constant 0 : index
    %2 = vector.load %arg0[%c0_2, %c0_3] : memref<64x128xbf16, #tpu.memory_space<vmem>>, vector<64x128xbf16>
    %c0_4 = arith.constant 0 : index
    %c0_5 = arith.constant 0 : index
    %3 = vector.load %arg16[%c0_4, %c0_5] : memref<64x256xbf16, #tpu.memory_space<vmem>>, vector<64x128xbf16>
    tpu.vector_store %arg16[%c0_4, %c0_5], %2 {strides = array<i32>} : memref<64x256xbf16, #tpu.memory_space<vmem>>, vector<64x128xbf16>,
    %4 = vector.shape_cast %1 : vector<8x128xf32> to vector<1x8x128xf32>
    %5 = vector.shape_cast %4 : vector<1x8x128xf32> to vector<1x8x128xf32>
    %6 = vector.broadcast %5 : vector<1x8x128xf32> to vector<8x8x128xf32>
    %7 = vector.shape_cast %6 : vector<8x8x128xf32> to vector<64x128xf32>
    %8 = arith.truncf %7 : vector<64x128xf32> to vector<64x128xbf16>
    %c0_6 = arith.constant 0 : index
    %c128 = arith.constant 128 : index
    %9 = vector.load %arg16[%c0_6, %c128] : memref<64x256xbf16, #tpu.memory_space<vmem>>, vector<64x128xbf16>
    tpu.vector_store %arg16[%c0_6, %c128], %8 {strides = array<i32>} : memref<64x256xbf16, #tpu.memory_space<vmem>>, vector<64x128xbf16>,
    %c0_7 = arith.constant 0 : index
    %c0_8 = arith.constant 0 : index
    %10 = vector.load %arg16[%c0_7, %c0_8] : memref<64x256xbf16, #tpu.memory_space<vmem>>, vector<64x256xbf16>
    %c0_9 = arith.constant 0 : index
    %c0_10 = arith.constant 0 : index
    %11 = vector.load %arg4[%c0_9, %c0_10] : memref<256x512xbf16, #tpu.memory_space<vmem>>, vector<256x512xbf16>
    %cst_11 = arith.constant dense<0.000000e+00> : vector<64x512xf32>
    %12 = tpu.matmul %10, %11, %cst_11 {dimension_numbers = #tpu.dot_dimension_numbers<[1], [0], [0], [1], [0, 0, 1, 1], [], []>} : vector<64x256xbf16>, vector<256x512xbf16>, vector<64x512xf32> -> vector<64x512xf32>
    %c0_12 = arith.constant 0 : index
    %c0_13 = arith.constant 0 : index
    %13 = vector.load %arg6[%c0_12, %c0_13] : memref<1x512xf32, #tpu.memory_space<vmem>>, vector<1x512xf32>
    %14 = vector.broadcast %13 : vector<1x512xf32> to vector<64x512xf32>
    %15 = arith.addf %12, %14 : vector<64x512xf32>
    %c0_14 = arith.constant 0 : index
    %c0_15 = arith.constant 0 : index
    %16 = vector.load %arg17[%c0_14, %c0_15] : memref<64x512xf32, #tpu.memory_space<vmem>>, vector<64x512xf32>
    tpu.vector_store %arg17[%c0_14, %c0_15], %15 {strides = array<i32>} : memref<64x512xf32, #tpu.memory_space<vmem>>, vector<64x512xf32>,
    %c0_16 = arith.constant 0 : index
    %c0_17 = arith.constant 0 : index
    %c0_18 = arith.constant 0 : index
    %17 = vector.load %arg2[%c0_16, %c0_17, %c0_18] : memref<2x8x128xf32, #tpu.memory_space<vmem>>, vector<1x8x128xf32>
    %18 = vector.shape_cast %17 : vector<1x8x128xf32> to vector<8x128xf32>
    %c0_19 = arith.constant 0 : index
    %c0_20 = arith.constant 0 : index
    %19 = vector.load %arg5[%c0_19, %c0_20] : memref<128x512xbf16, #tpu.memory_space<vmem>>, vector<128x512xbf16>
    %20 = arith.truncf %18 : vector<8x128xf32> to vector<8x128xbf16>
    %cst_21 = arith.constant dense<0.000000e+00> : vector<8x512xf32>
    %21 = tpu.matmul %20, %19, %cst_21 {dimension_numbers = #tpu.dot_dimension_numbers<[1], [0], [0], [1], [0, 0, 1, 1], [], []>} : vector<8x128xbf16>, vector<128x512xbf16>, vector<8x512xf32> -> vector<8x512xf32>
    %c1 = arith.constant 1 : index
    %c0_22 = arith.constant 0 : index
    %c0_23 = arith.constant 0 : index
    %22 = vector.load %arg2[%c1, %c0_22, %c0_23] : memref<2x8x128xf32, #tpu.memory_space<vmem>>, vector<1x8x128xf32>
    %23 = vector.shape_cast %22 : vector<1x8x128xf32> to vector<8x128xf32>
    %c0_24 = arith.constant 0 : index
    %c0_25 = arith.constant 0 : index
    %24 = vector.load %arg8[%c0_24, %c0_25] : memref<128x512xbf16, #tpu.memory_space<vmem>>, vector<128x512xbf16>
    %25 = arith.truncf %23 : vector<8x128xf32> to vector<8x128xbf16>
    %cst_26 = arith.constant dense<0.000000e+00> : vector<8x512xf32>
    %26 = tpu.matmul %25, %24, %cst_26 {dimension_numbers = #tpu.dot_dimension_numbers<[1], [0], [0], [1], [0, 0, 1, 1], [], []>} : vector<8x128xbf16>, vector<128x512xbf16>, vector<8x512xf32> -> vector<8x512xf32>
    %c0_27 = arith.constant 0 : index
    %c0_28 = arith.constant 0 : index
    %27 = vector.load %arg9[%c0_27, %c0_28] : memref<1x512xf32, #tpu.memory_space<vmem>>, vector<1x512xf32>
    %28 = vector.broadcast %27 : vector<1x512xf32> to vector<8x512xf32>
    %29 = arith.addf %26, %28 : vector<8x512xf32>
    %c0_29 = arith.constant 0 : index
    %c0_30 = arith.constant 0 : index
    %30 = vector.load %arg17[%c0_29, %c0_30] : memref<64x512xf32, #tpu.memory_space<vmem>>, vector<8x512xf32>
    %31 = arith.addf %30, %21 : vector<8x512xf32>
    %c0_31 = arith.constant 0 : index
    %c0_32 = arith.constant 0 : index
    %c0_33 = arith.constant 0 : index
    %32 = vector.load %arg3[%c0_31, %c0_32, %c0_33] : memref<2x8x128xf32, #tpu.memory_space<vmem>>, vector<1x8x128xf32>
    %33 = vector.shape_cast %32 : vector<1x8x128xf32> to vector<8x128xf32>
    %34 = vector.extract_strided_slice %31 {offsets = [0, 0], sizes = [8, 128], strides = [1, 1]} : vector<8x512xf32> to vector<8x128xf32>
    %35 = arith.negf %34 : vector<8x128xf32>
    %36 = math.exp %35 : vector<8x128xf32>
    %cst_34 = arith.constant 1.000000e+00 : f32
    %37 = vector.broadcast %cst_34 : f32 to vector<8x128xf32>
    %38 = arith.addf %37, %36 : vector<8x128xf32>
    %39 = arith.divf %37, %38 : vector<8x128xf32>
    %40 = vector.extract_strided_slice %31 {offsets = [0, 128], sizes = [8, 128], strides = [1, 1]} : vector<8x512xf32> to vector<8x128xf32>
    %41 = arith.negf %40 : vector<8x128xf32>
    %42 = math.exp %41 : vector<8x128xf32>
    %cst_35 = arith.constant 1.000000e+00 : f32
    %43 = vector.broadcast %cst_35 : f32 to vector<8x128xf32>
    %44 = arith.addf %43, %42 : vector<8x128xf32>
    %45 = arith.divf %43, %44 : vector<8x128xf32>
    %46 = vector.extract_strided_slice %31 {offsets = [0, 256], sizes = [8, 128], strides = [1, 1]} : vector<8x512xf32> to vector<8x128xf32>
    %47 = math.tanh %46 : vector<8x128xf32>
    %48 = vector.extract_strided_slice %31 {offsets = [0, 384], sizes = [8, 128], strides = [1, 1]} : vector<8x512xf32> to vector<8x128xf32>
    %49 = arith.negf %48 : vector<8x128xf32>
    %50 = math.exp %49 : vector<8x128xf32>
    %cst_36 = arith.constant 1.000000e+00 : f32
    %51 = vector.broadcast %cst_36 : f32 to vector<8x128xf32>
    %52 = arith.addf %51, %50 : vector<8x128xf32>
    %53 = arith.divf %51, %52 : vector<8x128xf32>
    %54 = arith.mulf %45, %33 : vector<8x128xf32>
    %55 = arith.mulf %39, %47 : vector<8x128xf32>
    %56 = arith.addf %54, %55 : vector<8x128xf32>
    %57 = math.tanh %56 : vector<8x128xf32>
    %58 = arith.mulf %53, %57 : vector<8x128xf32>
    %c0_37 = arith.constant 0 : index
    %c0_38 = arith.constant 0 : index
    %59 = vector.load %arg7[%c0_37, %c0_38] : memref<128x512xbf16, #tpu.memory_space<vmem>>, vector<128x512xbf16>
    %60 = arith.truncf %58 : vector<8x128xf32> to vector<8x128xbf16>
    %cst_39 = arith.constant dense<0.000000e+00> : vector<8x512xf32>
    %61 = tpu.matmul %60, %59, %cst_39 {dimension_numbers = #tpu.dot_dimension_numbers<[1], [0], [0], [1], [0, 0, 1, 1], [], []>} : vector<8x128xbf16>, vector<128x512xbf16>, vector<8x512xf32> -> vector<8x512xf32>
    %62 = arith.addf %61, %29 : vector<8x512xf32>
    %c1_40 = arith.constant 1 : index
    %c0_41 = arith.constant 0 : index
    %c0_42 = arith.constant 0 : index
    %63 = vector.load %arg3[%c1_40, %c0_41, %c0_42] : memref<2x8x128xf32, #tpu.memory_space<vmem>>, vector<1x8x128xf32>
    %64 = vector.shape_cast %63 : vector<1x8x128xf32> to vector<8x128xf32>
    %65 = vector.extract_strided_slice %62 {offsets = [0, 0], sizes = [8, 128], strides = [1, 1]} : vector<8x512xf32> to vector<8x128xf32>
    %66 = arith.negf %65 : vector<8x128xf32>
    %67 = math.exp %66 : vector<8x128xf32>
    %cst_43 = arith.constant 1.000000e+00 : f32
    %68 = vector.broadcast %cst_43 : f32 to vector<8x128xf32>
    %69 = arith.addf %68, %67 : vector<8x128xf32>
    %70 = arith.divf %68, %69 : vector<8x128xf32>
    %71 = vector.extract_strided_slice %62 {offsets = [0, 128], sizes = [8, 128], strides = [1, 1]} : vector<8x512xf32> to vector<8x128xf32>
    %72 = arith.negf %71 : vector<8x128xf32>
    %73 = math.exp %72 : vector<8x128xf32>
    %cst_44 = arith.constant 1.000000e+00 : f32
    %74 = vector.broadcast %cst_44 : f32 to vector<8x128xf32>
    %75 = arith.addf %74, %73 : vector<8x128xf32>
    %76 = arith.divf %74, %75 : vector<8x128xf32>
    %77 = vector.extract_strided_slice %62 {offsets = [0, 256], sizes = [8, 128], strides = [1, 1]} : vector<8x512xf32> to vector<8x128xf32>
    %78 = math.tanh %77 : vector<8x128xf32>
    %79 = vector.extract_strided_slice %62 {offsets = [0, 384], sizes = [8, 128], strides = [1, 1]} : vector<8x512xf32> to vector<8x128xf32>
    %80 = arith.negf %79 : vector<8x128xf32>
    %81 = math.exp %80 : vector<8x128xf32>
    %cst_45 = arith.constant 1.000000e+00 : f32
    %82 = vector.broadcast %cst_45 : f32 to vector<8x128xf32>
    %83 = arith.addf %82, %81 : vector<8x128xf32>
    %84 = arith.divf %82, %83 : vector<8x128xf32>
    %85 = arith.mulf %76, %64 : vector<8x128xf32>
    %86 = arith.mulf %70, %78 : vector<8x128xf32>
    %87 = arith.addf %85, %86 : vector<8x128xf32>
    %88 = math.tanh %87 : vector<8x128xf32>
    %89 = arith.mulf %84, %88 : vector<8x128xf32>
    %c0_46 = arith.constant 0 : index
    %c0_47 = arith.constant 0 : index
    %c0_48 = arith.constant 0 : index
    %90 = vector.load %arg15[%c0_46, %c0_47, %c0_48] : memref<2x8x128xf32, #tpu.memory_space<vmem>>, vector<1x8x128xf32>
    %91 = vector.shape_cast %90 : vector<1x8x128xf32> to vector<8x128xf32>
    %92 = vector.shape_cast %58 : vector<8x128xf32> to vector<1x8x128xf32>
    tpu.vector_store %arg15[%c0_46, %c0_47, %c0_48], %92 {strides = array<i32>} : memref<2x8x128xf32, #tpu.memory_space<vmem>>, vector<1x8x128xf32>,
    %c1_49 = arith.constant 1 : index
    %c0_50 = arith.constant 0 : index
    %c0_51 = arith.constant 0 : index
    %93 = vector.load %arg15[%c1_49, %c0_50, %c0_51] : memref<2x8x128xf32, #tpu.memory_space<vmem>>, vector<1x8x128xf32>
    %94 = vector.shape_cast %93 : vector<1x8x128xf32> to vector<8x128xf32>
    %95 = vector.shape_cast %89 : vector<8x128xf32> to vector<1x8x128xf32>
    tpu.vector_store %arg15[%c1_49, %c0_50, %c0_51], %95 {strides = array<i32>} : memref<2x8x128xf32, #tpu.memory_space<vmem>>, vector<1x8x128xf32>,
    %c0_52 = arith.constant 0 : index
    %c0_53 = arith.constant 0 : index
    %96 = vector.load %arg13[%c0_52, %c0_53] : memref<64x128xf32, #tpu.memory_space<vmem>>, vector<8x128xf32>
    tpu.vector_store %arg13[%c0_52, %c0_53], %56 {strides = array<i32>} : memref<64x128xf32, #tpu.memory_space<vmem>>, vector<8x128xf32>,
    %c0_54 = arith.constant 0 : index
    %c0_55 = arith.constant 0 : index
    %97 = vector.load %arg14[%c0_54, %c0_55] : memref<64x128xf32, #tpu.memory_space<vmem>>, vector<8x128xf32>
    tpu.vector_store %arg14[%c0_54, %c0_55], %87 {strides = array<i32>} : memref<64x128xf32, #tpu.memory_space<vmem>>, vector<8x128xf32>,
    %c0_56 = arith.constant 0 : index
    %c0_57 = arith.constant 0 : index
    %98 = vector.load %arg21[%c0_56, %c0_57] : memref<64x128xf32, #tpu.memory_space<vmem>>, vector<8x128xf32>
    tpu.vector_store %arg21[%c0_56, %c0_57], %89 {strides = array<i32>} : memref<64x128xf32, #tpu.memory_space<vmem>>, vector<8x128xf32>,
    %c0_58 = arith.constant 0 : index
    %c0_59 = arith.constant 0 : index
    %99 = vector.load %arg5[%c0_58, %c0_59] : memref<128x512xbf16, #tpu.memory_space<vmem>>, vector<128x512xbf16>
    %100 = arith.truncf %58 : vector<8x128xf32> to vector<8x128xbf16>
    %cst_60 = arith.constant dense<0.000000e+00> : vector<8x512xf32>
    %101 = tpu.matmul %100, %99, %cst_60 {dimension_numbers = #tpu.dot_dimension_numbers<[1], [0], [0], [1], [0, 0, 1, 1], [], []>} : vector<8x128xbf16>, vector<128x512xbf16>, vector<8x512xf32> -> vector<8x512xf32>
    %c8 = arith.constant 8 : index
    %c0_61 = arith.constant 0 : index
    %102 = vector.load %arg17[%c8, %c0_61] : memref<64x512xf32, #tpu.memory_space<vmem>>, vector<56x512xf32>
    %103 = vector.shape_cast %102 : vector<56x512xf32> to vector<7x8x512xf32>
    %104 = vector.shape_cast %101 : vector<8x512xf32> to vector<1x8x512xf32>
    %105 = vector.broadcast %104 : vector<1x8x512xf32> to vector<7x8x512xf32>
    %106 = arith.addf %103, %105 : vector<7x8x512xf32>
    %107 = vector.extract_strided_slice %106 {offsets = [0, 0, 128], sizes = [7, 8, 128], strides = [1, 1, 1]} : vector<7x8x512xf32> to vector<7x8x128xf32>
    %108 = arith.negf %107 : vector<7x8x128xf32>
    %109 = math.exp %108 : vector<7x8x128xf32>
    %cst_62 = arith.constant 1.000000e+00 : f32
    %110 = vector.broadcast %cst_62 : f32 to vector<7x8x128xf32>
    %111 = arith.addf %110, %109 : vector<7x8x128xf32>
    %112 = arith.divf %110, %111 : vector<7x8x128xf32>
    %c0_63 = arith.constant 0 : index
    %c0_64 = arith.constant 0 : index
    %c0_65 = arith.constant 0 : index
    %113 = vector.load %arg18[%c0_63, %c0_64, %c0_65] : memref<7x8x384xf32, #tpu.memory_space<vmem>>, vector<7x8x128xf32>
    tpu.vector_store %arg18[%c0_63, %c0_64, %c0_65], %112 {strides = array<i32>} : memref<7x8x384xf32, #tpu.memory_space<vmem>>, vector<7x8x128xf32>,
    %114 = vector.extract_strided_slice %106 {offsets = [0, 0, 0], sizes = [7, 8, 128], strides = [1, 1, 1]} : vector<7x8x512xf32> to vector<7x8x128xf32>
    %115 = arith.negf %114 : vector<7x8x128xf32>
    %116 = math.exp %115 : vector<7x8x128xf32>
    %cst_66 = arith.constant 1.000000e+00 : f32
    %117 = vector.broadcast %cst_66 : f32 to vector<7x8x128xf32>
    %118 = arith.addf %117, %116 : vector<7x8x128xf32>
    %119 = arith.divf %117, %118 : vector<7x8x128xf32>
    %120 = vector.extract_strided_slice %106 {offsets = [0, 0, 256], sizes = [7, 8, 128], strides = [1, 1, 1]} : vector<7x8x512xf32> to vector<7x8x128xf32>
    %121 = math.tanh %120 : vector<7x8x128xf32>
    %122 = arith.mulf %119, %121 : vector<7x8x128xf32>
    %c0_67 = arith.constant 0 : index
    %c0_68 = arith.constant 0 : index
    %c128_69 = arith.constant 128 : index
    %123 = vector.load %arg18[%c0_67, %c0_68, %c128_69] : memref<7x8x384xf32, #tpu.memory_space<vmem>>, vector<7x8x128xf32>
    tpu.vector_store %arg18[%c0_67, %c0_68, %c128_69], %122 {strides = array<i32>} : memref<7x8x384xf32, #tpu.memory_space<vmem>>, vector<7x8x128xf32>,
    %124 = vector.extract_strided_slice %106 {offsets = [0, 0, 384], sizes = [7, 8, 128], strides = [1, 1, 1]} : vector<7x8x512xf32> to vector<7x8x128xf32>
    %125 = arith.negf %124 : vector<7x8x128xf32>
    %126 = math.exp %125 : vector<7x8x128xf32>
    %cst_70 = arith.constant 1.000000e+00 : f32
    %127 = vector.broadcast %cst_70 : f32 to vector<7x8x128xf32>
    %128 = arith.addf %127, %126 : vector<7x8x128xf32>
    %129 = arith.divf %127, %128 : vector<7x8x128xf32>
    %c0_71 = arith.constant 0 : index
    %c0_72 = arith.constant 0 : index
    %c256 = arith.constant 256 : index
    %130 = vector.load %arg18[%c0_71, %c0_72, %c256] : memref<7x8x384xf32, #tpu.memory_space<vmem>>, vector<7x8x128xf32>
    tpu.vector_store %arg18[%c0_71, %c0_72, %c256], %129 {strides = array<i32>} : memref<7x8x384xf32, #tpu.memory_space<vmem>>, vector<7x8x128xf32>,
    %c0_i32 = arith.constant 0 : i32
    %131 = arith.index_cast %c0_i32 : i32 to index
    %c0_73 = arith.constant 0 : index
    %c0_74 = arith.constant 0 : index
    %132 = vector.load %arg18[%131, %c0_73, %c0_74] : memref<7x8x384xf32, #tpu.memory_space<vmem>>, vector<1x8x384xf32>
    %133 = vector.shape_cast %132 : vector<1x8x384xf32> to vector<8x384xf32>
    %134 = vector.extract_strided_slice %133 {offsets = [0, 0], sizes = [8, 128], strides = [1, 1]} : vector<8x384xf32> to vector<8x128xf32>
    %135 = arith.mulf %134, %56 : vector<8x128xf32>
    %136 = vector.extract_strided_slice %133 {offsets = [0, 128], sizes = [8, 128], strides = [1, 1]} : vector<8x384xf32> to vector<8x128xf32>
    %137 = arith.addf %135, %136 : vector<8x128xf32>
    %138 = vector.extract_strided_slice %133 {offsets = [0, 256], sizes = [8, 128], strides = [1, 1]} : vector<8x384xf32> to vector<8x128xf32>
    %139 = math.tanh %137 : vector<8x128xf32>
    %140 = arith.mulf %138, %139 : vector<8x128xf32>
    %c1_i32 = arith.constant 1 : i32
    %141 = arith.addi %c0_i32, %c1_i32 : i32
    %c8_i32 = arith.constant 8 : i32
    %142 = arith.muli %141, %c8_i32 : i32
    %143 = tpu.assume_multiple %142, 8 : i32
    %144 = arith.index_cast %143 : i32 to index
    %c0_75 = arith.constant 0 : index
    %145 = vector.load %arg13[%144, %c0_75] : memref<64x128xf32, #tpu.memory_space<vmem>>, vector<8x128xf32>
    tpu.vector_store %arg13[%144, %c0_75], %137 {strides = array<i32>} : memref<64x128xf32, #tpu.memory_space<vmem>>, vector<8x128xf32>,
    %c8_i32_76 = arith.constant 8 : i32
    %146 = arith.muli %c0_i32, %c8_i32_76 : i32
    %147 = tpu.assume_multiple %146, 8 : i32
    %148 = arith.index_cast %147 : i32 to index
    %c0_77 = arith.constant 0 : index
    %149 = vector.load %arg19[%148, %c0_77] : memref<56x128xf32, #tpu.memory_space<vmem>>, vector<8x128xf32>
    tpu.vector_store %arg19[%148, %c0_77], %140 {strides = array<i32>} : memref<56x128xf32, #tpu.memory_space<vmem>>, vector<8x128xf32>,
    %c1_i32_78 = arith.constant 1 : i32
    %150 = arith.index_cast %c1_i32_78 : i32 to index
    %c0_79 = arith.constant 0 : index
    %c0_80 = arith.constant 0 : index
    %151 = vector.load %arg18[%150, %c0_79, %c0_80] : memref<7x8x384xf32, #tpu.memory_space<vmem>>, vector<1x8x384xf32>
    %152 = vector.shape_cast %151 : vector<1x8x384xf32> to vector<8x384xf32>
    %153 = vector.extract_strided_slice %152 {offsets = [0, 0], sizes = [8, 128], strides = [1, 1]} : vector<8x384xf32> to vector<8x128xf32>
    %154 = arith.mulf %153, %137 : vector<8x128xf32>
    %155 = vector.extract_strided_slice %152 {offsets = [0, 128], sizes = [8, 128], strides = [1, 1]} : vector<8x384xf32> to vector<8x128xf32>
    %156 = arith.addf %154, %155 : vector<8x128xf32>
    %157 = vector.extract_strided_slice %152 {offsets = [0, 256], sizes = [8, 128], strides = [1, 1]} : vector<8x384xf32> to vector<8x128xf32>
    %158 = math.tanh %156 : vector<8x128xf32>
    %159 = arith.mulf %157, %158 : vector<8x128xf32>
    %c1_i32_81 = arith.constant 1 : i32
    %160 = arith.addi %c1_i32_78, %c1_i32_81 : i32
    %c8_i32_82 = arith.constant 8 : i32
    %161 = arith.muli %160, %c8_i32_82 : i32
    %162 = tpu.assume_multiple %161, 8 : i32
    %163 = arith.index_cast %162 : i32 to index
    %c0_83 = arith.constant 0 : index
    %164 = vector.load %arg13[%163, %c0_83] : memref<64x128xf32, #tpu.memory_space<vmem>>, vector<8x128xf32>
    tpu.vector_store %arg13[%163, %c0_83], %156 {strides = array<i32>} : memref<64x128xf32, #tpu.memory_space<vmem>>, vector<8x128xf32>,
    %c8_i32_84 = arith.constant 8 : i32
    %165 = arith.muli %c1_i32_78, %c8_i32_84 : i32
    %166 = tpu.assume_multiple %165, 8 : i32
    %167 = arith.index_cast %166 : i32 to index
    %c0_85 = arith.constant 0 : index
    %168 = vector.load %arg19[%167, %c0_85] : memref<56x128xf32, #tpu.memory_space<vmem>>, vector<8x128xf32>
    tpu.vector_store %arg19[%167, %c0_85], %159 {strides = array<i32>} : memref<56x128xf32, #tpu.memory_space<vmem>>, vector<8x128xf32>,
    %c2_i32 = arith.constant 2 : i32
    %169 = arith.index_cast %c2_i32 : i32 to index
    %c0_86 = arith.constant 0 : index
    %c0_87 = arith.constant 0 : index
    %170 = vector.load %arg18[%169, %c0_86, %c0_87] : memref<7x8x384xf32, #tpu.memory_space<vmem>>, vector<1x8x384xf32>
    %171 = vector.shape_cast %170 : vector<1x8x384xf32> to vector<8x384xf32>
    %172 = vector.extract_strided_slice %171 {offsets = [0, 0], sizes = [8, 128], strides = [1, 1]} : vector<8x384xf32> to vector<8x128xf32>
    %173 = arith.mulf %172, %156 : vector<8x128xf32>
    %174 = vector.extract_strided_slice %171 {offsets = [0, 128], sizes = [8, 128], strides = [1, 1]} : vector<8x384xf32> to vector<8x128xf32>
    %175 = arith.addf %173, %174 : vector<8x128xf32>
    %176 = vector.extract_strided_slice %171 {offsets = [0, 256], sizes = [8, 128], strides = [1, 1]} : vector<8x384xf32> to vector<8x128xf32>
    %177 = math.tanh %175 : vector<8x128xf32>
    %178 = arith.mulf %176, %177 : vector<8x128xf32>
    %c1_i32_88 = arith.constant 1 : i32
    %179 = arith.addi %c2_i32, %c1_i32_88 : i32
    %c8_i32_89 = arith.constant 8 : i32
    %180 = arith.muli %179, %c8_i32_89 : i32
    %181 = tpu.assume_multiple %180, 8 : i32
    %182 = arith.index_cast %181 : i32 to index
    %c0_90 = arith.constant 0 : index
    %183 = vector.load %arg13[%182, %c0_90] : memref<64x128xf32, #tpu.memory_space<vmem>>, vector<8x128xf32>
    tpu.vector_store %arg13[%182, %c0_90], %175 {strides = array<i32>} : memref<64x128xf32, #tpu.memory_space<vmem>>, vector<8x128xf32>,
    %c8_i32_91 = arith.constant 8 : i32
    %184 = arith.muli %c2_i32, %c8_i32_91 : i32
    %185 = tpu.assume_multiple %184, 8 : i32
    %186 = arith.index_cast %185 : i32 to index
    %c0_92 = arith.constant 0 : index
    %187 = vector.load %arg19[%186, %c0_92] : memref<56x128xf32, #tpu.memory_space<vmem>>, vector<8x128xf32>
    tpu.vector_store %arg19[%186, %c0_92], %178 {strides = array<i32>} : memref<56x128xf32, #tpu.memory_space<vmem>>, vector<8x128xf32>,
    %c3_i32 = arith.constant 3 : i32
    %188 = arith.index_cast %c3_i32 : i32 to index
    %c0_93 = arith.constant 0 : index
    %c0_94 = arith.constant 0 : index
    %189 = vector.load %arg18[%188, %c0_93, %c0_94] : memref<7x8x384xf32, #tpu.memory_space<vmem>>, vector<1x8x384xf32>
    %190 = vector.shape_cast %189 : vector<1x8x384xf32> to vector<8x384xf32>
    %191 = vector.extract_strided_slice %190 {offsets = [0, 0], sizes = [8, 128], strides = [1, 1]} : vector<8x384xf32> to vector<8x128xf32>
    %192 = arith.mulf %191, %175 : vector<8x128xf32>
    %193 = vector.extract_strided_slice %190 {offsets = [0, 128], sizes = [8, 128], strides = [1, 1]} : vector<8x384xf32> to vector<8x128xf32>
    %194 = arith.addf %192, %193 : vector<8x128xf32>
    %195 = vector.extract_strided_slice %190 {offsets = [0, 256], sizes = [8, 128], strides = [1, 1]} : vector<8x384xf32> to vector<8x128xf32>
    %196 = math.tanh %194 : vector<8x128xf32>
    %197 = arith.mulf %195, %196 : vector<8x128xf32>
    %c1_i32_95 = arith.constant 1 : i32
    %198 = arith.addi %c3_i32, %c1_i32_95 : i32
    %c8_i32_96 = arith.constant 8 : i32
    %199 = arith.muli %198, %c8_i32_96 : i32
    %200 = tpu.assume_multiple %199, 8 : i32
    %201 = arith.index_cast %200 : i32 to index
    %c0_97 = arith.constant 0 : index
    %202 = vector.load %arg13[%201, %c0_97] : memref<64x128xf32, #tpu.memory_space<vmem>>, vector<8x128xf32>
    tpu.vector_store %arg13[%201, %c0_97], %194 {strides = array<i32>} : memref<64x128xf32, #tpu.memory_space<vmem>>, vector<8x128xf32>,
    %c8_i32_98 = arith.constant 8 : i32
    %203 = arith.muli %c3_i32, %c8_i32_98 : i32
    %204 = tpu.assume_multiple %203, 8 : i32
    %205 = arith.index_cast %204 : i32 to index
    %c0_99 = arith.constant 0 : index
    %206 = vector.load %arg19[%205, %c0_99] : memref<56x128xf32, #tpu.memory_space<vmem>>, vector<8x128xf32>
    tpu.vector_store %arg19[%205, %c0_99], %197 {strides = array<i32>} : memref<56x128xf32, #tpu.memory_space<vmem>>, vector<8x128xf32>,
    %c4_i32 = arith.constant 4 : i32
    %207 = arith.index_cast %c4_i32 : i32 to index
    %c0_100 = arith.constant 0 : index
    %c0_101 = arith.constant 0 : index
    %208 = vector.load %arg18[%207, %c0_100, %c0_101] : memref<7x8x384xf32, #tpu.memory_space<vmem>>, vector<1x8x384xf32>
    %209 = vector.shape_cast %208 : vector<1x8x384xf32> to vector<8x384xf32>
    %210 = vector.extract_strided_slice %209 {offsets = [0, 0], sizes = [8, 128], strides = [1, 1]} : vector<8x384xf32> to vector<8x128xf32>
    %211 = arith.mulf %210, %194 : vector<8x128xf32>
    %212 = vector.extract_strided_slice %209 {offsets = [0, 128], sizes = [8, 128], strides = [1, 1]} : vector<8x384xf32> to vector<8x128xf32>
    %213 = arith.addf %211, %212 : vector<8x128xf32>
    %214 = vector.extract_strided_slice %209 {offsets = [0, 256], sizes = [8, 128], strides = [1, 1]} : vector<8x384xf32> to vector<8x128xf32>
    %215 = math.tanh %213 : vector<8x128xf32>
    %216 = arith.mulf %214, %215 : vector<8x128xf32>
    %c1_i32_102 = arith.constant 1 : i32
    %217 = arith.addi %c4_i32, %c1_i32_102 : i32
    %c8_i32_103 = arith.constant 8 : i32
    %218 = arith.muli %217, %c8_i32_103 : i32
    %219 = tpu.assume_multiple %218, 8 : i32
    %220 = arith.index_cast %219 : i32 to index
    %c0_104 = arith.constant 0 : index
    %221 = vector.load %arg13[%220, %c0_104] : memref<64x128xf32, #tpu.memory_space<vmem>>, vector<8x128xf32>
    tpu.vector_store %arg13[%220, %c0_104], %213 {strides = array<i32>} : memref<64x128xf32, #tpu.memory_space<vmem>>, vector<8x128xf32>,
    %c8_i32_105 = arith.constant 8 : i32
    %222 = arith.muli %c4_i32, %c8_i32_105 : i32
    %223 = tpu.assume_multiple %222, 8 : i32
    %224 = arith.index_cast %223 : i32 to index
    %c0_106 = arith.constant 0 : index
    %225 = vector.load %arg19[%224, %c0_106] : memref<56x128xf32, #tpu.memory_space<vmem>>, vector<8x128xf32>
    tpu.vector_store %arg19[%224, %c0_106], %216 {strides = array<i32>} : memref<56x128xf32, #tpu.memory_space<vmem>>, vector<8x128xf32>,
    %c5_i32 = arith.constant 5 : i32
    %226 = arith.index_cast %c5_i32 : i32 to index
    %c0_107 = arith.constant 0 : index
    %c0_108 = arith.constant 0 : index
    %227 = vector.load %arg18[%226, %c0_107, %c0_108] : memref<7x8x384xf32, #tpu.memory_space<vmem>>, vector<1x8x384xf32>
    %228 = vector.shape_cast %227 : vector<1x8x384xf32> to vector<8x384xf32>
    %229 = vector.extract_strided_slice %228 {offsets = [0, 0], sizes = [8, 128], strides = [1, 1]} : vector<8x384xf32> to vector<8x128xf32>
    %230 = arith.mulf %229, %213 : vector<8x128xf32>
    %231 = vector.extract_strided_slice %228 {offsets = [0, 128], sizes = [8, 128], strides = [1, 1]} : vector<8x384xf32> to vector<8x128xf32>
    %232 = arith.addf %230, %231 : vector<8x128xf32>
    %233 = vector.extract_strided_slice %228 {offsets = [0, 256], sizes = [8, 128], strides = [1, 1]} : vector<8x384xf32> to vector<8x128xf32>
    %234 = math.tanh %232 : vector<8x128xf32>
    %235 = arith.mulf %233, %234 : vector<8x128xf32>
    %c1_i32_109 = arith.constant 1 : i32
    %236 = arith.addi %c5_i32, %c1_i32_109 : i32
    %c8_i32_110 = arith.constant 8 : i32
    %237 = arith.muli %236, %c8_i32_110 : i32
    %238 = tpu.assume_multiple %237, 8 : i32
    %239 = arith.index_cast %238 : i32 to index
    %c0_111 = arith.constant 0 : index
    %240 = vector.load %arg13[%239, %c0_111] : memref<64x128xf32, #tpu.memory_space<vmem>>, vector<8x128xf32>
    tpu.vector_store %arg13[%239, %c0_111], %232 {strides = array<i32>} : memref<64x128xf32, #tpu.memory_space<vmem>>, vector<8x128xf32>,
    %c8_i32_112 = arith.constant 8 : i32
    %241 = arith.muli %c5_i32, %c8_i32_112 : i32
    %242 = tpu.assume_multiple %241, 8 : i32
    %243 = arith.index_cast %242 : i32 to index
    %c0_113 = arith.constant 0 : index
    %244 = vector.load %arg19[%243, %c0_113] : memref<56x128xf32, #tpu.memory_space<vmem>>, vector<8x128xf32>
    tpu.vector_store %arg19[%243, %c0_113], %235 {strides = array<i32>} : memref<56x128xf32, #tpu.memory_space<vmem>>, vector<8x128xf32>,
    %c6_i32 = arith.constant 6 : i32
    %245 = arith.index_cast %c6_i32 : i32 to index
    %c0_114 = arith.constant 0 : index
    %c0_115 = arith.constant 0 : index
    %246 = vector.load %arg18[%245, %c0_114, %c0_115] : memref<7x8x384xf32, #tpu.memory_space<vmem>>, vector<1x8x384xf32>
    %247 = vector.shape_cast %246 : vector<1x8x384xf32> to vector<8x384xf32>
    %248 = vector.extract_strided_slice %247 {offsets = [0, 0], sizes = [8, 128], strides = [1, 1]} : vector<8x384xf32> to vector<8x128xf32>
    %249 = arith.mulf %248, %232 : vector<8x128xf32>
    %250 = vector.extract_strided_slice %247 {offsets = [0, 128], sizes = [8, 128], strides = [1, 1]} : vector<8x384xf32> to vector<8x128xf32>
    %251 = arith.addf %249, %250 : vector<8x128xf32>
    %252 = vector.extract_strided_slice %247 {offsets = [0, 256], sizes = [8, 128], strides = [1, 1]} : vector<8x384xf32> to vector<8x128xf32>
    %253 = math.tanh %251 : vector<8x128xf32>
    %254 = arith.mulf %252, %253 : vector<8x128xf32>
    %c1_i32_116 = arith.constant 1 : i32
    %255 = arith.addi %c6_i32, %c1_i32_116 : i32
    %c8_i32_117 = arith.constant 8 : i32
    %256 = arith.muli %255, %c8_i32_117 : i32
    %257 = tpu.assume_multiple %256, 8 : i32
    %258 = arith.index_cast %257 : i32 to index
    %c0_118 = arith.constant 0 : index
    %259 = vector.load %arg13[%258, %c0_118] : memref<64x128xf32, #tpu.memory_space<vmem>>, vector<8x128xf32>
    tpu.vector_store %arg13[%258, %c0_118], %251 {strides = array<i32>} : memref<64x128xf32, #tpu.memory_space<vmem>>, vector<8x128xf32>,
    %c8_i32_119 = arith.constant 8 : i32
    %260 = arith.muli %c6_i32, %c8_i32_119 : i32
    %261 = tpu.assume_multiple %260, 8 : i32
    %262 = arith.index_cast %261 : i32 to index
    %c0_120 = arith.constant 0 : index
    %263 = vector.load %arg19[%262, %c0_120] : memref<56x128xf32, #tpu.memory_space<vmem>>, vector<8x128xf32>
    tpu.vector_store %arg19[%262, %c0_120], %254 {strides = array<i32>} : memref<56x128xf32, #tpu.memory_space<vmem>>, vector<8x128xf32>,
    %c7_i32 = arith.constant 7 : i32
    %c0_121 = arith.constant 0 : index
    %c0_122 = arith.constant 0 : index
    %264 = vector.load %arg9[%c0_121, %c0_122] : memref<1x512xf32, #tpu.memory_space<vmem>>, vector<1x512xf32>
    %c0_123 = arith.constant 0 : index
    %c0_124 = arith.constant 0 : index
    %265 = vector.load %arg8[%c0_123, %c0_124] : memref<128x512xbf16, #tpu.memory_space<vmem>>, vector<128x512xbf16>
    %266 = arith.truncf %89 : vector<8x128xf32> to vector<8x128xbf16>
    %cst_125 = arith.constant dense<0.000000e+00> : vector<8x512xf32>
    %267 = tpu.matmul %266, %265, %cst_125 {dimension_numbers = #tpu.dot_dimension_numbers<[1], [0], [0], [1], [0, 0, 1, 1], [], []>} : vector<8x128xbf16>, vector<128x512xbf16>, vector<8x512xf32> -> vector<8x512xf32>
    %268 = vector.broadcast %264 : vector<1x512xf32> to vector<8x512xf32>
    %269 = arith.addf %268, %267 : vector<8x512xf32>
    %c0_126 = arith.constant 0 : index
    %c0_127 = arith.constant 0 : index
    %270 = vector.load %arg19[%c0_126, %c0_127] : memref<56x128xf32, #tpu.memory_space<vmem>>, vector<56x128xf32>
    %c0_128 = arith.constant 0 : index
    %c0_129 = arith.constant 0 : index
    %271 = vector.load %arg7[%c0_128, %c0_129] : memref<128x512xbf16, #tpu.memory_space<vmem>>, vector<128x512xbf16>
    %272 = arith.truncf %270 : vector<56x128xf32> to vector<56x128xbf16>
    %cst_130 = arith.constant dense<0.000000e+00> : vector<56x512xf32>
    %273 = tpu.matmul %272, %271, %cst_130 {dimension_numbers = #tpu.dot_dimension_numbers<[1], [0], [0], [1], [0, 0, 1, 1], [], []>} : vector<56x128xbf16>, vector<128x512xbf16>, vector<56x512xf32> -> vector<56x512xf32>
    %274 = vector.shape_cast %273 : vector<56x512xf32> to vector<7x8x512xf32>
    %275 = vector.shape_cast %269 : vector<8x512xf32> to vector<1x8x512xf32>
    %276 = vector.broadcast %275 : vector<1x8x512xf32> to vector<7x8x512xf32>
    %277 = arith.addf %274, %276 : vector<7x8x512xf32>
    %278 = vector.extract_strided_slice %277 {offsets = [0, 0, 128], sizes = [7, 8, 128], strides = [1, 1, 1]} : vector<7x8x512xf32> to vector<7x8x128xf32>
    %279 = arith.negf %278 : vector<7x8x128xf32>
    %280 = math.exp %279 : vector<7x8x128xf32>
    %cst_131 = arith.constant 1.000000e+00 : f32
    %281 = vector.broadcast %cst_131 : f32 to vector<7x8x128xf32>
    %282 = arith.addf %281, %280 : vector<7x8x128xf32>
    %283 = arith.divf %281, %282 : vector<7x8x128xf32>
    %c0_132 = arith.constant 0 : index
    %c0_133 = arith.constant 0 : index
    %c0_134 = arith.constant 0 : index
    %284 = vector.load %arg20[%c0_132, %c0_133, %c0_134] : memref<7x8x384xf32, #tpu.memory_space<vmem>>, vector<7x8x128xf32>
    tpu.vector_store %arg20[%c0_132, %c0_133, %c0_134], %283 {strides = array<i32>} : memref<7x8x384xf32, #tpu.memory_space<vmem>>, vector<7x8x128xf32>,
    %285 = vector.extract_strided_slice %277 {offsets = [0, 0, 0], sizes = [7, 8, 128], strides = [1, 1, 1]} : vector<7x8x512xf32> to vector<7x8x128xf32>
    %286 = arith.negf %285 : vector<7x8x128xf32>
    %287 = math.exp %286 : vector<7x8x128xf32>
    %cst_135 = arith.constant 1.000000e+00 : f32
    %288 = vector.broadcast %cst_135 : f32 to vector<7x8x128xf32>
    %289 = arith.addf %288, %287 : vector<7x8x128xf32>
    %290 = arith.divf %288, %289 : vector<7x8x128xf32>
    %291 = vector.extract_strided_slice %277 {offsets = [0, 0, 256], sizes = [7, 8, 128], strides = [1, 1, 1]} : vector<7x8x512xf32> to vector<7x8x128xf32>
    %292 = math.tanh %291 : vector<7x8x128xf32>
    %293 = arith.mulf %290, %292 : vector<7x8x128xf32>
    %c0_136 = arith.constant 0 : index
    %c0_137 = arith.constant 0 : index
    %c128_138 = arith.constant 128 : index
    %294 = vector.load %arg20[%c0_136, %c0_137, %c128_138] : memref<7x8x384xf32, #tpu.memory_space<vmem>>, vector<7x8x128xf32>
    tpu.vector_store %arg20[%c0_136, %c0_137, %c128_138], %293 {strides = array<i32>} : memref<7x8x384xf32, #tpu.memory_space<vmem>>, vector<7x8x128xf32>,
    %295 = vector.extract_strided_slice %277 {offsets = [0, 0, 384], sizes = [7, 8, 128], strides = [1, 1, 1]} : vector<7x8x512xf32> to vector<7x8x128xf32>
    %296 = arith.negf %295 : vector<7x8x128xf32>
    %297 = math.exp %296 : vector<7x8x128xf32>
    %cst_139 = arith.constant 1.000000e+00 : f32
    %298 = vector.broadcast %cst_139 : f32 to vector<7x8x128xf32>
    %299 = arith.addf %298, %297 : vector<7x8x128xf32>
    %300 = arith.divf %298, %299 : vector<7x8x128xf32>
    %c0_140 = arith.constant 0 : index
    %c0_141 = arith.constant 0 : index
    %c256_142 = arith.constant 256 : index
    %301 = vector.load %arg20[%c0_140, %c0_141, %c256_142] : memref<7x8x384xf32, #tpu.memory_space<vmem>>, vector<7x8x128xf32>
    tpu.vector_store %arg20[%c0_140, %c0_141, %c256_142], %300 {strides = array<i32>} : memref<7x8x384xf32, #tpu.memory_space<vmem>>, vector<7x8x128xf32>,
    %c0_i32_143 = arith.constant 0 : i32
    %302 = arith.index_cast %c0_i32_143 : i32 to index
    %c0_144 = arith.constant 0 : index
    %c0_145 = arith.constant 0 : index
    %303 = vector.load %arg20[%302, %c0_144, %c0_145] : memref<7x8x384xf32, #tpu.memory_space<vmem>>, vector<1x8x384xf32>
    %304 = vector.shape_cast %303 : vector<1x8x384xf32> to vector<8x384xf32>
    %305 = vector.extract_strided_slice %304 {offsets = [0, 0], sizes = [8, 128], strides = [1, 1]} : vector<8x384xf32> to vector<8x128xf32>
    %306 = arith.mulf %305, %87 : vector<8x128xf32>
    %307 = vector.extract_strided_slice %304 {offsets = [0, 128], sizes = [8, 128], strides = [1, 1]} : vector<8x384xf32> to vector<8x128xf32>
    %308 = arith.addf %306, %307 : vector<8x128xf32>
    %309 = vector.extract_strided_slice %304 {offsets = [0, 256], sizes = [8, 128], strides = [1, 1]} : vector<8x384xf32> to vector<8x128xf32>
    %310 = math.tanh %308 : vector<8x128xf32>
    %311 = arith.mulf %309, %310 : vector<8x128xf32>
    %c1_i32_146 = arith.constant 1 : i32
    %312 = arith.addi %c0_i32_143, %c1_i32_146 : i32
    %c8_i32_147 = arith.constant 8 : i32
    %313 = arith.muli %312, %c8_i32_147 : i32
    %314 = tpu.assume_multiple %313, 8 : i32
    %315 = arith.index_cast %314 : i32 to index
    %c0_148 = arith.constant 0 : index
    %316 = vector.load %arg14[%315, %c0_148] : memref<64x128xf32, #tpu.memory_space<vmem>>, vector<8x128xf32>
    tpu.vector_store %arg14[%315, %c0_148], %308 {strides = array<i32>} : memref<64x128xf32, #tpu.memory_space<vmem>>, vector<8x128xf32>,
    %317 = arith.index_cast %314 : i32 to index
    %c0_149 = arith.constant 0 : index
    %318 = vector.load %arg21[%317, %c0_149] : memref<64x128xf32, #tpu.memory_space<vmem>>, vector<8x128xf32>
    tpu.vector_store %arg21[%317, %c0_149], %311 {strides = array<i32>} : memref<64x128xf32, #tpu.memory_space<vmem>>, vector<8x128xf32>,
    %c1_i32_150 = arith.constant 1 : i32
    %319 = arith.index_cast %c1_i32_150 : i32 to index
    %c0_151 = arith.constant 0 : index
    %c0_152 = arith.constant 0 : index
    %320 = vector.load %arg20[%319, %c0_151, %c0_152] : memref<7x8x384xf32, #tpu.memory_space<vmem>>, vector<1x8x384xf32>
    %321 = vector.shape_cast %320 : vector<1x8x384xf32> to vector<8x384xf32>
    %322 = vector.extract_strided_slice %321 {offsets = [0, 0], sizes = [8, 128], strides = [1, 1]} : vector<8x384xf32> to vector<8x128xf32>
    %323 = arith.mulf %322, %308 : vector<8x128xf32>
    %324 = vector.extract_strided_slice %321 {offsets = [0, 128], sizes = [8, 128], strides = [1, 1]} : vector<8x384xf32> to vector<8x128xf32>
    %325 = arith.addf %323, %324 : vector<8x128xf32>
    %326 = vector.extract_strided_slice %321 {offsets = [0, 256], sizes = [8, 128], strides = [1, 1]} : vector<8x384xf32> to vector<8x128xf32>
    %327 = math.tanh %325 : vector<8x128xf32>
    %328 = arith.mulf %326, %327 : vector<8x128xf32>
    %c1_i32_153 = arith.constant 1 : i32
    %329 = arith.addi %c1_i32_150, %c1_i32_153 : i32
    %c8_i32_154 = arith.constant 8 : i32
    %330 = arith.muli %329, %c8_i32_154 : i32
    %331 = tpu.assume_multiple %330, 8 : i32
    %332 = arith.index_cast %331 : i32 to index
    %c0_155 = arith.constant 0 : index
    %333 = vector.load %arg14[%332, %c0_155] : memref<64x128xf32, #tpu.memory_space<vmem>>, vector<8x128xf32>
    tpu.vector_store %arg14[%332, %c0_155], %325 {strides = array<i32>} : memref<64x128xf32, #tpu.memory_space<vmem>>, vector<8x128xf32>,
    %334 = arith.index_cast %331 : i32 to index
    %c0_156 = arith.constant 0 : index
    %335 = vector.load %arg21[%334, %c0_156] : memref<64x128xf32, #tpu.memory_space<vmem>>, vector<8x128xf32>
    tpu.vector_store %arg21[%334, %c0_156], %328 {strides = array<i32>} : memref<64x128xf32, #tpu.memory_space<vmem>>, vector<8x128xf32>,
    %c2_i32_157 = arith.constant 2 : i32
    %336 = arith.index_cast %c2_i32_157 : i32 to index
    %c0_158 = arith.constant 0 : index
    %c0_159 = arith.constant 0 : index
    %337 = vector.load %arg20[%336, %c0_158, %c0_159] : memref<7x8x384xf32, #tpu.memory_space<vmem>>, vector<1x8x384xf32>
    %338 = vector.shape_cast %337 : vector<1x8x384xf32> to vector<8x384xf32>
    %339 = vector.extract_strided_slice %338 {offsets = [0, 0], sizes = [8, 128], strides = [1, 1]} : vector<8x384xf32> to vector<8x128xf32>
    %340 = arith.mulf %339, %325 : vector<8x128xf32>
    %341 = vector.extract_strided_slice %338 {offsets = [0, 128], sizes = [8, 128], strides = [1, 1]} : vector<8x384xf32> to vector<8x128xf32>
    %342 = arith.addf %340, %341 : vector<8x128xf32>
    %343 = vector.extract_strided_slice %338 {offsets = [0, 256], sizes = [8, 128], strides = [1, 1]} : vector<8x384xf32> to vector<8x128xf32>
    %344 = math.tanh %342 : vector<8x128xf32>
    %345 = arith.mulf %343, %344 : vector<8x128xf32>
    %c1_i32_160 = arith.constant 1 : i32
    %346 = arith.addi %c2_i32_157, %c1_i32_160 : i32
    %c8_i32_161 = arith.constant 8 : i32
    %347 = arith.muli %346, %c8_i32_161 : i32
    %348 = tpu.assume_multiple %347, 8 : i32
    %349 = arith.index_cast %348 : i32 to index
    %c0_162 = arith.constant 0 : index
    %350 = vector.load %arg14[%349, %c0_162] : memref<64x128xf32, #tpu.memory_space<vmem>>, vector<8x128xf32>
    tpu.vector_store %arg14[%349, %c0_162], %342 {strides = array<i32>} : memref<64x128xf32, #tpu.memory_space<vmem>>, vector<8x128xf32>,
    %351 = arith.index_cast %348 : i32 to index
    %c0_163 = arith.constant 0 : index
    %352 = vector.load %arg21[%351, %c0_163] : memref<64x128xf32, #tpu.memory_space<vmem>>, vector<8x128xf32>
    tpu.vector_store %arg21[%351, %c0_163], %345 {strides = array<i32>} : memref<64x128xf32, #tpu.memory_space<vmem>>, vector<8x128xf32>,
    %c3_i32_164 = arith.constant 3 : i32
    %353 = arith.index_cast %c3_i32_164 : i32 to index
    %c0_165 = arith.constant 0 : index
    %c0_166 = arith.constant 0 : index
    %354 = vector.load %arg20[%353, %c0_165, %c0_166] : memref<7x8x384xf32, #tpu.memory_space<vmem>>, vector<1x8x384xf32>
    %355 = vector.shape_cast %354 : vector<1x8x384xf32> to vector<8x384xf32>
    %356 = vector.extract_strided_slice %355 {offsets = [0, 0], sizes = [8, 128], strides = [1, 1]} : vector<8x384xf32> to vector<8x128xf32>
    %357 = arith.mulf %356, %342 : vector<8x128xf32>
    %358 = vector.extract_strided_slice %355 {offsets = [0, 128], sizes = [8, 128], strides = [1, 1]} : vector<8x384xf32> to vector<8x128xf32>
    %359 = arith.addf %357, %358 : vector<8x128xf32>
    %360 = vector.extract_strided_slice %355 {offsets = [0, 256], sizes = [8, 128], strides = [1, 1]} : vector<8x384xf32> to vector<8x128xf32>
    %361 = math.tanh %359 : vector<8x128xf32>
    %362 = arith.mulf %360, %361 : vector<8x128xf32>
    %c1_i32_167 = arith.constant 1 : i32
    %363 = arith.addi %c3_i32_164, %c1_i32_167 : i32
    %c8_i32_168 = arith.constant 8 : i32
    %364 = arith.muli %363, %c8_i32_168 : i32
    %365 = tpu.assume_multiple %364, 8 : i32
    %366 = arith.index_cast %365 : i32 to index
    %c0_169 = arith.constant 0 : index
    %367 = vector.load %arg14[%366, %c0_169] : memref<64x128xf32, #tpu.memory_space<vmem>>, vector<8x128xf32>
    tpu.vector_store %arg14[%366, %c0_169], %359 {strides = array<i32>} : memref<64x128xf32, #tpu.memory_space<vmem>>, vector<8x128xf32>,
    %368 = arith.index_cast %365 : i32 to index
    %c0_170 = arith.constant 0 : index
    %369 = vector.load %arg21[%368, %c0_170] : memref<64x128xf32, #tpu.memory_space<vmem>>, vector<8x128xf32>
    tpu.vector_store %arg21[%368, %c0_170], %362 {strides = array<i32>} : memref<64x128xf32, #tpu.memory_space<vmem>>, vector<8x128xf32>,
    %c4_i32_171 = arith.constant 4 : i32
    %370 = arith.index_cast %c4_i32_171 : i32 to index
    %c0_172 = arith.constant 0 : index
    %c0_173 = arith.constant 0 : index
    %371 = vector.load %arg20[%370, %c0_172, %c0_173] : memref<7x8x384xf32, #tpu.memory_space<vmem>>, vector<1x8x384xf32>
    %372 = vector.shape_cast %371 : vector<1x8x384xf32> to vector<8x384xf32>
    %373 = vector.extract_strided_slice %372 {offsets = [0, 0], sizes = [8, 128], strides = [1, 1]} : vector<8x384xf32> to vector<8x128xf32>
    %374 = arith.mulf %373, %359 : vector<8x128xf32>
    %375 = vector.extract_strided_slice %372 {offsets = [0, 128], sizes = [8, 128], strides = [1, 1]} : vector<8x384xf32> to vector<8x128xf32>
    %376 = arith.addf %374, %375 : vector<8x128xf32>
    %377 = vector.extract_strided_slice %372 {offsets = [0, 256], sizes = [8, 128], strides = [1, 1]} : vector<8x384xf32> to vector<8x128xf32>
    %378 = math.tanh %376 : vector<8x128xf32>
    %379 = arith.mulf %377, %378 : vector<8x128xf32>
    %c1_i32_174 = arith.constant 1 : i32
    %380 = arith.addi %c4_i32_171, %c1_i32_174 : i32
    %c8_i32_175 = arith.constant 8 : i32
    %381 = arith.muli %380, %c8_i32_175 : i32
    %382 = tpu.assume_multiple %381, 8 : i32
    %383 = arith.index_cast %382 : i32 to index
    %c0_176 = arith.constant 0 : index
    %384 = vector.load %arg14[%383, %c0_176] : memref<64x128xf32, #tpu.memory_space<vmem>>, vector<8x128xf32>
    tpu.vector_store %arg14[%383, %c0_176], %376 {strides = array<i32>} : memref<64x128xf32, #tpu.memory_space<vmem>>, vector<8x128xf32>,
    %385 = arith.index_cast %382 : i32 to index
    %c0_177 = arith.constant 0 : index
    %386 = vector.load %arg21[%385, %c0_177] : memref<64x128xf32, #tpu.memory_space<vmem>>, vector<8x128xf32>
    tpu.vector_store %arg21[%385, %c0_177], %379 {strides = array<i32>} : memref<64x128xf32, #tpu.memory_space<vmem>>, vector<8x128xf32>,
    %c5_i32_178 = arith.constant 5 : i32
    %387 = arith.index_cast %c5_i32_178 : i32 to index
    %c0_179 = arith.constant 0 : index
    %c0_180 = arith.constant 0 : index
    %388 = vector.load %arg20[%387, %c0_179, %c0_180] : memref<7x8x384xf32, #tpu.memory_space<vmem>>, vector<1x8x384xf32>
    %389 = vector.shape_cast %388 : vector<1x8x384xf32> to vector<8x384xf32>
    %390 = vector.extract_strided_slice %389 {offsets = [0, 0], sizes = [8, 128], strides = [1, 1]} : vector<8x384xf32> to vector<8x128xf32>
    %391 = arith.mulf %390, %376 : vector<8x128xf32>
    %392 = vector.extract_strided_slice %389 {offsets = [0, 128], sizes = [8, 128], strides = [1, 1]} : vector<8x384xf32> to vector<8x128xf32>
    %393 = arith.addf %391, %392 : vector<8x128xf32>
    %394 = vector.extract_strided_slice %389 {offsets = [0, 256], sizes = [8, 128], strides = [1, 1]} : vector<8x384xf32> to vector<8x128xf32>
    %395 = math.tanh %393 : vector<8x128xf32>
    %396 = arith.mulf %394, %395 : vector<8x128xf32>
    %c1_i32_181 = arith.constant 1 : i32
    %397 = arith.addi %c5_i32_178, %c1_i32_181 : i32
    %c8_i32_182 = arith.constant 8 : i32
    %398 = arith.muli %397, %c8_i32_182 : i32
    %399 = tpu.assume_multiple %398, 8 : i32
    %400 = arith.index_cast %399 : i32 to index
    %c0_183 = arith.constant 0 : index
    %401 = vector.load %arg14[%400, %c0_183] : memref<64x128xf32, #tpu.memory_space<vmem>>, vector<8x128xf32>
    tpu.vector_store %arg14[%400, %c0_183], %393 {strides = array<i32>} : memref<64x128xf32, #tpu.memory_space<vmem>>, vector<8x128xf32>,
    %402 = arith.index_cast %399 : i32 to index
    %c0_184 = arith.constant 0 : index
    %403 = vector.load %arg21[%402, %c0_184] : memref<64x128xf32, #tpu.memory_space<vmem>>, vector<8x128xf32>
    tpu.vector_store %arg21[%402, %c0_184], %396 {strides = array<i32>} : memref<64x128xf32, #tpu.memory_space<vmem>>, vector<8x128xf32>,
    %c6_i32_185 = arith.constant 6 : i32
    %404 = arith.index_cast %c6_i32_185 : i32 to index
    %c0_186 = arith.constant 0 : index
    %c0_187 = arith.constant 0 : index
    %405 = vector.load %arg20[%404, %c0_186, %c0_187] : memref<7x8x384xf32, #tpu.memory_space<vmem>>, vector<1x8x384xf32>
    %406 = vector.shape_cast %405 : vector<1x8x384xf32> to vector<8x384xf32>
    %407 = vector.extract_strided_slice %406 {offsets = [0, 0], sizes = [8, 128], strides = [1, 1]} : vector<8x384xf32> to vector<8x128xf32>
    %408 = arith.mulf %407, %393 : vector<8x128xf32>
    %409 = vector.extract_strided_slice %406 {offsets = [0, 128], sizes = [8, 128], strides = [1, 1]} : vector<8x384xf32> to vector<8x128xf32>
    %410 = arith.addf %408, %409 : vector<8x128xf32>
    %411 = vector.extract_strided_slice %406 {offsets = [0, 256], sizes = [8, 128], strides = [1, 1]} : vector<8x384xf32> to vector<8x128xf32>
    %412 = math.tanh %410 : vector<8x128xf32>
    %413 = arith.mulf %411, %412 : vector<8x128xf32>
    %c1_i32_188 = arith.constant 1 : i32
    %414 = arith.addi %c6_i32_185, %c1_i32_188 : i32
    %c8_i32_189 = arith.constant 8 : i32
    %415 = arith.muli %414, %c8_i32_189 : i32
    %416 = tpu.assume_multiple %415, 8 : i32
    %417 = arith.index_cast %416 : i32 to index
    %c0_190 = arith.constant 0 : index
    %418 = vector.load %arg14[%417, %c0_190] : memref<64x128xf32, #tpu.memory_space<vmem>>, vector<8x128xf32>
    tpu.vector_store %arg14[%417, %c0_190], %410 {strides = array<i32>} : memref<64x128xf32, #tpu.memory_space<vmem>>, vector<8x128xf32>,
    %419 = arith.index_cast %416 : i32 to index
    %c0_191 = arith.constant 0 : index
    %420 = vector.load %arg21[%419, %c0_191] : memref<64x128xf32, #tpu.memory_space<vmem>>, vector<8x128xf32>
    tpu.vector_store %arg21[%419, %c0_191], %413 {strides = array<i32>} : memref<64x128xf32, #tpu.memory_space<vmem>>, vector<8x128xf32>,
    %c7_i32_192 = arith.constant 7 : i32
    %c0_193 = arith.constant 0 : index
    %c0_194 = arith.constant 0 : index
    %421 = vector.load %arg21[%c0_193, %c0_194] : memref<64x128xf32, #tpu.memory_space<vmem>>, vector<64x128xf32>
    %c0_195 = arith.constant 0 : index
    %c0_196 = arith.constant 0 : index
    %422 = vector.load %arg10[%c0_195, %c0_196] : memref<128x128xbf16, #tpu.memory_space<vmem>>, vector<128x128xbf16>
    %423 = arith.truncf %421 : vector<64x128xf32> to vector<64x128xbf16>
    %cst_197 = arith.constant dense<0.000000e+00> : vector<64x128xf32>
    %424 = tpu.matmul %423, %422, %cst_197 {dimension_numbers = #tpu.dot_dimension_numbers<[1], [0], [0], [1], [0, 0, 1, 1], [], []>} : vector<64x128xbf16>, vector<128x128xbf16>, vector<64x128xf32> -> vector<64x128xf32>
    %c0_198 = arith.constant 0 : index
    %c0_199 = arith.constant 0 : index
    %425 = vector.load %arg11[%c0_198, %c0_199] : memref<1x128xf32, #tpu.memory_space<vmem>>, vector<1x128xf32>
    %426 = vector.broadcast %425 : vector<1x128xf32> to vector<64x128xf32>
    %427 = arith.addf %424, %426 : vector<64x128xf32>
    %cst_200 = arith.constant dense<0xFF800000> : vector<64xf32>
    %428 = vector.multi_reduction <maximumf>, %427, %cst_200 [1] : vector<64x128xf32> to vector<64xf32>
    %429 = vector.shape_cast %428 : vector<64xf32> to vector<64x1xf32>
    %430 = vector.broadcast %429 : vector<64x1xf32> to vector<64x128xf32>
    %431 = arith.subf %427, %430 : vector<64x128xf32>
    %432 = math.exp %431 : vector<64x128xf32>
    %cst_201 = arith.constant dense<0.000000e+00> : vector<64xf32>
    %433 = vector.multi_reduction <add>, %432, %cst_201 [1] : vector<64x128xf32> to vector<64xf32>
    %434 = vector.shape_cast %433 : vector<64xf32> to vector<64x1xf32>
    %435 = math.log %434 : vector<64x1xf32>
    %436 = arith.addf %429, %435 : vector<64x1xf32>
    %437 = vector.broadcast %436 : vector<64x1xf32> to vector<64x128xf32>
    %438 = arith.subf %427, %437 : vector<64x128xf32>
    %c0_202 = arith.constant 0 : index
    %c0_203 = arith.constant 0 : index
    %439 = vector.load %arg12[%c0_202, %c0_203] : memref<64x128xf32, #tpu.memory_space<vmem>>, vector<64x128xf32>
    tpu.vector_store %arg12[%c0_202, %c0_203], %438 {strides = array<i32>} : memref<64x128xf32, #tpu.memory_space<vmem>>, vector<64x128xf32>,
    return
  }
}

</mosaic_0001>

<llo_original>
// kernel: tpu_custom_call.1
$region0: #{tpu_custom_call.1}
  #allocation0 [shape = 'u32[]', space=smem, size = 0x4, offset = 0x4, fixed_abs, tag = 'smem constant byte address 0x4 - core index']
  #allocation1 [shape = 'u32[144,128]{1,0:T(1,128)}', space=vmem, size = 0x12000, scoped, tag = 'internal scratch']
  #allocation2 [shape = 'bf16[64,256]{1,0:T(8,128)(2,1)}', space=vmem, size = 0x8000, scoped, tag = 'scratch operand']
  #allocation3 [shape = 'f32[64,512]{1,0:T(8,128)}', space=vmem, size = 0x20000, scoped, tag = 'scratch operand']
  #allocation4 [shape = 'f32[7,8,384]{2,1,0:T(8,128)}', space=vmem, size = 0x15000, scoped, tag = 'scratch operand']
  #allocation5 [shape = 'f32[56,128]{1,0:T(8,128)}', space=vmem, size = 0x7000, scoped, tag = 'scratch operand']
  #allocation6 [shape = 'f32[7,8,384]{2,1,0:T(8,128)}', space=vmem, size = 0x15000, scoped, tag = 'scratch operand']
  #allocation7 [shape = 'f32[64,128]{1,0:T(8,128)}', space=vmem, size = 0x8000, scoped, tag = 'scratch operand']
  %s0 = inlined_call_operand.hbm [shape: bf16[64,128], index: 0, kind: input, shape index: {}]
  %s1 = inlined_call_operand.hbm [shape: f32[8,8,128], index: 1, kind: input, shape index: {}]
  %s2 = inlined_call_operand.hbm [shape: f32[2,8,128], index: 2, kind: input, shape index: {}]
  %s3 = inlined_call_operand.hbm [shape: f32[2,8,128], index: 3, kind: input, shape index: {}]
  %s4 = inlined_call_operand.hbm [shape: bf16[256,512], index: 4, kind: input, shape index: {}]
  %s5 = inlined_call_operand.hbm [shape: bf16[128,512], index: 5, kind: input, shape index: {}]
  %s6 = inlined_call_operand.vmem [shape: f32[1,512], index: 6, kind: input, shape index: {}]
  %s7 = inlined_call_operand.hbm [shape: bf16[128,512], index: 7, kind: input, shape index: {}]
  %s8 = inlined_call_operand.hbm [shape: bf16[128,512], index: 8, kind: input, shape index: {}]
  %s9 = inlined_call_operand.vmem [shape: f32[1,512], index: 9, kind: input, shape index: {}]
  %s10 = inlined_call_operand.hbm [shape: bf16[128,128], index: 10, kind: input, shape index: {}]
  %s11 = inlined_call_operand.vmem [shape: f32[1,128], index: 11, kind: input, shape index: {}]
  %s12 = inlined_call_operand.hbm [shape: f32[64,128], index: 12, kind: output, shape index: {0}]
  %s13 = inlined_call_operand.hbm [shape: f32[64,128], index: 13, kind: output, shape index: {1}]
  %s14 = inlined_call_operand.hbm [shape: f32[64,128], index: 14, kind: output, shape index: {2}]
  %s15 = inlined_call_operand.hbm [shape: f32[2,8,128], index: 15, kind: output, shape index: {3}]
  %16 = xla_tuple %s12, %s13, %s14, %s15
  %s17 = sld [smem:[#allocation0]]
  $region118: #{tpu_custom_call.1} parent=0
    _
  %s19 = ssub.s32 1, %s17
  %s20 = scalar_select 0, %s19, %s17
  $region1: #{tpu_custom_call.1} parent=0
    #allocation8 [shape = 'u8[16384]{0}', space=vmem, size = 0x4000, scoped, tag = 'input window, operand 0, single buffered']
    #allocation9 [shape = 's32[1]{0}', space=sflag, size = 0x4, scoped, tag = 'scoped memory for tpu_custom_call.1']
    #allocation10 [shape = 's32[1]{0}', space=sflag, size = 0x4, scoped, tag = 'scoped memory for tpu_custom_call.1']
    #allocation11 [shape = 'u8[32768]{0}', space=vmem, size = 0x8000, scoped, tag = 'input window, operand 1, single buffered']
    #allocation12 [shape = 's32[1]{0}', space=sflag, size = 0x4, scoped, tag = 'scoped memory for tpu_custom_call.1']
    #allocation13 [shape = 'u8[8192]{0}', space=vmem, size = 0x2000, scoped, tag = 'input window, operand 2, single buffered']
    #allocation14 [shape = 'u8[8192]{0}', space=vmem, size = 0x2000, scoped, tag = 'input window, operand 3, single buffered']
    #allocation15 [shape = 's32[1]{0}', space=sflag, size = 0x4, scoped, tag = 'scoped memory for tpu_custom_call.1']
    #allocation16 [shape = 'u8[262144]{0}', space=vmem, size = 0x40000, scoped, tag = 'input window, operand 4, single buffered']
    #allocation17 [shape = 'u8[131072]{0}', space=vmem, size = 0x20000, scoped, tag = 'input window, operand 5, single buffered']
    #allocation18 [shape = 's32[1]{0}', space=sflag, size = 0x4, scoped, tag = 'scoped memory for tpu_custom_call.1']
    #allocation19 [shape = 'u8[131072]{0}', space=vmem, size = 0x20000, scoped, tag = 'input window, operand 7, single buffered']
    #allocation20 [shape = 'u8[131072]{0}', space=vmem, size = 0x20000, scoped, tag = 'input window, operand 8, single buffered']
    #allocation21 [shape = 's32[1]{0}', space=sflag, size = 0x4, scoped, tag = 'scoped memory for tpu_custom_call.1']
    #allocation22 [shape = 'u8[32768]{0}', space=vmem, size = 0x8000, scoped, tag = 'input window, operand 10, single buffered']
    #allocation23 [shape = 'u8[32768]{0}', space=vmem, size = 0x8000, scoped, tag = 'output window, operand 0, single buffered']
    #allocation24 [shape = 'u8[32768]{0}', space=vmem, size = 0x8000, scoped, tag = 'output window, operand 1, single buffered']
    #allocation25 [shape = 's32[1]{0}', space=sflag, size = 0x4, scoped, tag = 'scoped memory for tpu_custom_call.1']
    #allocation26 [shape = 'u8[32768]{0}', space=vmem, size = 0x8000, scoped, tag = 'output window, operand 2, single buffered']
    #allocation27 [shape = 'u8[8192]{0}', space=vmem, size = 0x2000, scoped, tag = 'output window, operand 3, single buffered']
    #allocation28 [shape = 's32[1]{0}', space=sflag, size = 0x4, scoped, tag = 'scoped memory for tpu_custom_call.1']
    %21 = vsyncpa [#allocation9], 0
    %22 = vsyncpa [#allocation12], 0
    %23 = vsyncpa [#allocation15], 0
    %24 = vsyncpa [#allocation18], 0
    %25 = vsyncpa [#allocation21], 0
    %26 = vsyncpa [#allocation10], 0
    %27 = vsyncpa [#allocation25], 0
    %28 = vsyncpa [#allocation28], 0
    // Predicated region
    $region2: #{tpu_custom_call.1} parent=1 // pred_check
      _
    $region3: #{tpu_custom_call.1} parent=1 // pred_check_branch
      %30 = sbr.rel (0) target = $region5
    $region4: #{tpu_custom_call.1} parent=1 // pred_region
      %s32 = ssub.s32 512, 512
      %33 = vsyncadd [#allocation9], %s32
      %s34 = sshll.u32 [#allocation8], 4
      %s35 = int_to_ptr.vmem [resolvable:$true] %s34
      %40 = dma.hbm_to_vmem [thread:$0]  %s0, 512, %s35, [#allocation9], 64, 64, 4
    $region5: #{tpu_custom_call.1} parent=1 // pred_fallthru
      _
    // Predicated region
    $region6: #{tpu_custom_call.1} parent=1 // pred_check
      _
    $region7: #{tpu_custom_call.1} parent=1 // pred_check_branch
      %42 = sbr.rel (0) target = $region9
    $region8: #{tpu_custom_call.1} parent=1 // pred_region
      %s44 = ssub.s32 1024, 1024
      %45 = vsyncadd [#allocation12], %s44
      %s46 = sshll.u32 [#allocation11], 4
      %s47 = int_to_ptr.vmem [resolvable:$true] %s46
      %52 = dma.hbm_to_vmem [thread:$0]  %s1, 1024, %s47, [#allocation12], 128, 128, 8
    $region9: #{tpu_custom_call.1} parent=1 // pred_fallthru
      _
    // Predicated region
    $region10: #{tpu_custom_call.1} parent=1 // pred_check
      _
    $region11: #{tpu_custom_call.1} parent=1 // pred_check_branch
      %54 = sbr.rel (0) target = $region13
    $region12: #{tpu_custom_call.1} parent=1 // pred_region
      %s56 = ssub.s32 256, 256
      %57 = vsyncadd [#allocation12], %s56
      %s58 = sshll.u32 [#allocation13], 4
      %s59 = int_to_ptr.vmem [resolvable:$true] %s58
      %64 = dma.hbm_to_vmem [thread:$0]  %s2, 256, %s59, [#allocation12], 128, 128, 8
    $region13: #{tpu_custom_call.1} parent=1 // pred_fallthru
      _
    // Predicated region
    $region14: #{tpu_custom_call.1} parent=1 // pred_check
      _
    $region15: #{tpu_custom_call.1} parent=1 // pred_check_branch
      %66 = sbr.rel (0) target = $region17
    $region16: #{tpu_custom_call.1} parent=1 // pred_region
      %s68 = ssub.s32 256, 256
      %69 = vsyncadd [#allocation15], %s68
      %s70 = sshll.u32 [#allocation14], 4
      %s71 = int_to_ptr.vmem [resolvable:$true] %s70
      %76 = dma.hbm_to_vmem [thread:$0]  %s3, 256, %s71, [#allocation15], 128, 128, 8
    $region17: #{tpu_custom_call.1} parent=1 // pred_fallthru
      _
    // Predicated region
    $region18: #{tpu_custom_call.1} parent=1 // pred_check
      _
    $region19: #{tpu_custom_call.1} parent=1 // pred_check_branch
      %78 = sbr.rel (0) target = $region21
    $region20: #{tpu_custom_call.1} parent=1 // pred_region
      %s80 = ssub.s32 8192, 8192
      %81 = vsyncadd [#allocation15], %s80
      %s82 = sshll.u32 [#allocation16], 4
      %s83 = int_to_ptr.vmem [resolvable:$true] %s82
      %88 = dma.hbm_to_vmem [thread:$0]  %s4, 8192, %s83, [#allocation15], 256, 256, 16
    $region21: #{tpu_custom_call.1} parent=1 // pred_fallthru
      _
    // Predicated region
    $region22: #{tpu_custom_call.1} parent=1 // pred_check
      _
    $region23: #{tpu_custom_call.1} parent=1 // pred_check_branch
      %90 = sbr.rel (0) target = $region25
    $region24: #{tpu_custom_call.1} parent=1 // pred_region
      %s92 = ssub.s32 4096, 4096
      %93 = vsyncadd [#allocation18], %s92
      %s94 = sshll.u32 [#allocation17], 4
      %s95 = int_to_ptr.vmem [resolvable:$true] %s94
      %100 = dma.hbm_to_vmem [thread:$0]  %s5, 4096, %s95, [#allocation18], 256, 256, 16
    $region25: #{tpu_custom_call.1} parent=1 // pred_fallthru
      _
    // Predicated region
    $region26: #{tpu_custom_call.1} parent=1 // pred_check
      _
    $region27: #{tpu_custom_call.1} parent=1 // pred_check_branch
      %102 = sbr.rel (0) target = $region29
    $region28: #{tpu_custom_call.1} parent=1 // pred_region
      _
    $region29: #{tpu_custom_call.1} parent=1 // pred_fallthru
      _
    // Predicated region
    $region30: #{tpu_custom_call.1} parent=1 // pred_check
      _
    $region31: #{tpu_custom_call.1} parent=1 // pred_check_branch
      %104 = sbr.rel (0) target = $region33
    $region32: #{tpu_custom_call.1} parent=1 // pred_region
      %s106 = ssub.s32 4096, 4096
      %107 = vsyncadd [#allocation18], %s106
      %s108 = sshll.u32 [#allocation19], 4
      %s109 = int_to_ptr.vmem [resolvable:$true] %s108
      %114 = dma.hbm_to_vmem [thread:$0]  %s7, 4096, %s109, [#allocation18], 256, 256, 16
    $region33: #{tpu_custom_call.1} parent=1 // pred_fallthru
      _
    // Predicated region
    $region34: #{tpu_custom_call.1} parent=1 // pred_check
      _
    $region35: #{tpu_custom_call.1} parent=1 // pred_check_branch
      %116 = sbr.rel (0) target = $region37
    $region36: #{tpu_custom_call.1} parent=1 // pred_region
      %s118 = ssub.s32 4096, 4096
      %119 = vsyncadd [#allocation21], %s118
      %s120 = sshll.u32 [#allocation20], 4
      %s121 = int_to_ptr.vmem [resolvable:$true] %s120
      %126 = dma.hbm_to_vmem [thread:$0]  %s8, 4096, %s121, [#allocation21], 256, 256, 16
    $region37: #{tpu_custom_call.1} parent=1 // pred_fallthru
      _
    // Predicated region
    $region38: #{tpu_custom_call.1} parent=1 // pred_check
      _
    $region39: #{tpu_custom_call.1} parent=1 // pred_check_branch
      %128 = sbr.rel (0) target = $region41
    $region40: #{tpu_custom_call.1} parent=1 // pred_region
      _
    $region41: #{tpu_custom_call.1} parent=1 // pred_fallthru
      _
    // Predicated region
    $region42: #{tpu_custom_call.1} parent=1 // pred_check
      _
    $region43: #{tpu_custom_call.1} parent=1 // pred_check_branch
      %130 = sbr.rel (0) target = $region45
    $region44: #{tpu_custom_call.1} parent=1 // pred_region
      %s132 = ssub.s32 1024, 1024
      %133 = vsyncadd [#allocation21], %s132
      %s134 = sshll.u32 [#allocation22], 4
      %s135 = int_to_ptr.vmem [resolvable:$true] %s134
      %140 = dma.hbm_to_vmem [thread:$0]  %s10, 1024, %s135, [#allocation21], 64, 64, 4
    $region45: #{tpu_custom_call.1} parent=1 // pred_fallthru
      _
    // Predicated region
    $region46: #{tpu_custom_call.1} parent=1 // pred_check
      _
    $region47: #{tpu_custom_call.1} parent=1 // pred_check_branch
      %142 = sbr.rel (0) target = $region49
    $region48: #{tpu_custom_call.1} parent=1 // pred_region
      _
    $region49: #{tpu_custom_call.1} parent=1 // pred_fallthru
      _
    // Predicated region
    $region50: #{tpu_custom_call.1} parent=1 // pred_check
      _
    $region51: #{tpu_custom_call.1} parent=1 // pred_check_branch
      %144 = sbr.rel (0) target = $region53
    $region52: #{tpu_custom_call.1} parent=1 // pred_region
      %145 = dma.done [#allocation9], 512
    $region53: #{tpu_custom_call.1} parent=1 // pred_fallthru
      _
    // Predicated region
    $region54: #{tpu_custom_call.1} parent=1 // pred_check
      _
    $region55: #{tpu_custom_call.1} parent=1 // pred_check_branch
      %147 = sbr.rel (0) target = $region57
    $region56: #{tpu_custom_call.1} parent=1 // pred_region
      %148 = dma.done [#allocation12], 1024
    $region57: #{tpu_custom_call.1} parent=1 // pred_fallthru
      _
    // Predicated region
    $region58: #{tpu_custom_call.1} parent=1 // pred_check
      _
    $region59: #{tpu_custom_call.1} parent=1 // pred_check_branch
      %150 = sbr.rel (0) target = $region61
    $region60: #{tpu_custom_call.1} parent=1 // pred_region
      %151 = dma.done [#allocation12], 256
    $region61: #{tpu_custom_call.1} parent=1 // pred_fallthru
      _
    // Predicated region
    $region62: #{tpu_custom_call.1} parent=1 // pred_check
      _
    $region63: #{tpu_custom_call.1} parent=1 // pred_check_branch
      %153 = sbr.rel (0) target = $region65
    $region64: #{tpu_custom_call.1} parent=1 // pred_region
      %154 = dma.done [#allocation15], 256
    $region65: #{tpu_custom_call.1} parent=1 // pred_fallthru
      _
    // Predicated region
    $region66: #{tpu_custom_call.1} parent=1 // pred_check
      _
    $region67: #{tpu_custom_call.1} parent=1 // pred_check_branch
      %156 = sbr.rel (0) target = $region69
    $region68: #{tpu_custom_call.1} parent=1 // pred_region
      %157 = dma.done [#allocation15], 8192
    $region69: #{tpu_custom_call.1} parent=1 // pred_fallthru
      _
    // Predicated region
    $region70: #{tpu_custom_call.1} parent=1 // pred_check
      _
    $region71: #{tpu_custom_call.1} parent=1 // pred_check_branch
      %159 = sbr.rel (0) target = $region73
    $region72: #{tpu_custom_call.1} parent=1 // pred_region
      %160 = dma.done [#allocation18], 4096
    $region73: #{tpu_custom_call.1} parent=1 // pred_fallthru
      _
    // Predicated region
    $region74: #{tpu_custom_call.1} parent=1 // pred_check
      _
    $region75: #{tpu_custom_call.1} parent=1 // pred_check_branch
      %162 = sbr.rel (0) target = $region77
    $region76: #{tpu_custom_call.1} parent=1 // pred_region
      %163 = dma.done [#allocation18], 4096
    $region77: #{tpu_custom_call.1} parent=1 // pred_fallthru
      _
    // Predicated region
    $region78: #{tpu_custom_call.1} parent=1 // pred_check
      _
    $region79: #{tpu_custom_call.1} parent=1 // pred_check_branch
      %165 = sbr.rel (0) target = $region81
    $region80: #{tpu_custom_call.1} parent=1 // pred_region
      %166 = dma.done [#allocation21], 4096
    $region81: #{tpu_custom_call.1} parent=1 // pred_fallthru
      _
    // Predicated region
    $region82: #{tpu_custom_call.1} parent=1 // pred_check
      _
    $region83: #{tpu_custom_call.1} parent=1 // pred_check_branch
      %168 = sbr.rel (0) target = $region85
    $region84: #{tpu_custom_call.1} parent=1 // pred_region
      %169 = dma.done [#allocation21], 1024
    $region85: #{tpu_custom_call.1} parent=1 // pred_fallthru
      _
    %v171 = vld [vmem:[#allocation11] sm:$0xff]
    %v172 = vld [vmem:[#allocation11 + $0x8] sm:$0xff]
    %v173 = vld [vmem:[#allocation11 + $0x10] sm:$0xff]
    %v174 = vld [vmem:[#allocation11 + $0x18] sm:$0xff]
    %v175 = vld [vmem:[#allocation11 + $0x20] sm:$0xff]
    %v176 = vld [vmem:[#allocation11 + $0x28] sm:$0xff]
    %v177 = vld [vmem:[#allocation11 + $0x30] sm:$0xff]
    %v178 = vld [vmem:[#allocation11 + $0x38] sm:$0xff]
    %v179 = vrot.slane %v171, 4
    %v180 = vadd.f32 %v171, %v179
    %v181 = vrot.slane %v180, 2
    %v182 = vadd.f32 %v180, %v181
    %v183 = vrot.slane %v182, 1
    %v184 = vadd.f32 %v182, %v183
    %v185 = vrot.slane %v172, 4
    %v186 = vadd.f32 %v172, %v185
    %v187 = vrot.slane %v186, 2
    %v188 = vadd.f32 %v186, %v187
    %v189 = vrot.slane %v188, 1
    %v190 = vadd.f32 %v188, %v189
    %v191 = vrot.slane %v173, 4
    %v192 = vadd.f32 %v173, %v191
    %v193 = vrot.slane %v192, 2
    %v194 = vadd.f32 %v192, %v193
    %v195 = vrot.slane %v194, 1
    %v196 = vadd.f32 %v194, %v195
    %v197 = vrot.slane %v174, 4
    %v198 = vadd.f32 %v174, %v197
    %v199 = vrot.slane %v198, 2
    %v200 = vadd.f32 %v198, %v199
    %v201 = vrot.slane %v200, 1
    %v202 = vadd.f32 %v200, %v201
    %v203 = vrot.slane %v175, 4
    %v204 = vadd.f32 %v175, %v203
    %v205 = vrot.slane %v204, 2
    %v206 = vadd.f32 %v204, %v205
    %v207 = vrot.slane %v206, 1
    %v208 = vadd.f32 %v206, %v207
    %v209 = vrot.slane %v176, 4
    %v210 = vadd.f32 %v176, %v209
    %v211 = vrot.slane %v210, 2
    %v212 = vadd.f32 %v210, %v211
    %v213 = vrot.slane %v212, 1
    %v214 = vadd.f32 %v212, %v213
    %v215 = vrot.slane %v177, 4
    %v216 = vadd.f32 %v177, %v215
    %v217 = vrot.slane %v216, 2
    %v218 = vadd.f32 %v216, %v217
    %v219 = vrot.slane %v218, 1
    %v220 = vadd.f32 %v218, %v219
    %v221 = vrot.slane %v178, 4
    %v222 = vadd.f32 %v178, %v221
    %v223 = vrot.slane %v222, 2
    %v224 = vadd.f32 %v222, %v223
    %v225 = vrot.slane %v224, 1
    %v226 = vadd.f32 %v224, %v225
    %v227 = vld [vmem:[#allocation8] sm:$0xf]
    %v228 = vld [vmem:[#allocation8 + $0x4] sm:$0xf]
    %v229 = vld [vmem:[#allocation8 + $0x8] sm:$0xf]
    %v230 = vld [vmem:[#allocation8 + $0xc] sm:$0xf]
    %v231 = vld [vmem:[#allocation8 + $0x10] sm:$0xf]
    %v232 = vld [vmem:[#allocation8 + $0x14] sm:$0xf]
    %v233 = vld [vmem:[#allocation8 + $0x18] sm:$0xf]
    %v234 = vld [vmem:[#allocation8 + $0x1c] sm:$0xf]
    %235 = vst [vmem:[#allocation2] sm:$0xf] %v227
    %236 = vst [vmem:[#allocation2 + $0x8] sm:$0xf] %v228
    %237 = vst [vmem:[#allocation2 + $0x10] sm:$0xf] %v229
    %238 = vst [vmem:[#allocation2 + $0x18] sm:$0xf] %v230
    %239 = vst [vmem:[#allocation2 + $0x20] sm:$0xf] %v231
    %240 = vst [vmem:[#allocation2 + $0x28] sm:$0xf] %v232
    %241 = vst [vmem:[#allocation2 + $0x30] sm:$0xf] %v233
    %242 = vst [vmem:[#allocation2 + $0x38] sm:$0xf] %v234
    %v243 = vpack.c.bf16 %v184, %v184
    %v244 = vpack.c.bf16 %v190, %v190
    %v245 = vpack.c.bf16 %v196, %v196
    %v246 = vpack.c.bf16 %v202, %v202
    %v247 = vpack.c.bf16 %v208, %v208
    %v248 = vpack.c.bf16 %v214, %v214
    %v249 = vpack.c.bf16 %v220, %v220
    %v250 = vpack.c.bf16 %v226, %v226
    %v259 = vunpack.c.l.b16 %v243
    %v260 = vunpack.c.l.b16 %v244
    %v261 = vunpack.c.l.b16 %v245
    %v262 = vunpack.c.l.b16 %v246
    %v263 = vunpack.c.l.b16 %v247
    %v264 = vunpack.c.l.b16 %v248
    %v265 = vunpack.c.l.b16 %v249
    %v266 = vunpack.c.l.b16 %v250
    %v267 = vpack.c.b16 %v259, %v259
    %v268 = vpack.c.b16 %v260, %v260
    %v269 = vpack.c.b16 %v261, %v261
    %v270 = vpack.c.b16 %v262, %v262
    %v271 = vpack.c.b16 %v263, %v263
    %v272 = vpack.c.b16 %v264, %v264
    %v273 = vpack.c.b16 %v265, %v265
    %v274 = vpack.c.b16 %v266, %v266
    %v275 = vunpack.c.l.b16 %v267
    %v276 = vunpack.c.l.b16 %v268
    %v277 = vunpack.c.l.b16 %v269
    %v278 = vunpack.c.l.b16 %v270
    %v279 = vunpack.c.l.b16 %v271
    %v280 = vunpack.c.l.b16 %v272
    %v281 = vunpack.c.l.b16 %v273
    %v282 = vunpack.c.l.b16 %v274
    %vm283 = vcmask 1041409
    %v284 = vsel %vm283, %v276, %v275
    %vm285 = vcmask 1042434
    %v286 = vsel %vm285, %v277, %v284
    %vm287 = vcmask 1043459
    %v288 = vsel %vm287, %v278, %v286
    %vm289 = vcmask 1044484
    %v290 = vsel %vm289, %v279, %v288
    %vm291 = vcmask 1045509
    %v292 = vsel %vm291, %v280, %v290
    %vm293 = vcmask 1046534
    %v294 = vsel %vm293, %v281, %v292
    %vm295 = vcmask 1047559
    %v296 = vsel %vm295, %v282, %v294
    %v297 = vpack.c.b16 %v296, %v296
    %299 = vst [vmem:[#allocation2 + $0x4] sm:$0xf] %v297
    %300 = vst [vmem:[#allocation2 + $0xc] sm:$0xf] %v297
    %301 = vst [vmem:[#allocation2 + $0x14] sm:$0xf] %v297
    %302 = vst [vmem:[#allocation2 + $0x1c] sm:$0xf] %v297
    %303 = vst [vmem:[#allocation2 + $0x24] sm:$0xf] %v297
    %304 = vst [vmem:[#allocation2 + $0x2c] sm:$0xf] %v297
    %305 = vst [vmem:[#allocation2 + $0x34] sm:$0xf] %v297
    %306 = vst [vmem:[#allocation2 + $0x3c] sm:$0xf] %v297
    %v307 = vld [vmem:[#allocation2] sm:$0xff]
    %v308 = vld [vmem:[#allocation2 + $0x8] sm:$0xff]
    %v309 = vld [vmem:[#allocation2 + $0x10] sm:$0xff]
    %v310 = vld [vmem:[#allocation2 + $0x18] sm:$0xff]
    %v311 = vld [vmem:[#allocation2 + $0x20] sm:$0xff]
    %v312 = vld [vmem:[#allocation2 + $0x28] sm:$0xff]
    %v313 = vld [vmem:[#allocation2 + $0x30] sm:$0xff]
    %v314 = vld [vmem:[#allocation2 + $0x38] sm:$0xff]
    %v315 = vld [vmem:[#allocation16] sm:$0xff]
    %v316 = vld [vmem:[#allocation16 + $0x8] sm:$0xff]
    %v317 = vld [vmem:[#allocation16 + $0x10] sm:$0xff]
    %v318 = vld [vmem:[#allocation16 + $0x18] sm:$0xff]
    %v319 = vld [vmem:[#allocation16 + $0x20] sm:$0xff]
    %v320 = vld [vmem:[#allocation16 + $0x28] sm:$0xff]
    %v321 = vld [vmem:[#allocation16 + $0x30] sm:$0xff]
    %v322 = vld [vmem:[#allocation16 + $0x38] sm:$0xff]
    %v323 = vld [vmem:[#allocation16 + $0x40] sm:$0xff]
    %v324 = vld [vmem:[#allocation16 + $0x48] sm:$0xff]
    %v325 = vld [vmem:[#allocation16 + $0x50] sm:$0xff]
    %v326 = vld [vmem:[#allocation16 + $0x58] sm:$0xff]
    %v327 = vld [vmem:[#allocation16 + $0x60] sm:$0xff]
    %v328 = vld [vmem:[#allocation16 + $0x68] sm:$0xff]
    %v329 = vld [vmem:[#allocation16 + $0x70] sm:$0xff]
    %v330 = vld [vmem:[#allocation16 + $0x78] sm:$0xff]
    %v331 = vld [vmem:[#allocation16 + $0x80] sm:$0xff]
    %v332 = vld [vmem:[#allocation16 + $0x88] sm:$0xff]
    %v333 = vld [vmem:[#allocation16 + $0x90] sm:$0xff]
    %v334 = vld [vmem:[#allocation16 + $0x98] sm:$0xff]
    %v335 = vld [vmem:[#allocation16 + $0xa0] sm:$0xff]
    %v336 = vld [vmem:[#allocation16 + $0xa8] sm:$0xff]
    %v337 = vld [vmem:[#allocation16 + $0xb0] sm:$0xff]
    %v338 = vld [vmem:[#allocation16 + $0xb8] sm:$0xff]
    %v339 = vld [vmem:[#allocation16 + $0xc0] sm:$0xff]
    %v340 = vld [vmem:[#allocation16 + $0xc8] sm:$0xff]
    %v341 = vld [vmem:[#allocation16 + $0xd0] sm:$0xff]
    %v342 = vld [vmem:[#allocation16 + $0xd8] sm:$0xff]
    %v343 = vld [vmem:[#allocation16 + $0xe0] sm:$0xff]
    %v344 = vld [vmem:[#allocation16 + $0xe8] sm:$0xff]
    %v345 = vld [vmem:[#allocation16 + $0xf0] sm:$0xff]
    %v346 = vld [vmem:[#allocation16 + $0xf8] sm:$0xff]
    %v347 = vld [vmem:[#allocation16 + $0x100] sm:$0xff]
    %v348 = vld [vmem:[#allocation16 + $0x108] sm:$0xff]
    %v349 = vld [vmem:[#allocation16 + $0x110] sm:$0xff]
    %v350 = vld [vmem:[#allocation16 + $0x118] sm:$0xff]
    %v351 = vld [vmem:[#allocation16 + $0x120] sm:$0xff]
    %v352 = vld [vmem:[#allocation16 + $0x128] sm:$0xff]
    %v353 = vld [vmem:[#allocation16 + $0x130] sm:$0xff]
    %v354 = vld [vmem:[#allocation16 + $0x138] sm:$0xff]
    %v355 = vld [vmem:[#allocation16 + $0x140] sm:$0xff]
    %v356 = vld [vmem:[#allocation16 + $0x148] sm:$0xff]
    %v357 = vld [vmem:[#allocation16 + $0x150] sm:$0xff]
    %v358 = vld [vmem:[#allocation16 + $0x158] sm:$0xff]
    %v359 = vld [vmem:[#allocation16 + $0x160] sm:$0xff]
    %v360 = vld [vmem:[#allocation16 + $0x168] sm:$0xff]
    %v361 = vld [vmem:[#allocation16 + $0x170] sm:$0xff]
    %v362 = vld [vmem:[#allocation16 + $0x178] sm:$0xff]
    %v363 = vld [vmem:[#allocation16 + $0x180] sm:$0xff]
    %v364 = vld [vmem:[#allocation16 + $0x188] sm:$0xff]
    %v365 = vld [vmem:[#allocation16 + $0x190] sm:$0xff]
    %v366 = vld [vmem:[#allocation16 + $0x198] sm:$0xff]
    %v367 = vld [vmem:[#allocation16 + $0x1a0] sm:$0xff]
    %v368 = vld [vmem:[#allocation16 + $0x1a8] sm:$0xff]
    %v369 = vld [vmem:[#allocation16 + $0x1b0] sm:$0xff]
    %v370 = vld [vmem:[#allocation16 + $0x1b8] sm:$0xff]
    %v371 = vld [vmem:[#allocation16 + $0x1c0] sm:$0xff]
    %v372 = vld [vmem:[#allocation16 + $0x1c8] sm:$0xff]
    %v373 = vld [vmem:[#allocation16 + $0x1d0] sm:$0xff]
    %v374 = vld [vmem:[#allocation16 + $0x1d8] sm:$0xff]
    %v375 = vld [vmem:[#allocation16 + $0x1e0] sm:$0xff]
    %v376 = vld [vmem:[#allocation16 + $0x1e8] sm:$0xff]
    %v377 = vld [vmem:[#allocation16 + $0x1f0] sm:$0xff]
    %v378 = vld [vmem:[#allocation16 + $0x1f8] sm:$0xff]
    %v379 = vld [vmem:[%s6] sm:$0xf]
    %v381 = vlaneseq
    %v382 = vshrl.u32 %v381, 7
    %v383 = vsub.s32 0, %v382
    %v384 = vrot.slane %v379, %v383
    %v385 = vlaneseq
    %v386 = vshrl.u32 %v385, 7
    %v387 = vsub.s32 1, %v386
    %v388 = vrot.slane %v379, %v387
    %v389 = vlaneseq
    %v390 = vshrl.u32 %v389, 7
    %v391 = vsub.s32 2, %v390
    %v392 = vrot.slane %v379, %v391
    %v393 = vlaneseq
    %v394 = vshrl.u32 %v393, 7
    %v395 = vsub.s32 3, %v394
    %v396 = vrot.slane %v379, %v395
    %v409 = vunpack.c.l.b16 %v307
    %v410 = vunpack.c.h.b16 %v307
    %v411 = vunpack.c.l.b16 %v308
    %v412 = vunpack.c.h.b16 %v308
    %v413 = vunpack.c.l.b16 %v309
    %v414 = vunpack.c.h.b16 %v309
    %v415 = vunpack.c.l.b16 %v310
    %v416 = vunpack.c.h.b16 %v310
    %v417 = vunpack.c.l.b16 %v311
    %v418 = vunpack.c.h.b16 %v311
    %v419 = vunpack.c.l.b16 %v312
    %v420 = vunpack.c.h.b16 %v312
    %v421 = vunpack.c.l.b16 %v313
    %v422 = vunpack.c.h.b16 %v313
    %v423 = vunpack.c.l.b16 %v314
    %v424 = vunpack.c.h.b16 %v314
    %v425 = vpack.c.b16 %v411, %v409
    %v426 = vpack.c.b16 %v412, %v410
    %v427 = vpack.c.b16 %v415, %v413
    %v428 = vpack.c.b16 %v416, %v414
    %v429 = vpack.c.b16 %v419, %v417
    %v430 = vpack.c.b16 %v420, %v418
    %v431 = vpack.c.b16 %v423, %v421
    %v432 = vpack.c.b16 %v424, %v422
    %v505 = vunpack.c.l.b16 %v315
    %v506 = vunpack.c.h.b16 %v315
    %v507 = vunpack.c.l.b16 %v316
    %v508 = vunpack.c.h.b16 %v316
    %v509 = vunpack.c.l.b16 %v317
    %v510 = vunpack.c.h.b16 %v317
    %v511 = vunpack.c.l.b16 %v318
    %v512 = vunpack.c.h.b16 %v318
    %v513 = vunpack.c.l.b16 %v319
    %v514 = vunpack.c.h.b16 %v319
    %v515 = vunpack.c.l.b16 %v320
    %v516 = vunpack.c.h.b16 %v320
    %v517 = vunpack.c.l.b16 %v321
    %v518 = vunpack.c.h.b16 %v321
    %v519 = vunpack.c.l.b16 %v322
    %v520 = vunpack.c.h.b16 %v322
    %v521 = vunpack.c.l.b16 %v323
    %v522 = vunpack.c.h.b16 %v323
    %v523 = vunpack.c.l.b16 %v324
    %v524 = vunpack.c.h.b16 %v324
    %v525 = vunpack.c.l.b16 %v325
    %v526 = vunpack.c.h.b16 %v325
    %v527 = vunpack.c.l.b16 %v326
    %v528 = vunpack.c.h.b16 %v326
    %v529 = vunpack.c.l.b16 %v327
    %v530 = vunpack.c.h.b16 %v327
    %v531 = vunpack.c.l.b16 %v328
    %v532 = vunpack.c.h.b16 %v328
    %v533 = vunpack.c.l.b16 %v329
    %v534 = vunpack.c.h.b16 %v329
    %v535 = vunpack.c.l.b16 %v330
    %v536 = vunpack.c.h.b16 %v330
    %v537 = vunpack.c.l.b16 %v331
    %v538 = vunpack.c.h.b16 %v331
    %v539 = vunpack.c.l.b16 %v332
    %v540 = vunpack.c.h.b16 %v332
    %v541 = vunpack.c.l.b16 %v333
    %v542 = vunpack.c.h.b16 %v333
    %v543 = vunpack.c.l.b16 %v334
    %v544 = vunpack.c.h.b16 %v334
    %v545 = vunpack.c.l.b16 %v335
    %v546 = vunpack.c.h.b16 %v335
    %v547 = vunpack.c.l.b16 %v336
    %v548 = vunpack.c.h.b16 %v336
    %v549 = vunpack.c.l.b16 %v337
    %v550 = vunpack.c.h.b16 %v337
    %v551 = vunpack.c.l.b16 %v338
    %v552 = vunpack.c.h.b16 %v338
    %v553 = vunpack.c.l.b16 %v339
    %v554 = vunpack.c.h.b16 %v339
    %v555 = vunpack.c.l.b16 %v340
    %v556 = vunpack.c.h.b16 %v340
    %v557 = vunpack.c.l.b16 %v341
    %v558 = vunpack.c.h.b16 %v341
    %v559 = vunpack.c.l.b16 %v342
    %v560 = vunpack.c.h.b16 %v342
    %v561 = vunpack.c.l.b16 %v343
    %v562 = vunpack.c.h.b16 %v343
    %v563 = vunpack.c.l.b16 %v344
    %v564 = vunpack.c.h.b16 %v344
    %v565 = vunpack.c.l.b16 %v345
    %v566 = vunpack.c.h.b16 %v345
    %v567 = vunpack.c.l.b16 %v346
    %v568 = vunpack.c.h.b16 %v346
    %v569 = vunpack.c.l.b16 %v347
    %v570 = vunpack.c.h.b16 %v347
    %v571 = vunpack.c.l.b16 %v348
    %v572 = vunpack.c.h.b16 %v348
    %v573 = vunpack.c.l.b16 %v349
    %v574 = vunpack.c.h.b16 %v349
    %v575 = vunpack.c.l.b16 %v350
    %v576 = vunpack.c.h.b16 %v350
    %v577 = vunpack.c.l.b16 %v351
    %v578 = vunpack.c.h.b16 %v351
    %v579 = vunpack.c.l.b16 %v352
    %v580 = vunpack.c.h.b16 %v352
    %v581 = vunpack.c.l.b16 %v353
    %v582 = vunpack.c.h.b16 %v353
    %v583 = vunpack.c.l.b16 %v354
    %v584 = vunpack.c.h.b16 %v354
    %v585 = vunpack.c.l.b16 %v355
    %v586 = vunpack.c.h.b16 %v355
    %v587 = vunpack.c.l.b16 %v356
    %v588 = vunpack.c.h.b16 %v356
    %v589 = vunpack.c.l.b16 %v357
    %v590 = vunpack.c.h.b16 %v357
    %v591 = vunpack.c.l.b16 %v358
    %v592 = vunpack.c.h.b16 %v358
    %v593 = vunpack.c.l.b16 %v359
    %v594 = vunpack.c.h.b16 %v359
    %v595 = vunpack.c.l.b16 %v360
    %v596 = vunpack.c.h.b16 %v360
    %v597 = vunpack.c.l.b16 %v361
    %v598 = vunpack.c.h.b16 %v361
    %v599 = vunpack.c.l.b16 %v362
    %v600 = vunpack.c.h.b16 %v362
    %v601 = vunpack.c.l.b16 %v363
    %v602 = vunpack.c.h.b16 %v363
    %v603 = vunpack.c.l.b16 %v364
    %v604 = vunpack.c.h.b16 %v364
    %v605 = vunpack.c.l.b16 %v365
    %v606 = vunpack.c.h.b16 %v365
    %v607 = vunpack.c.l.b16 %v366
    %v608 = vunpack.c.h.b16 %v366
    %v609 = vunpack.c.l.b16 %v367
    %v610 = vunpack.c.h.b16 %v367
    %v611 = vunpack.c.l.b16 %v368
    %v612 = vunpack.c.h.b16 %v368
    %v613 = vunpack.c.l.b16 %v369
    %v614 = vunpack.c.h.b16 %v369
    %v615 = vunpack.c.l.b16 %v370
    %v616 = vunpack.c.h.b16 %v370
    %v617 = vunpack.c.l.b16 %v371
    %v618 = vunpack.c.h.b16 %v371
    %v619 = vunpack.c.l.b16 %v372
    %v620 = vunpack.c.h.b16 %v372
    %v621 = vunpack.c.l.b16 %v373
    %v622 = vunpack.c.h.b16 %v373
    %v623 = vunpack.c.l.b16 %v374
    %v624 = vunpack.c.h.b16 %v374
    %v625 = vunpack.c.l.b16 %v375
    %v626 = vunpack.c.h.b16 %v375
    %v627 = vunpack.c.l.b16 %v376
    %v628 = vunpack.c.h.b16 %v376
    %v629 = vunpack.c.l.b16 %v377
    %v630 = vunpack.c.h.b16 %v377
    %v631 = vunpack.c.l.b16 %v378
    %v632 = vunpack.c.h.b16 %v378
    %v633 = vpack.c.b16 %v509, %v505
    %v634 = vpack.c.b16 %v510, %v506
    %v635 = vpack.c.b16 %v511, %v507
    %v636 = vpack.c.b16 %v512, %v508
    %v637 = vpack.c.b16 %v517, %v513
    %v638 = vpack.c.b16 %v518, %v514
    %v639 = vpack.c.b16 %v519, %v515
    %v640 = vpack.c.b16 %v520, %v516
    %v641 = vpack.c.b16 %v525, %v521
    %v642 = vpack.c.b16 %v526, %v522
    %v643 = vpack.c.b16 %v527, %v523
    %v644 = vpack.c.b16 %v528, %v524
    %v645 = vpack.c.b16 %v533, %v529
    %v646 = vpack.c.b16 %v534, %v530
    %v647 = vpack.c.b16 %v535, %v531
    %v648 = vpack.c.b16 %v536, %v532
    %v649 = vpack.c.b16 %v541, %v537
    %v650 = vpack.c.b16 %v542, %v538
    %v651 = vpack.c.b16 %v543, %v539
    %v652 = vpack.c.b16 %v544, %v540
    %v653 = vpack.c.b16 %v549, %v545
    %v654 = vpack.c.b16 %v550, %v546
    %v655 = vpack.c.b16 %v551, %v547
    %v656 = vpack.c.b16 %v552, %v548
    %v657 = vpack.c.b16 %v557, %v553
    %v658 = vpack.c.b16 %v558, %v554
    %v659 = vpack.c.b16 %v559, %v555
    %v660 = vpack.c.b16 %v560, %v556
    %v661 = vpack.c.b16 %v565, %v561
    %v662 = vpack.c.b16 %v566, %v562
    %v663 = vpack.c.b16 %v567, %v563
    %v664 = vpack.c.b16 %v568, %v564
    %v665 = vpack.c.b16 %v573, %v569
    %v666 = vpack.c.b16 %v574, %v570
    %v667 = vpack.c.b16 %v575, %v571
    %v668 = vpack.c.b16 %v576, %v572
    %v669 = vpack.c.b16 %v581, %v577
    %v670 = vpack.c.b16 %v582, %v578
    %v671 = vpack.c.b16 %v583, %v579
    %v672 = vpack.c.b16 %v584, %v580
    %v673 = vpack.c.b16 %v589, %v585
    %v674 = vpack.c.b16 %v590, %v586
    %v675 = vpack.c.b16 %v591, %v587
    %v676 = vpack.c.b16 %v592, %v588
    %v677 = vpack.c.b16 %v597, %v593
    %v678 = vpack.c.b16 %v598, %v594
    %v679 = vpack.c.b16 %v599, %v595
    %v680 = vpack.c.b16 %v600, %v596
    %v681 = vpack.c.b16 %v605, %v601
    %v682 = vpack.c.b16 %v606, %v602
    %v683 = vpack.c.b16 %v607, %v603
    %v684 = vpack.c.b16 %v608, %v604
    %v685 = vpack.c.b16 %v613, %v609
    %v686 = vpack.c.b16 %v614, %v610
    %v687 = vpack.c.b16 %v615, %v611
    %v688 = vpack.c.b16 %v616, %v612
    %v689 = vpack.c.b16 %v621, %v617
    %v690 = vpack.c.b16 %v622, %v618
    %v691 = vpack.c.b16 %v623, %v619
    %v692 = vpack.c.b16 %v624, %v620
    %v693 = vpack.c.b16 %v629, %v625
    %v694 = vpack.c.b16 %v630, %v626
    %v695 = vpack.c.b16 %v631, %v627
    %v696 = vpack.c.b16 %v632, %v628
    %761 = vmatprep.subr.bf16.mxu0 %v662
    %762 = vmatpush1.bf16.msra.mxu0 %v661
    %763 = vmatprep.subr.bf16.mxu0 %v658
    %764 = vmatpush1.bf16.msra.mxu0 %v657
    %765 = vmatprep.subr.bf16.mxu0 %v654
    %766 = vmatpush1.bf16.msra.mxu0 %v653
    %767 = vmatprep.subr.bf16.mxu0 %v650
    %768 = vmatpush1.bf16.msra.mxu0 %v649
    %769 = vmatprep.subr.bf16.mxu0 %v646
    %770 = vmatpush1.bf16.msra.mxu0 %v645
    %771 = vmatprep.subr.bf16.mxu0 %v642
    %772 = vmatpush1.bf16.msra.mxu0 %v641
    %773 = vmatprep.subr.bf16.mxu0 %v638
    %774 = vmatpush1.bf16.msra.mxu0 %v637
    %775 = vmatprep.subr.bf16.mxu0 %v634
    %776 = vmatpush1.bf16.msra.mxu0 %v633
    %777 = vmatprep.subr.bf16.mxu0 %v694
    %778 = vmatpush2.bf16.msra.mxu0 %v693
    %779 = vmatprep.subr.bf16.mxu0 %v690
    %780 = vmatpush2.bf16.msra.mxu0 %v689
    %781 = vmatprep.subr.bf16.mxu0 %v686
    %782 = vmatpush2.bf16.msra.mxu0 %v685
    %783 = vmatprep.subr.bf16.mxu0 %v682
    %784 = vmatpush2.bf16.msra.mxu0 %v681
    %785 = vmatprep.subr.bf16.mxu0 %v678
    %786 = vmatpush2.bf16.msra.mxu0 %v677
    %787 = vmatprep.subr.bf16.mxu0 %v674
    %788 = vmatpush2.bf16.msra.mxu0 %v673
    %789 = vmatprep.subr.bf16.mxu0 %v670
    %790 = vmatpush2.bf16.msra.mxu0 %v669
    %791 = vmatprep.subr.bf16.mxu0 %v666
    %792 = vmatpush2.bf16.msra.mxu0 %v665
    %793 = vmatprep.mubr.bf16.mxu0 %v426
    %794 = vmatmul.mubr.bf16.gmra.mxu0 %v425
    %v795 = vpop.f32.mrf.mxu0
    %v796 = vadd.f32 %v384, %v795
    %v797 = vpop.f32.mrf.mxu0
    %v798 = vadd.f32 %v388, %v797
    %v799 = vpop.f32.mrf.mxu0
    %v800 = vadd.f32 %v384, %v799
    %v801 = vpop.f32.mrf.mxu0
    %v802 = vadd.f32 %v388, %v801
    %803 = vmatprep.mubr.bf16.mxu0 %v428
    %804 = vmatmul.mubr.bf16.gmra.mxu0 %v427
    %v805 = vpop.f32.mrf.mxu0
    %v806 = vadd.f32 %v384, %v805
    %v807 = vpop.f32.mrf.mxu0
    %v808 = vadd.f32 %v388, %v807
    %v809 = vpop.f32.mrf.mxu0
    %v810 = vadd.f32 %v384, %v809
    %v811 = vpop.f32.mrf.mxu0
    %v812 = vadd.f32 %v388, %v811
    %813 = vmatprep.mubr.bf16.mxu0 %v430
    %814 = vmatmul.mubr.bf16.gmra.mxu0 %v429
    %v815 = vpop.f32.mrf.mxu0
    %v816 = vadd.f32 %v384, %v815
    %v817 = vpop.f32.mrf.mxu0
    %v818 = vadd.f32 %v388, %v817
    %v819 = vpop.f32.mrf.mxu0
    %v820 = vadd.f32 %v384, %v819
    %v821 = vpop.f32.mrf.mxu0
    %v822 = vadd.f32 %v388, %v821
    %823 = vmatprep.mubr.bf16.mxu0 %v432
    %824 = vmatmul.mubr.bf16.gmra.mxu0 %v431
    %v825 = vpop.f32.mrf.mxu0
    %v826 = vadd.f32 %v384, %v825
    %v827 = vpop.f32.mrf.mxu0
    %v828 = vadd.f32 %v388, %v827
    %v829 = vpop.f32.mrf.mxu0
    %v830 = vadd.f32 %v384, %v829
    %v831 = vpop.f32.mrf.mxu0
    %v832 = vadd.f32 %v388, %v831
    %833 = vdwg.mxu0
    %834 = vmatprep.subr.bf16.mxu0 %v664
    %835 = vmatpush1.bf16.msra.mxu0 %v663
    %836 = vmatprep.subr.bf16.mxu0 %v660
    %837 = vmatpush1.bf16.msra.mxu0 %v659
    %838 = vmatprep.subr.bf16.mxu0 %v656
    %839 = vmatpush1.bf16.msra.mxu0 %v655
    %840 = vmatprep.subr.bf16.mxu0 %v652
    %841 = vmatpush1.bf16.msra.mxu0 %v651
    %842 = vmatprep.subr.bf16.mxu0 %v648
    %843 = vmatpush1.bf16.msra.mxu0 %v647
    %844 = vmatprep.subr.bf16.mxu0 %v644
    %845 = vmatpush1.bf16.msra.mxu0 %v643
    %846 = vmatprep.subr.bf16.mxu0 %v640
    %847 = vmatpush1.bf16.msra.mxu0 %v639
    %848 = vmatprep.subr.bf16.mxu0 %v636
    %849 = vmatpush1.bf16.msra.mxu0 %v635
    %850 = vmatprep.subr.bf16.mxu0 %v696
    %851 = vmatpush2.bf16.msra.mxu0 %v695
    %852 = vmatprep.subr.bf16.mxu0 %v692
    %853 = vmatpush2.bf16.msra.mxu0 %v691
    %854 = vmatprep.subr.bf16.mxu0 %v688
    %855 = vmatpush2.bf16.msra.mxu0 %v687
    %856 = vmatprep.subr.bf16.mxu0 %v684
    %857 = vmatpush2.bf16.msra.mxu0 %v683
    %858 = vmatprep.subr.bf16.mxu0 %v680
    %859 = vmatpush2.bf16.msra.mxu0 %v679
    %860 = vmatprep.subr.bf16.mxu0 %v676
    %861 = vmatpush2.bf16.msra.mxu0 %v675
    %862 = vmatprep.subr.bf16.mxu0 %v672
    %863 = vmatpush2.bf16.msra.mxu0 %v671
    %864 = vmatprep.subr.bf16.mxu0 %v668
    %865 = vmatpush2.bf16.msra.mxu0 %v667
    %866 = vmatprep.mubr.bf16.mxu0 %v426
    %867 = vmatmul.mubr.bf16.gmra.mxu0 %v425
    %v868 = vpop.f32.mrf.mxu0
    %v869 = vadd.f32 %v392, %v868
    %v870 = vpop.f32.mrf.mxu0
    %v871 = vadd.f32 %v396, %v870
    %v872 = vpop.f32.mrf.mxu0
    %v873 = vadd.f32 %v392, %v872
    %v874 = vpop.f32.mrf.mxu0
    %v875 = vadd.f32 %v396, %v874
    %876 = vmatprep.mubr.bf16.mxu0 %v428
    %877 = vmatmul.mubr.bf16.gmra.mxu0 %v427
    %v878 = vpop.f32.mrf.mxu0
    %v879 = vadd.f32 %v392, %v878
    %v880 = vpop.f32.mrf.mxu0
    %v881 = vadd.f32 %v396, %v880
    %v882 = vpop.f32.mrf.mxu0
    %v883 = vadd.f32 %v392, %v882
    %v884 = vpop.f32.mrf.mxu0
    %v885 = vadd.f32 %v396, %v884
    %886 = vmatprep.mubr.bf16.mxu0 %v430
    %887 = vmatmul.mubr.bf16.gmra.mxu0 %v429
    %v888 = vpop.f32.mrf.mxu0
    %v889 = vadd.f32 %v392, %v888
    %v890 = vpop.f32.mrf.mxu0
    %v891 = vadd.f32 %v396, %v890
    %v892 = vpop.f32.mrf.mxu0
    %v893 = vadd.f32 %v392, %v892
    %v894 = vpop.f32.mrf.mxu0
    %v895 = vadd.f32 %v396, %v894
    %896 = vmatprep.mubr.bf16.mxu0 %v432
    %897 = vmatmul.mubr.bf16.gmra.mxu0 %v431
    %v898 = vpop.f32.mrf.mxu0
    %v899 = vadd.f32 %v392, %v898
    %v900 = vpop.f32.mrf.mxu0
    %v901 = vadd.f32 %v396, %v900
    %v902 = vpop.f32.mrf.mxu0
    %v903 = vadd.f32 %v392, %v902
    %v904 = vpop.f32.mrf.mxu0
    %v905 = vadd.f32 %v396, %v904
    %906 = vdwg.mxu0
    %907 = vst [vmem:[#allocation3] sm:$0xff] %v796
    %908 = vst [vmem:[#allocation3 + $0x8] sm:$0xff] %v798
    %909 = vst [vmem:[#allocation3 + $0x10] sm:$0xff] %v869
    %910 = vst [vmem:[#allocation3 + $0x18] sm:$0xff] %v871
    %911 = vst [vmem:[#allocation3 + $0x20] sm:$0xff] %v800
    %912 = vst [vmem:[#allocation3 + $0x28] sm:$0xff] %v802
    %913 = vst [vmem:[#allocation3 + $0x30] sm:$0xff] %v873
    %914 = vst [vmem:[#allocation3 + $0x38] sm:$0xff] %v875
    %915 = vst [vmem:[#allocation3 + $0x40] sm:$0xff] %v806
    %916 = vst [vmem:[#allocation3 + $0x48] sm:$0xff] %v808
    %917 = vst [vmem:[#allocation3 + $0x50] sm:$0xff] %v879
    %918 = vst [vmem:[#allocation3 + $0x58] sm:$0xff] %v881
    %919 = vst [vmem:[#allocation3 + $0x60] sm:$0xff] %v810
    %920 = vst [vmem:[#allocation3 + $0x68] sm:$0xff] %v812
    %921 = vst [vmem:[#allocation3 + $0x70] sm:$0xff] %v883
    %922 = vst [vmem:[#allocation3 + $0x78] sm:$0xff] %v885
    %923 = vst [vmem:[#allocation3 + $0x80] sm:$0xff] %v816
    %924 = vst [vmem:[#allocation3 + $0x88] sm:$0xff] %v818
    %925 = vst [vmem:[#allocation3 + $0x90] sm:$0xff] %v889
    %926 = vst [vmem:[#allocation3 + $0x98] sm:$0xff] %v891
    %927 = vst [vmem:[#allocation3 + $0xa0] sm:$0xff] %v820
    %928 = vst [vmem:[#allocation3 + $0xa8] sm:$0xff] %v822
    %929 = vst [vmem:[#allocation3 + $0xb0] sm:$0xff] %v893
    %930 = vst [vmem:[#allocation3 + $0xb8] sm:$0xff] %v895
    %931 = vst [vmem:[#allocation3 + $0xc0] sm:$0xff] %v826
    %932 = vst [vmem:[#allocation3 + $0xc8] sm:$0xff] %v828
    %933 = vst [vmem:[#allocation3 + $0xd0] sm:$0xff] %v899
    %934 = vst [vmem:[#allocation3 + $0xd8] sm:$0xff] %v901
    %935 = vst [vmem:[#allocation3 + $0xe0] sm:$0xff] %v830
    %936 = vst [vmem:[#allocation3 + $0xe8] sm:$0xff] %v832
    %937 = vst [vmem:[#allocation3 + $0xf0] sm:$0xff] %v903
    %938 = vst [vmem:[#allocation3 + $0xf8] sm:$0xff] %v905
    %v939 = vld [vmem:[#allocation13] sm:$0xff]
    %v940 = vld [vmem:[#allocation17] sm:$0xff]
    %v941 = vld [vmem:[#allocation17 + $0x8] sm:$0xff]
    %v942 = vld [vmem:[#allocation17 + $0x10] sm:$0xff]
    %v943 = vld [vmem:[#allocation17 + $0x18] sm:$0xff]
    %v944 = vld [vmem:[#allocation17 + $0x20] sm:$0xff]
    %v945 = vld [vmem:[#allocation17 + $0x28] sm:$0xff]
    %v946 = vld [vmem:[#allocation17 + $0x30] sm:$0xff]
    %v947 = vld [vmem:[#allocation17 + $0x38] sm:$0xff]
    %v948 = vld [vmem:[#allocation17 + $0x40] sm:$0xff]
    %v949 = vld [vmem:[#allocation17 + $0x48] sm:$0xff]
    %v950 = vld [vmem:[#allocation17 + $0x50] sm:$0xff]
    %v951 = vld [vmem:[#allocation17 + $0x58] sm:$0xff]
    %v952 = vld [vmem:[#allocation17 + $0x60] sm:$0xff]
    %v953 = vld [vmem:[#allocation17 + $0x68] sm:$0xff]
    %v954 = vld [vmem:[#allocation17 + $0x70] sm:$0xff]
    %v955 = vld [vmem:[#allocation17 + $0x78] sm:$0xff]
    %v956 = vld [vmem:[#allocation17 + $0x80] sm:$0xff]
    %v957 = vld [vmem:[#allocation17 + $0x88] sm:$0xff]
    %v958 = vld [vmem:[#allocation17 + $0x90] sm:$0xff]
    %v959 = vld [vmem:[#allocation17 + $0x98] sm:$0xff]
    %v960 = vld [vmem:[#allocation17 + $0xa0] sm:$0xff]
    %v961 = vld [vmem:[#allocation17 + $0xa8] sm:$0xff]
    %v962 = vld [vmem:[#allocation17 + $0xb0] sm:$0xff]
    %v963 = vld [vmem:[#allocation17 + $0xb8] sm:$0xff]
    %v964 = vld [vmem:[#allocation17 + $0xc0] sm:$0xff]
    %v965 = vld [vmem:[#allocation17 + $0xc8] sm:$0xff]
    %v966 = vld [vmem:[#allocation17 + $0xd0] sm:$0xff]
    %v967 = vld [vmem:[#allocation17 + $0xd8] sm:$0xff]
    %v968 = vld [vmem:[#allocation17 + $0xe0] sm:$0xff]
    %v969 = vld [vmem:[#allocation17 + $0xe8] sm:$0xff]
    %v970 = vld [vmem:[#allocation17 + $0xf0] sm:$0xff]
    %v971 = vld [vmem:[#allocation17 + $0xf8] sm:$0xff]
    %v972 = vpack.c.bf16 %v939, %v939
    %v1005 = vunpack.c.l.b16 %v940
    %v1006 = vunpack.c.h.b16 %v940
    %v1007 = vunpack.c.l.b16 %v941
    %v1008 = vunpack.c.h.b16 %v941
    %v1009 = vunpack.c.l.b16 %v942
    %v1010 = vunpack.c.h.b16 %v942
    %v1011 = vunpack.c.l.b16 %v943
    %v1012 = vunpack.c.h.b16 %v943
    %v1013 = vunpack.c.l.b16 %v944
    %v1014 = vunpack.c.h.b16 %v944
    %v1015 = vunpack.c.l.b16 %v945
    %v1016 = vunpack.c.h.b16 %v945
    %v1017 = vunpack.c.l.b16 %v946
    %v1018 = vunpack.c.h.b16 %v946
    %v1019 = vunpack.c.l.b16 %v947
    %v1020 = vunpack.c.h.b16 %v947
    %v1021 = vunpack.c.l.b16 %v948
    %v1022 = vunpack.c.h.b16 %v948
    %v1023 = vunpack.c.l.b16 %v949
    %v1024 = vunpack.c.h.b16 %v949
    %v1025 = vunpack.c.l.b16 %v950
    %v1026 = vunpack.c.h.b16 %v950
    %v1027 = vunpack.c.l.b16 %v951
    %v1028 = vunpack.c.h.b16 %v951
    %v1029 = vunpack.c.l.b16 %v952
    %v1030 = vunpack.c.h.b16 %v952
    %v1031 = vunpack.c.l.b16 %v953
    %v1032 = vunpack.c.h.b16 %v953
    %v1033 = vunpack.c.l.b16 %v954
    %v1034 = vunpack.c.h.b16 %v954
    %v1035 = vunpack.c.l.b16 %v955
    %v1036 = vunpack.c.h.b16 %v955
    %v1037 = vunpack.c.l.b16 %v956
    %v1038 = vunpack.c.h.b16 %v956
    %v1039 = vunpack.c.l.b16 %v957
    %v1040 = vunpack.c.h.b16 %v957
    %v1041 = vunpack.c.l.b16 %v958
    %v1042 = vunpack.c.h.b16 %v958
    %v1043 = vunpack.c.l.b16 %v959
    %v1044 = vunpack.c.h.b16 %v959
    %v1045 = vunpack.c.l.b16 %v960
    %v1046 = vunpack.c.h.b16 %v960
    %v1047 = vunpack.c.l.b16 %v961
    %v1048 = vunpack.c.h.b16 %v961
    %v1049 = vunpack.c.l.b16 %v962
    %v1050 = vunpack.c.h.b16 %v962
    %v1051 = vunpack.c.l.b16 %v963
    %v1052 = vunpack.c.h.b16 %v963
    %v1053 = vunpack.c.l.b16 %v964
    %v1054 = vunpack.c.h.b16 %v964
    %v1055 = vunpack.c.l.b16 %v965
    %v1056 = vunpack.c.h.b16 %v965
    %v1057 = vunpack.c.l.b16 %v966
    %v1058 = vunpack.c.h.b16 %v966
    %v1059 = vunpack.c.l.b16 %v967
    %v1060 = vunpack.c.h.b16 %v967
    %v1061 = vunpack.c.l.b16 %v968
    %v1062 = vunpack.c.h.b16 %v968
    %v1063 = vunpack.c.l.b16 %v969
    %v1064 = vunpack.c.h.b16 %v969
    %v1065 = vunpack.c.l.b16 %v970
    %v1066 = vunpack.c.h.b16 %v970
    %v1067 = vunpack.c.l.b16 %v971
    %v1068 = vunpack.c.h.b16 %v971
    %v1069 = vpack.c.b16 %v1009, %v1005
    %v1070 = vpack.c.b16 %v1010, %v1006
    %v1071 = vpack.c.b16 %v1011, %v1007
    %v1072 = vpack.c.b16 %v1012, %v1008
    %v1073 = vpack.c.b16 %v1017, %v1013
    %v1074 = vpack.c.b16 %v1018, %v1014
    %v1075 = vpack.c.b16 %v1019, %v1015
    %v1076 = vpack.c.b16 %v1020, %v1016
    %v1077 = vpack.c.b16 %v1025, %v1021
    %v1078 = vpack.c.b16 %v1026, %v1022
    %v1079 = vpack.c.b16 %v1027, %v1023
    %v1080 = vpack.c.b16 %v1028, %v1024
    %v1081 = vpack.c.b16 %v1033, %v1029
    %v1082 = vpack.c.b16 %v1034, %v1030
    %v1083 = vpack.c.b16 %v1035, %v1031
    %v1084 = vpack.c.b16 %v1036, %v1032
    %v1085 = vpack.c.b16 %v1041, %v1037
    %v1086 = vpack.c.b16 %v1042, %v1038
    %v1087 = vpack.c.b16 %v1043, %v1039
    %v1088 = vpack.c.b16 %v1044, %v1040
    %v1089 = vpack.c.b16 %v1049, %v1045
    %v1090 = vpack.c.b16 %v1050, %v1046
    %v1091 = vpack.c.b16 %v1051, %v1047
    %v1092 = vpack.c.b16 %v1052, %v1048
    %v1093 = vpack.c.b16 %v1057, %v1053
    %v1094 = vpack.c.b16 %v1058, %v1054
    %v1095 = vpack.c.b16 %v1059, %v1055
    %v1096 = vpack.c.b16 %v1060, %v1056
    %v1097 = vpack.c.b16 %v1065, %v1061
    %v1098 = vpack.c.b16 %v1066, %v1062
    %v1099 = vpack.c.b16 %v1067, %v1063
    %v1100 = vpack.c.b16 %v1068, %v1064
    %1133 = vmatprep.subr.bf16.mxu0 %v1098
    %1134 = vmatpush1.bf16.msra.mxu0 %v1097
    %1135 = vmatprep.subr.bf16.mxu0 %v1094
    %1136 = vmatpush1.bf16.msra.mxu0 %v1093
    %1137 = vmatprep.subr.bf16.mxu0 %v1090
    %1138 = vmatpush1.bf16.msra.mxu0 %v1089
    %1139 = vmatprep.subr.bf16.mxu0 %v1086
    %1140 = vmatpush1.bf16.msra.mxu0 %v1085
    %1141 = vmatprep.subr.bf16.mxu0 %v1082
    %1142 = vmatpush1.bf16.msra.mxu0 %v1081
    %1143 = vmatprep.subr.bf16.mxu0 %v1078
    %1144 = vmatpush1.bf16.msra.mxu0 %v1077
    %1145 = vmatprep.subr.bf16.mxu0 %v1074
    %1146 = vmatpush1.bf16.msra.mxu0 %v1073
    %1147 = vmatprep.subr.bf16.mxu0 %v1070
    %1148 = vmatpush1.bf16.msra.mxu0 %v1069
    %1149 = vmatprep.subr.bf16.mxu0 0
    %1150 = vmatpush2.bf16.msra.mxu0 0
    %1151 = vmatprep.subr.bf16.mxu0 0
    %1152 = vmatpush2.bf16.msra.mxu0 0
    %1153 = vmatprep.subr.bf16.mxu0 0
    %1154 = vmatpush2.bf16.msra.mxu0 0
    %1155 = vmatprep.subr.bf16.mxu0 0
    %1156 = vmatpush2.bf16.msra.mxu0 0
    %1157 = vmatprep.subr.bf16.mxu0 0
    %1158 = vmatpush2.bf16.msra.mxu0 0
    %1159 = vmatprep.subr.bf16.mxu0 0
    %1160 = vmatpush2.bf16.msra.mxu0 0
    %1161 = vmatprep.subr.bf16.mxu0 0
    %1162 = vmatpush2.bf16.msra.mxu0 0
    %1163 = vmatprep.subr.bf16.mxu0 0
    %1164 = vmatpush2.bf16.msra.mxu0 0
    %1165 = vmatprep.mubr.bf16.mxu0 0
    %1166 = vmatmul.mubr.bf16.gmra.mxu0 %v972
    %v1167 = vpop.f32.mrf.mxu0
    %v1168 = vadd.f32 0.0, %v1167
    %v1169 = vpop.f32.mrf.mxu0
    %v1170 = vadd.f32 0.0, %v1169
    %v1171 = vpop.f32.mrf.mxu0
    %v1172 = vpop.f32.mrf.mxu0
    %1173 = vdwg.mxu0
    %1174 = vmatprep.subr.bf16.mxu0 %v1100
    %1175 = vmatpush1.bf16.msra.mxu0 %v1099
    %1176 = vmatprep.subr.bf16.mxu0 %v1096
    %1177 = vmatpush1.bf16.msra.mxu0 %v1095
    %1178 = vmatprep.subr.bf16.mxu0 %v1092
    %1179 = vmatpush1.bf16.msra.mxu0 %v1091
    %1180 = vmatprep.subr.bf16.mxu0 %v1088
    %1181 = vmatpush1.bf16.msra.mxu0 %v1087
    %1182 = vmatprep.subr.bf16.mxu0 %v1084
    %1183 = vmatpush1.bf16.msra.mxu0 %v1083
    %1184 = vmatprep.subr.bf16.mxu0 %v1080
    %1185 = vmatpush1.bf16.msra.mxu0 %v1079
    %1186 = vmatprep.subr.bf16.mxu0 %v1076
    %1187 = vmatpush1.bf16.msra.mxu0 %v1075
    %1188 = vmatprep.subr.bf16.mxu0 %v1072
    %1189 = vmatpush1.bf16.msra.mxu0 %v1071
    %1190 = vmatprep.subr.bf16.mxu0 0
    %1191 = vmatpush2.bf16.msra.mxu0 0
    %1192 = vmatprep.subr.bf16.mxu0 0
    %1193 = vmatpush2.bf16.msra.mxu0 0
    %1194 = vmatprep.subr.bf16.mxu0 0
    %1195 = vmatpush2.bf16.msra.mxu0 0
    %1196 = vmatprep.subr.bf16.mxu0 0
    %1197 = vmatpush2.bf16.msra.mxu0 0
    %1198 = vmatprep.subr.bf16.mxu0 0
    %1199 = vmatpush2.bf16.msra.mxu0 0
    %1200 = vmatprep.subr.bf16.mxu0 0
    %1201 = vmatpush2.bf16.msra.mxu0 0
    %1202 = vmatprep.subr.bf16.mxu0 0
    %1203 = vmatpush2.bf16.msra.mxu0 0
    %1204 = vmatprep.subr.bf16.mxu0 0
    %1205 = vmatpush2.bf16.msra.mxu0 0
    %1206 = vmatprep.mubr.bf16.mxu0 0
    %1207 = vmatmul.mubr.bf16.gmra.mxu0 %v972
    %v1208 = vpop.f32.mrf.mxu0
    %v1209 = vadd.f32 0.0, %v1208
    %v1210 = vpop.f32.mrf.mxu0
    %v1211 = vadd.f32 0.0, %v1210
    %v1212 = vpop.f32.mrf.mxu0
    %v1213 = vpop.f32.mrf.mxu0
    %1214 = vdwg.mxu0
    %s1215 = scalar_lea.vmem [#allocation13], 8
    %v1216 = vld [vmem:[%s1215] sm:$0xff]
    %v1217 = vld [vmem:[#allocation20] sm:$0xff]
    %v1218 = vld [vmem:[#allocation20 + $0x8] sm:$0xff]
    %v1219 = vld [vmem:[#allocation20 + $0x10] sm:$0xff]
    %v1220 = vld [vmem:[#allocation20 + $0x18] sm:$0xff]
    %v1221 = vld [vmem:[#allocation20 + $0x20] sm:$0xff]
    %v1222 = vld [vmem:[#allocation20 + $0x28] sm:$0xff]
    %v1223 = vld [vmem:[#allocation20 + $0x30] sm:$0xff]
    %v1224 = vld [vmem:[#allocation20 + $0x38] sm:$0xff]
    %v1225 = vld [vmem:[#allocation20 + $0x40] sm:$0xff]
    %v1226 = vld [vmem:[#allocation20 + $0x48] sm:$0xff]
    %v1227 = vld [vmem:[#allocation20 + $0x50] sm:$0xff]
    %v1228 = vld [vmem:[#allocation20 + $0x58] sm:$0xff]
    %v1229 = vld [vmem:[#allocation20 + $0x60] sm:$0xff]
    %v1230 = vld [vmem:[#allocation20 + $0x68] sm:$0xff]
    %v1231 = vld [vmem:[#allocation20 + $0x70] sm:$0xff]
    %v1232 = vld [vmem:[#allocation20 + $0x78] sm:$0xff]
    %v1233 = vld [vmem:[#allocation20 + $0x80] sm:$0xff]
    %v1234 = vld [vmem:[#allocation20 + $0x88] sm:$0xff]
    %v1235 = vld [vmem:[#allocation20 + $0x90] sm:$0xff]
    %v1236 = vld [vmem:[#allocation20 + $0x98] sm:$0xff]
    %v1237 = vld [vmem:[#allocation20 + $0xa0] sm:$0xff]
    %v1238 = vld [vmem:[#allocation20 + $0xa8] sm:$0xff]
    %v1239 = vld [vmem:[#allocation20 + $0xb0] sm:$0xff]
    %v1240 = vld [vmem:[#allocation20 + $0xb8] sm:$0xff]
    %v1241 = vld [vmem:[#allocation20 + $0xc0] sm:$0xff]
    %v1242 = vld [vmem:[#allocation20 + $0xc8] sm:$0xff]
    %v1243 = vld [vmem:[#allocation20 + $0xd0] sm:$0xff]
    %v1244 = vld [vmem:[#allocation20 + $0xd8] sm:$0xff]
    %v1245 = vld [vmem:[#allocation20 + $0xe0] sm:$0xff]
    %v1246 = vld [vmem:[#allocation20 + $0xe8] sm:$0xff]
    %v1247 = vld [vmem:[#allocation20 + $0xf0] sm:$0xff]
    %v1248 = vld [vmem:[#allocation20 + $0xf8] sm:$0xff]
    %v1249 = vpack.c.bf16 %v1216, %v1216
    %v1250 = vld [vmem:[%s9] sm:$0xf]
    %v1252 = vlaneseq
    %v1253 = vshrl.u32 %v1252, 7
    %v1254 = vsub.s32 0, %v1253
    %v1255 = vrot.slane %v1250, %v1254
    %v1256 = vlaneseq
    %v1257 = vshrl.u32 %v1256, 7
    %v1258 = vsub.s32 1, %v1257
    %v1259 = vrot.slane %v1250, %v1258
    %v1260 = vlaneseq
    %v1261 = vshrl.u32 %v1260, 7
    %v1262 = vsub.s32 2, %v1261
    %v1263 = vrot.slane %v1250, %v1262
    %v1264 = vlaneseq
    %v1265 = vshrl.u32 %v1264, 7
    %v1266 = vsub.s32 3, %v1265
    %v1267 = vrot.slane %v1250, %v1266
    %v1304 = vunpack.c.l.b16 %v1217
    %v1305 = vunpack.c.h.b16 %v1217
    %v1306 = vunpack.c.l.b16 %v1218
    %v1307 = vunpack.c.h.b16 %v1218
    %v1308 = vunpack.c.l.b16 %v1219
    %v1309 = vunpack.c.h.b16 %v1219
    %v1310 = vunpack.c.l.b16 %v1220
    %v1311 = vunpack.c.h.b16 %v1220
    %v1312 = vunpack.c.l.b16 %v1221
    %v1313 = vunpack.c.h.b16 %v1221
    %v1314 = vunpack.c.l.b16 %v1222
    %v1315 = vunpack.c.h.b16 %v1222
    %v1316 = vunpack.c.l.b16 %v1223
    %v1317 = vunpack.c.h.b16 %v1223
    %v1318 = vunpack.c.l.b16 %v1224
    %v1319 = vunpack.c.h.b16 %v1224
    %v1320 = vunpack.c.l.b16 %v1225
    %v1321 = vunpack.c.h.b16 %v1225
    %v1322 = vunpack.c.l.b16 %v1226
    %v1323 = vunpack.c.h.b16 %v1226
    %v1324 = vunpack.c.l.b16 %v1227
    %v1325 = vunpack.c.h.b16 %v1227
    %v1326 = vunpack.c.l.b16 %v1228
    %v1327 = vunpack.c.h.b16 %v1228
    %v1328 = vunpack.c.l.b16 %v1229
    %v1329 = vunpack.c.h.b16 %v1229
    %v1330 = vunpack.c.l.b16 %v1230
    %v1331 = vunpack.c.h.b16 %v1230
    %v1332 = vunpack.c.l.b16 %v1231
    %v1333 = vunpack.c.h.b16 %v1231
    %v1334 = vunpack.c.l.b16 %v1232
    %v1335 = vunpack.c.h.b16 %v1232
    %v1336 = vunpack.c.l.b16 %v1233
    %v1337 = vunpack.c.h.b16 %v1233
    %v1338 = vunpack.c.l.b16 %v1234
    %v1339 = vunpack.c.h.b16 %v1234
    %v1340 = vunpack.c.l.b16 %v1235
    %v1341 = vunpack.c.h.b16 %v1235
    %v1342 = vunpack.c.l.b16 %v1236
    %v1343 = vunpack.c.h.b16 %v1236
    %v1344 = vunpack.c.l.b16 %v1237
    %v1345 = vunpack.c.h.b16 %v1237
    %v1346 = vunpack.c.l.b16 %v1238
    %v1347 = vunpack.c.h.b16 %v1238
    %v1348 = vunpack.c.l.b16 %v1239
    %v1349 = vunpack.c.h.b16 %v1239
    %v1350 = vunpack.c.l.b16 %v1240
    %v1351 = vunpack.c.h.b16 %v1240
    %v1352 = vunpack.c.l.b16 %v1241
    %v1353 = vunpack.c.h.b16 %v1241
    %v1354 = vunpack.c.l.b16 %v1242
    %v1355 = vunpack.c.h.b16 %v1242
    %v1356 = vunpack.c.l.b16 %v1243
    %v1357 = vunpack.c.h.b16 %v1243
    %v1358 = vunpack.c.l.b16 %v1244
    %v1359 = vunpack.c.h.b16 %v1244
    %v1360 = vunpack.c.l.b16 %v1245
    %v1361 = vunpack.c.h.b16 %v1245
    %v1362 = vunpack.c.l.b16 %v1246
    %v1363 = vunpack.c.h.b16 %v1246
    %v1364 = vunpack.c.l.b16 %v1247
    %v1365 = vunpack.c.h.b16 %v1247
    %v1366 = vunpack.c.l.b16 %v1248
    %v1367 = vunpack.c.h.b16 %v1248
    %v1368 = vpack.c.b16 %v1308, %v1304
    %v1369 = vpack.c.b16 %v1309, %v1305
    %v1370 = vpack.c.b16 %v1310, %v1306
    %v1371 = vpack.c.b16 %v1311, %v1307
    %v1372 = vpack.c.b16 %v1316, %v1312
    %v1373 = vpack.c.b16 %v1317, %v1313
    %v1374 = vpack.c.b16 %v1318, %v1314
    %v1375 = vpack.c.b16 %v1319, %v1315
    %v1376 = vpack.c.b16 %v1324, %v1320
    %v1377 = vpack.c.b16 %v1325, %v1321
    %v1378 = vpack.c.b16 %v1326, %v1322
    %v1379 = vpack.c.b16 %v1327, %v1323
    %v1380 = vpack.c.b16 %v1332, %v1328
    %v1381 = vpack.c.b16 %v1333, %v1329
    %v1382 = vpack.c.b16 %v1334, %v1330
    %v1383 = vpack.c.b16 %v1335, %v1331
    %v1384 = vpack.c.b16 %v1340, %v1336
    %v1385 = vpack.c.b16 %v1341, %v1337
    %v1386 = vpack.c.b16 %v1342, %v1338
    %v1387 = vpack.c.b16 %v1343, %v1339
    %v1388 = vpack.c.b16 %v1348, %v1344
    %v1389 = vpack.c.b16 %v1349, %v1345
    %v1390 = vpack.c.b16 %v1350, %v1346
    %v1391 = vpack.c.b16 %v1351, %v1347
    %v1392 = vpack.c.b16 %v1356, %v1352
    %v1393 = vpack.c.b16 %v1357, %v1353
    %v1394 = vpack.c.b16 %v1358, %v1354
    %v1395 = vpack.c.b16 %v1359, %v1355
    %v1396 = vpack.c.b16 %v1364, %v1360
    %v1397 = vpack.c.b16 %v1365, %v1361
    %v1398 = vpack.c.b16 %v1366, %v1362
    %v1399 = vpack.c.b16 %v1367, %v1363
    %1432 = vmatprep.subr.bf16.mxu0 %v1397
    %1433 = vmatpush1.bf16.msra.mxu0 %v1396
    %1434 = vmatprep.subr.bf16.mxu0 %v1393
    %1435 = vmatpush1.bf16.msra.mxu0 %v1392
    %1436 = vmatprep.subr.bf16.mxu0 %v1389
    %1437 = vmatpush1.bf16.msra.mxu0 %v1388
    %1438 = vmatprep.subr.bf16.mxu0 %v1385
    %1439 = vmatpush1.bf16.msra.mxu0 %v1384
    %1440 = vmatprep.subr.bf16.mxu0 %v1381
    %1441 = vmatpush1.bf16.msra.mxu0 %v1380
    %1442 = vmatprep.subr.bf16.mxu0 %v1377
    %1443 = vmatpush1.bf16.msra.mxu0 %v1376
    %1444 = vmatprep.subr.bf16.mxu0 %v1373
    %1445 = vmatpush1.bf16.msra.mxu0 %v1372
    %1446 = vmatprep.subr.bf16.mxu0 %v1369
    %1447 = vmatpush1.bf16.msra.mxu0 %v1368
    %1448 = vmatprep.subr.bf16.mxu0 0
    %1449 = vmatpush2.bf16.msra.mxu0 0
    %1450 = vmatprep.subr.bf16.mxu0 0
    %1451 = vmatpush2.bf16.msra.mxu0 0
    %1452 = vmatprep.subr.bf16.mxu0 0
    %1453 = vmatpush2.bf16.msra.mxu0 0
    %1454 = vmatprep.subr.bf16.mxu0 0
    %1455 = vmatpush2.bf16.msra.mxu0 0
    %1456 = vmatprep.subr.bf16.mxu0 0
    %1457 = vmatpush2.bf16.msra.mxu0 0
    %1458 = vmatprep.subr.bf16.mxu0 0
    %1459 = vmatpush2.bf16.msra.mxu0 0
    %1460 = vmatprep.subr.bf16.mxu0 0
    %1461 = vmatpush2.bf16.msra.mxu0 0
    %1462 = vmatprep.subr.bf16.mxu0 0
    %1463 = vmatpush2.bf16.msra.mxu0 0
    %1464 = vmatprep.mubr.bf16.mxu0 0
    %1465 = vmatmul.mubr.bf16.gmra.mxu0 %v1249
    %v1466 = vpop.f32.mrf.mxu0
    %v1467 = vadd.f32 %v1255, %v1466
    %v1468 = vpop.f32.mrf.mxu0
    %v1469 = vadd.f32 %v1259, %v1468
    %v1470 = vpop.f32.mrf.mxu0
    %v1471 = vpop.f32.mrf.mxu0
    %1472 = vdwg.mxu0
    %1473 = vmatprep.subr.bf16.mxu0 %v1399
    %1474 = vmatpush1.bf16.msra.mxu0 %v1398
    %1475 = vmatprep.subr.bf16.mxu0 %v1395
    %1476 = vmatpush1.bf16.msra.mxu0 %v1394
    %1477 = vmatprep.subr.bf16.mxu0 %v1391
    %1478 = vmatpush1.bf16.msra.mxu0 %v1390
    %1479 = vmatprep.subr.bf16.mxu0 %v1387
    %1480 = vmatpush1.bf16.msra.mxu0 %v1386
    %1481 = vmatprep.subr.bf16.mxu0 %v1383
    %1482 = vmatpush1.bf16.msra.mxu0 %v1382
    %1483 = vmatprep.subr.bf16.mxu0 %v1379
    %1484 = vmatpush1.bf16.msra.mxu0 %v1378
    %1485 = vmatprep.subr.bf16.mxu0 %v1375
    %1486 = vmatpush1.bf16.msra.mxu0 %v1374
    %1487 = vmatprep.subr.bf16.mxu0 %v1371
    %1488 = vmatpush1.bf16.msra.mxu0 %v1370
    %1489 = vmatprep.subr.bf16.mxu0 0
    %1490 = vmatpush2.bf16.msra.mxu0 0
    %1491 = vmatprep.subr.bf16.mxu0 0
    %1492 = vmatpush2.bf16.msra.mxu0 0
    %1493 = vmatprep.subr.bf16.mxu0 0
    %1494 = vmatpush2.bf16.msra.mxu0 0
    %1495 = vmatprep.subr.bf16.mxu0 0
    %1496 = vmatpush2.bf16.msra.mxu0 0
    %1497 = vmatprep.subr.bf16.mxu0 0
    %1498 = vmatpush2.bf16.msra.mxu0 0
    %1499 = vmatprep.subr.bf16.mxu0 0
    %1500 = vmatpush2.bf16.msra.mxu0 0
    %1501 = vmatprep.subr.bf16.mxu0 0
    %1502 = vmatpush2.bf16.msra.mxu0 0
    %1503 = vmatprep.subr.bf16.mxu0 0
    %1504 = vmatpush2.bf16.msra.mxu0 0
    %1505 = vmatprep.mubr.bf16.mxu0 0
    %1506 = vmatmul.mubr.bf16.gmra.mxu0 %v1249
    %v1507 = vpop.f32.mrf.mxu0
    %v1508 = vadd.f32 %v1263, %v1507
    %v1509 = vpop.f32.mrf.mxu0
    %v1510 = vadd.f32 %v1267, %v1509
    %v1511 = vpop.f32.mrf.mxu0
    %v1512 = vpop.f32.mrf.mxu0
    %1513 = vdwg.mxu0
    %v1514 = vld [vmem:[#allocation3] sm:$0xff]
    %v1515 = vld [vmem:[#allocation3 + $0x8] sm:$0xff]
    %v1516 = vld [vmem:[#allocation3 + $0x10] sm:$0xff]
    %v1517 = vld [vmem:[#allocation3 + $0x18] sm:$0xff]
    %v1518 = vadd.f32 %v1514, %v1168
    %v1519 = vadd.f32 %v1515, %v1170
    %v1520 = vadd.f32 %v1516, %v1209
    %v1521 = vadd.f32 %v1517, %v1211
    %v1522 = vld [vmem:[#allocation14] sm:$0xff]
    %v1523 = vxor.u32 %v1518, 2147483648
    %v1524 = vmul.f32 %v1523, 1.442695
    %v1525 = vpow.pop %v1524
    %v1526 = vadd.f32 %v1525, 1.0
    %v1527 = vrcp.pop %v1526
    %v1528 = vmul.f32 1.0, %v1527
    %v1529 = vxor.u32 %v1519, 2147483648
    %v1530 = vmul.f32 %v1529, 1.442695
    %v1531 = vpow.pop %v1530
    %v1532 = vadd.f32 %v1531, 1.0
    %v1533 = vrcp.pop %v1532
    %v1534 = vmul.f32 1.0, %v1533
    %v1535 = vtanh.pop %v1520
    %v1536 = vxor.u32 %v1521, 2147483648
    %v1537 = vmul.f32 %v1536, 1.442695
    %v1538 = vpow.pop %v1537
    %v1539 = vadd.f32 %v1538, 1.0
    %v1540 = vrcp.pop %v1539
    %v1541 = vmul.f32 1.0, %v1540
    %v1542 = vmul.f32 %v1534, %v1522
    %v1543 = vmul.f32 %v1528, %v1535
    %v1544 = vadd.f32 %v1542, %v1543
    %v1545 = vtanh.pop %v1544
    %v1546 = vmul.f32 %v1541, %v1545
    %v1547 = vld [vmem:[#allocation19] sm:$0xff]
    %v1548 = vld [vmem:[#allocation19 + $0x8] sm:$0xff]
    %v1549 = vld [vmem:[#allocation19 + $0x10] sm:$0xff]
    %v1550 = vld [vmem:[#allocation19 + $0x18] sm:$0xff]
    %v1551 = vld [vmem:[#allocation19 + $0x20] sm:$0xff]
    %v1552 = vld [vmem:[#allocation19 + $0x28] sm:$0xff]
    %v1553 = vld [vmem:[#allocation19 + $0x30] sm:$0xff]
    %v1554 = vld [vmem:[#allocation19 + $0x38] sm:$0xff]
    %v1555 = vld [vmem:[#allocation19 + $0x40] sm:$0xff]
    %v1556 = vld [vmem:[#allocation19 + $0x48] sm:$0xff]
    %v1557 = vld [vmem:[#allocation19 + $0x50] sm:$0xff]
    %v1558 = vld [vmem:[#allocation19 + $0x58] sm:$0xff]
    %v1559 = vld [vmem:[#allocation19 + $0x60] sm:$0xff]
    %v1560 = vld [vmem:[#allocation19 + $0x68] sm:$0xff]
    %v1561 = vld [vmem:[#allocation19 + $0x70] sm:$0xff]
    %v1562 = vld [vmem:[#allocation19 + $0x78] sm:$0xff]
    %v1563 = vld [vmem:[#allocation19 + $0x80] sm:$0xff]
    %v1564 = vld [vmem:[#allocation19 + $0x88] sm:$0xff]
    %v1565 = vld [vmem:[#allocation19 + $0x90] sm:$0xff]
    %v1566 = vld [vmem:[#allocation19 + $0x98] sm:$0xff]
    %v1567 = vld [vmem:[#allocation19 + $0xa0] sm:$0xff]
    %v1568 = vld [vmem:[#allocation19 + $0xa8] sm:$0xff]
    %v1569 = vld [vmem:[#allocation19 + $0xb0] sm:$0xff]
    %v1570 = vld [vmem:[#allocation19 + $0xb8] sm:$0xff]
    %v1571 = vld [vmem:[#allocation19 + $0xc0] sm:$0xff]
    %v1572 = vld [vmem:[#allocation19 + $0xc8] sm:$0xff]
    %v1573 = vld [vmem:[#allocation19 + $0xd0] sm:$0xff]
    %v1574 = vld [vmem:[#allocation19 + $0xd8] sm:$0xff]
    %v1575 = vld [vmem:[#allocation19 + $0xe0] sm:$0xff]
    %v1576 = vld [vmem:[#allocation19 + $0xe8] sm:$0xff]
    %v1577 = vld [vmem:[#allocation19 + $0xf0] sm:$0xff]
    %v1578 = vld [vmem:[#allocation19 + $0xf8] sm:$0xff]
    %v1579 = vpack.c.bf16 %v1546, %v1546
    %v1612 = vunpack.c.l.b16 %v1547
    %v1613 = vunpack.c.h.b16 %v1547
    %v1614 = vunpack.c.l.b16 %v1548
    %v1615 = vunpack.c.h.b16 %v1548
    %v1616 = vunpack.c.l.b16 %v1549
    %v1617 = vunpack.c.h.b16 %v1549
    %v1618 = vunpack.c.l.b16 %v1550
    %v1619 = vunpack.c.h.b16 %v1550
    %v1620 = vunpack.c.l.b16 %v1551
    %v1621 = vunpack.c.h.b16 %v1551
    %v1622 = vunpack.c.l.b16 %v1552
    %v1623 = vunpack.c.h.b16 %v1552
    %v1624 = vunpack.c.l.b16 %v1553
    %v1625 = vunpack.c.h.b16 %v1553
    %v1626 = vunpack.c.l.b16 %v1554
    %v1627 = vunpack.c.h.b16 %v1554
    %v1628 = vunpack.c.l.b16 %v1555
    %v1629 = vunpack.c.h.b16 %v1555
    %v1630 = vunpack.c.l.b16 %v1556
    %v1631 = vunpack.c.h.b16 %v1556
    %v1632 = vunpack.c.l.b16 %v1557
    %v1633 = vunpack.c.h.b16 %v1557
    %v1634 = vunpack.c.l.b16 %v1558
    %v1635 = vunpack.c.h.b16 %v1558
    %v1636 = vunpack.c.l.b16 %v1559
    %v1637 = vunpack.c.h.b16 %v1559
    %v1638 = vunpack.c.l.b16 %v1560
    %v1639 = vunpack.c.h.b16 %v1560
    %v1640 = vunpack.c.l.b16 %v1561
    %v1641 = vunpack.c.h.b16 %v1561
    %v1642 = vunpack.c.l.b16 %v1562
    %v1643 = vunpack.c.h.b16 %v1562
    %v1644 = vunpack.c.l.b16 %v1563
    %v1645 = vunpack.c.h.b16 %v1563
    %v1646 = vunpack.c.l.b16 %v1564
    %v1647 = vunpack.c.h.b16 %v1564
    %v1648 = vunpack.c.l.b16 %v1565
    %v1649 = vunpack.c.h.b16 %v1565
    %v1650 = vunpack.c.l.b16 %v1566
    %v1651 = vunpack.c.h.b16 %v1566
    %v1652 = vunpack.c.l.b16 %v1567
    %v1653 = vunpack.c.h.b16 %v1567
    %v1654 = vunpack.c.l.b16 %v1568
    %v1655 = vunpack.c.h.b16 %v1568
    %v1656 = vunpack.c.l.b16 %v1569
    %v1657 = vunpack.c.h.b16 %v1569
    %v1658 = vunpack.c.l.b16 %v1570
    %v1659 = vunpack.c.h.b16 %v1570
    %v1660 = vunpack.c.l.b16 %v1571
    %v1661 = vunpack.c.h.b16 %v1571
    %v1662 = vunpack.c.l.b16 %v1572
    %v1663 = vunpack.c.h.b16 %v1572
    %v1664 = vunpack.c.l.b16 %v1573
    %v1665 = vunpack.c.h.b16 %v1573
    %v1666 = vunpack.c.l.b16 %v1574
    %v1667 = vunpack.c.h.b16 %v1574
    %v1668 = vunpack.c.l.b16 %v1575
    %v1669 = vunpack.c.h.b16 %v1575
    %v1670 = vunpack.c.l.b16 %v1576
    %v1671 = vunpack.c.h.b16 %v1576
    %v1672 = vunpack.c.l.b16 %v1577
    %v1673 = vunpack.c.h.b16 %v1577
    %v1674 = vunpack.c.l.b16 %v1578
    %v1675 = vunpack.c.h.b16 %v1578
    %v1676 = vpack.c.b16 %v1616, %v1612
    %v1677 = vpack.c.b16 %v1617, %v1613
    %v1678 = vpack.c.b16 %v1618, %v1614
    %v1679 = vpack.c.b16 %v1619, %v1615
    %v1680 = vpack.c.b16 %v1624, %v1620
    %v1681 = vpack.c.b16 %v1625, %v1621
    %v1682 = vpack.c.b16 %v1626, %v1622
    %v1683 = vpack.c.b16 %v1627, %v1623
    %v1684 = vpack.c.b16 %v1632, %v1628
    %v1685 = vpack.c.b16 %v1633, %v1629
    %v1686 = vpack.c.b16 %v1634, %v1630
    %v1687 = vpack.c.b16 %v1635, %v1631
    %v1688 = vpack.c.b16 %v1640, %v1636
    %v1689 = vpack.c.b16 %v1641, %v1637
    %v1690 = vpack.c.b16 %v1642, %v1638
    %v1691 = vpack.c.b16 %v1643, %v1639
    %v1692 = vpack.c.b16 %v1648, %v1644
    %v1693 = vpack.c.b16 %v1649, %v1645
    %v1694 = vpack.c.b16 %v1650, %v1646
    %v1695 = vpack.c.b16 %v1651, %v1647
    %v1696 = vpack.c.b16 %v1656, %v1652
    %v1697 = vpack.c.b16 %v1657, %v1653
    %v1698 = vpack.c.b16 %v1658, %v1654
    %v1699 = vpack.c.b16 %v1659, %v1655
    %v1700 = vpack.c.b16 %v1664, %v1660
    %v1701 = vpack.c.b16 %v1665, %v1661
    %v1702 = vpack.c.b16 %v1666, %v1662
    %v1703 = vpack.c.b16 %v1667, %v1663
    %v1704 = vpack.c.b16 %v1672, %v1668
    %v1705 = vpack.c.b16 %v1673, %v1669
    %v1706 = vpack.c.b16 %v1674, %v1670
    %v1707 = vpack.c.b16 %v1675, %v1671
    %1740 = vmatprep.subr.bf16.mxu0 %v1705
    %1741 = vmatpush1.bf16.msra.mxu0 %v1704
    %1742 = vmatprep.subr.bf16.mxu0 %v1701
    %1743 = vmatpush1.bf16.msra.mxu0 %v1700
    %1744 = vmatprep.subr.bf16.mxu0 %v1697
    %1745 = vmatpush1.bf16.msra.mxu0 %v1696
    %1746 = vmatprep.subr.bf16.mxu0 %v1693
    %1747 = vmatpush1.bf16.msra.mxu0 %v1692
    %1748 = vmatprep.subr.bf16.mxu0 %v1689
    %1749 = vmatpush1.bf16.msra.mxu0 %v1688
    %1750 = vmatprep.subr.bf16.mxu0 %v1685
    %1751 = vmatpush1.bf16.msra.mxu0 %v1684
    %1752 = vmatprep.subr.bf16.mxu0 %v1681
    %1753 = vmatpush1.bf16.msra.mxu0 %v1680
    %1754 = vmatprep.subr.bf16.mxu0 %v1677
    %1755 = vmatpush1.bf16.msra.mxu0 %v1676
    %1756 = vmatprep.subr.bf16.mxu0 0
    %1757 = vmatpush2.bf16.msra.mxu0 0
    %1758 = vmatprep.subr.bf16.mxu0 0
    %1759 = vmatpush2.bf16.msra.mxu0 0
    %1760 = vmatprep.subr.bf16.mxu0 0
    %1761 = vmatpush2.bf16.msra.mxu0 0
    %1762 = vmatprep.subr.bf16.mxu0 0
    %1763 = vmatpush2.bf16.msra.mxu0 0
    %1764 = vmatprep.subr.bf16.mxu0 0
    %1765 = vmatpush2.bf16.msra.mxu0 0
    %1766 = vmatprep.subr.bf16.mxu0 0
    %1767 = vmatpush2.bf16.msra.mxu0 0
    %1768 = vmatprep.subr.bf16.mxu0 0
    %1769 = vmatpush2.bf16.msra.mxu0 0
    %1770 = vmatprep.subr.bf16.mxu0 0
    %1771 = vmatpush2.bf16.msra.mxu0 0
    %1772 = vmatprep.mubr.bf16.mxu0 0
    %1773 = vmatmul.mubr.bf16.gmra.mxu0 %v1579
    %v1774 = vpop.f32.mrf.mxu0
    %v1775 = vadd.f32 %v1467, %v1774
    %v1776 = vpop.f32.mrf.mxu0
    %v1777 = vadd.f32 %v1469, %v1776
    %v1778 = vpop.f32.mrf.mxu0
    %v1779 = vpop.f32.mrf.mxu0
    %1780 = vdwg.mxu0
    %1781 = vmatprep.subr.bf16.mxu0 %v1707
    %1782 = vmatpush1.bf16.msra.mxu0 %v1706
    %1783 = vmatprep.subr.bf16.mxu0 %v1703
    %1784 = vmatpush1.bf16.msra.mxu0 %v1702
    %1785 = vmatprep.subr.bf16.mxu0 %v1699
    %1786 = vmatpush1.bf16.msra.mxu0 %v1698
    %1787 = vmatprep.subr.bf16.mxu0 %v1695
    %1788 = vmatpush1.bf16.msra.mxu0 %v1694
    %1789 = vmatprep.subr.bf16.mxu0 %v1691
    %1790 = vmatpush1.bf16.msra.mxu0 %v1690
    %1791 = vmatprep.subr.bf16.mxu0 %v1687
    %1792 = vmatpush1.bf16.msra.mxu0 %v1686
    %1793 = vmatprep.subr.bf16.mxu0 %v1683
    %1794 = vmatpush1.bf16.msra.mxu0 %v1682
    %1795 = vmatprep.subr.bf16.mxu0 %v1679
    %1796 = vmatpush1.bf16.msra.mxu0 %v1678
    %1797 = vmatprep.subr.bf16.mxu0 0
    %1798 = vmatpush2.bf16.msra.mxu0 0
    %1799 = vmatprep.subr.bf16.mxu0 0
    %1800 = vmatpush2.bf16.msra.mxu0 0
    %1801 = vmatprep.subr.bf16.mxu0 0
    %1802 = vmatpush2.bf16.msra.mxu0 0
    %1803 = vmatprep.subr.bf16.mxu0 0
    %1804 = vmatpush2.bf16.msra.mxu0 0
    %1805 = vmatprep.subr.bf16.mxu0 0
    %1806 = vmatpush2.bf16.msra.mxu0 0
    %1807 = vmatprep.subr.bf16.mxu0 0
    %1808 = vmatpush2.bf16.msra.mxu0 0
    %1809 = vmatprep.subr.bf16.mxu0 0
    %1810 = vmatpush2.bf16.msra.mxu0 0
    %1811 = vmatprep.subr.bf16.mxu0 0
    %1812 = vmatpush2.bf16.msra.mxu0 0
    %1813 = vmatprep.mubr.bf16.mxu0 0
    %1814 = vmatmul.mubr.bf16.gmra.mxu0 %v1579
    %v1815 = vpop.f32.mrf.mxu0
    %v1816 = vadd.f32 %v1508, %v1815
    %v1817 = vpop.f32.mrf.mxu0
    %v1818 = vadd.f32 %v1510, %v1817
    %v1819 = vpop.f32.mrf.mxu0
    %v1820 = vpop.f32.mrf.mxu0
    %1821 = vdwg.mxu0
    %s1822 = scalar_lea.vmem [#allocation14], 8
    %v1823 = vld [vmem:[%s1822] sm:$0xff]
    %v1824 = vxor.u32 %v1775, 2147483648
    %v1825 = vmul.f32 %v1824, 1.442695
    %v1826 = vpow.pop %v1825
    %v1827 = vadd.f32 %v1826, 1.0
    %v1828 = vrcp.pop %v1827
    %v1829 = vmul.f32 1.0, %v1828
    %v1830 = vxor.u32 %v1777, 2147483648
    %v1831 = vmul.f32 %v1830, 1.442695
    %v1832 = vpow.pop %v1831
    %v1833 = vadd.f32 %v1832, 1.0
    %v1834 = vrcp.pop %v1833
    %v1835 = vmul.f32 1.0, %v1834
    %v1836 = vtanh.pop %v1816
    %v1837 = vxor.u32 %v1818, 2147483648
    %v1838 = vmul.f32 %v1837, 1.442695
    %v1839 = vpow.pop %v1838
    %v1840 = vadd.f32 %v1839, 1.0
    %v1841 = vrcp.pop %v1840
    %v1842 = vmul.f32 1.0, %v1841
    %v1843 = vmul.f32 %v1835, %v1823
    %v1844 = vmul.f32 %v1829, %v1836
    %v1845 = vadd.f32 %v1843, %v1844
    %v1846 = vtanh.pop %v1845
    %v1847 = vmul.f32 %v1842, %v1846
    %1848 = vst [vmem:[#allocation27] sm:$0xff] %v1546
    %s1849 = scalar_lea.vmem [#allocation27], 8
    %1850 = vst [vmem:[%s1849] sm:$0xff] %v1847
    %1851 = vst [vmem:[#allocation24] sm:$0xff] %v1544
    %1852 = vst [vmem:[#allocation26] sm:$0xff] %v1845
    %1853 = vst [vmem:[#allocation7] sm:$0xff] %v1847
    %v1854 = vld [vmem:[#allocation17] sm:$0xff]
    %v1855 = vld [vmem:[#allocation17 + $0x8] sm:$0xff]
    %v1856 = vld [vmem:[#allocation17 + $0x10] sm:$0xff]
    %v1857 = vld [vmem:[#allocation17 + $0x18] sm:$0xff]
    %v1858 = vld [vmem:[#allocation17 + $0x20] sm:$0xff]
    %v1859 = vld [vmem:[#allocation17 + $0x28] sm:$0xff]
    %v1860 = vld [vmem:[#allocation17 + $0x30] sm:$0xff]
    %v1861 = vld [vmem:[#allocation17 + $0x38] sm:$0xff]
    %v1862 = vld [vmem:[#allocation17 + $0x40] sm:$0xff]
    %v1863 = vld [vmem:[#allocation17 + $0x48] sm:$0xff]
    %v1864 = vld [vmem:[#allocation17 + $0x50] sm:$0xff]
    %v1865 = vld [vmem:[#allocation17 + $0x58] sm:$0xff]
    %v1866 = vld [vmem:[#allocation17 + $0x60] sm:$0xff]
    %v1867 = vld [vmem:[#allocation17 + $0x68] sm:$0xff]
    %v1868 = vld [vmem:[#allocation17 + $0x70] sm:$0xff]
    %v1869 = vld [vmem:[#allocation17 + $0x78] sm:$0xff]
    %v1870 = vld [vmem:[#allocation17 + $0x80] sm:$0xff]
    %v1871 = vld [vmem:[#allocation17 + $0x88] sm:$0xff]
    %v1872 = vld [vmem:[#allocation17 + $0x90] sm:$0xff]
    %v1873 = vld [vmem:[#allocation17 + $0x98] sm:$0xff]
    %v1874 = vld [vmem:[#allocation17 + $0xa0] sm:$0xff]
    %v1875 = vld [vmem:[#allocation17 + $0xa8] sm:$0xff]
    %v1876 = vld [vmem:[#allocation17 + $0xb0] sm:$0xff]
    %v1877 = vld [vmem:[#allocation17 + $0xb8] sm:$0xff]
    %v1878 = vld [vmem:[#allocation17 + $0xc0] sm:$0xff]
    %v1879 = vld [vmem:[#allocation17 + $0xc8] sm:$0xff]
    %v1880 = vld [vmem:[#allocation17 + $0xd0] sm:$0xff]
    %v1881 = vld [vmem:[#allocation17 + $0xd8] sm:$0xff]
    %v1882 = vld [vmem:[#allocation17 + $0xe0] sm:$0xff]
    %v1883 = vld [vmem:[#allocation17 + $0xe8] sm:$0xff]
    %v1884 = vld [vmem:[#allocation17 + $0xf0] sm:$0xff]
    %v1885 = vld [vmem:[#allocation17 + $0xf8] sm:$0xff]
    %v1918 = vunpack.c.l.b16 %v1854
    %v1919 = vunpack.c.h.b16 %v1854
    %v1920 = vunpack.c.l.b16 %v1855
    %v1921 = vunpack.c.h.b16 %v1855
    %v1922 = vunpack.c.l.b16 %v1856
    %v1923 = vunpack.c.h.b16 %v1856
    %v1924 = vunpack.c.l.b16 %v1857
    %v1925 = vunpack.c.h.b16 %v1857
    %v1926 = vunpack.c.l.b16 %v1858
    %v1927 = vunpack.c.h.b16 %v1858
    %v1928 = vunpack.c.l.b16 %v1859
    %v1929 = vunpack.c.h.b16 %v1859
    %v1930 = vunpack.c.l.b16 %v1860
    %v1931 = vunpack.c.h.b16 %v1860
    %v1932 = vunpack.c.l.b16 %v1861
    %v1933 = vunpack.c.h.b16 %v1861
    %v1934 = vunpack.c.l.b16 %v1862
    %v1935 = vunpack.c.h.b16 %v1862
    %v1936 = vunpack.c.l.b16 %v1863
    %v1937 = vunpack.c.h.b16 %v1863
    %v1938 = vunpack.c.l.b16 %v1864
    %v1939 = vunpack.c.h.b16 %v1864
    %v1940 = vunpack.c.l.b16 %v1865
    %v1941 = vunpack.c.h.b16 %v1865
    %v1942 = vunpack.c.l.b16 %v1866
    %v1943 = vunpack.c.h.b16 %v1866
    %v1944 = vunpack.c.l.b16 %v1867
    %v1945 = vunpack.c.h.b16 %v1867
    %v1946 = vunpack.c.l.b16 %v1868
    %v1947 = vunpack.c.h.b16 %v1868
    %v1948 = vunpack.c.l.b16 %v1869
    %v1949 = vunpack.c.h.b16 %v1869
    %v1950 = vunpack.c.l.b16 %v1870
    %v1951 = vunpack.c.h.b16 %v1870
    %v1952 = vunpack.c.l.b16 %v1871
    %v1953 = vunpack.c.h.b16 %v1871
    %v1954 = vunpack.c.l.b16 %v1872
    %v1955 = vunpack.c.h.b16 %v1872
    %v1956 = vunpack.c.l.b16 %v1873
    %v1957 = vunpack.c.h.b16 %v1873
    %v1958 = vunpack.c.l.b16 %v1874
    %v1959 = vunpack.c.h.b16 %v1874
    %v1960 = vunpack.c.l.b16 %v1875
    %v1961 = vunpack.c.h.b16 %v1875
    %v1962 = vunpack.c.l.b16 %v1876
    %v1963 = vunpack.c.h.b16 %v1876
    %v1964 = vunpack.c.l.b16 %v1877
    %v1965 = vunpack.c.h.b16 %v1877
    %v1966 = vunpack.c.l.b16 %v1878
    %v1967 = vunpack.c.h.b16 %v1878
    %v1968 = vunpack.c.l.b16 %v1879
    %v1969 = vunpack.c.h.b16 %v1879
    %v1970 = vunpack.c.l.b16 %v1880
    %v1971 = vunpack.c.h.b16 %v1880
    %v1972 = vunpack.c.l.b16 %v1881
    %v1973 = vunpack.c.h.b16 %v1881
    %v1974 = vunpack.c.l.b16 %v1882
    %v1975 = vunpack.c.h.b16 %v1882
    %v1976 = vunpack.c.l.b16 %v1883
    %v1977 = vunpack.c.h.b16 %v1883
    %v1978 = vunpack.c.l.b16 %v1884
    %v1979 = vunpack.c.h.b16 %v1884
    %v1980 = vunpack.c.l.b16 %v1885
    %v1981 = vunpack.c.h.b16 %v1885
    %v1982 = vpack.c.b16 %v1922, %v1918
    %v1983 = vpack.c.b16 %v1923, %v1919
    %v1984 = vpack.c.b16 %v1924, %v1920
    %v1985 = vpack.c.b16 %v1925, %v1921
    %v1986 = vpack.c.b16 %v1930, %v1926
    %v1987 = vpack.c.b16 %v1931, %v1927
    %v1988 = vpack.c.b16 %v1932, %v1928
    %v1989 = vpack.c.b16 %v1933, %v1929
    %v1990 = vpack.c.b16 %v1938, %v1934
    %v1991 = vpack.c.b16 %v1939, %v1935
    %v1992 = vpack.c.b16 %v1940, %v1936
    %v1993 = vpack.c.b16 %v1941, %v1937
    %v1994 = vpack.c.b16 %v1946, %v1942
    %v1995 = vpack.c.b16 %v1947, %v1943
    %v1996 = vpack.c.b16 %v1948, %v1944
    %v1997 = vpack.c.b16 %v1949, %v1945
    %v1998 = vpack.c.b16 %v1954, %v1950
    %v1999 = vpack.c.b16 %v1955, %v1951
    %v2000 = vpack.c.b16 %v1956, %v1952
    %v2001 = vpack.c.b16 %v1957, %v1953
    %v2002 = vpack.c.b16 %v1962, %v1958
    %v2003 = vpack.c.b16 %v1963, %v1959
    %v2004 = vpack.c.b16 %v1964, %v1960
    %v2005 = vpack.c.b16 %v1965, %v1961
    %v2006 = vpack.c.b16 %v1970, %v1966
    %v2007 = vpack.c.b16 %v1971, %v1967
    %v2008 = vpack.c.b16 %v1972, %v1968
    %v2009 = vpack.c.b16 %v1973, %v1969
    %v2010 = vpack.c.b16 %v1978, %v1974
    %v2011 = vpack.c.b16 %v1979, %v1975
    %v2012 = vpack.c.b16 %v1980, %v1976
    %v2013 = vpack.c.b16 %v1981, %v1977
    %2046 = vmatprep.subr.bf16.mxu0 %v2011
    %2047 = vmatpush1.bf16.msra.mxu0 %v2010
    %2048 = vmatprep.subr.bf16.mxu0 %v2007
    %2049 = vmatpush1.bf16.msra.mxu0 %v2006
    %2050 = vmatprep.subr.bf16.mxu0 %v2003
    %2051 = vmatpush1.bf16.msra.mxu0 %v2002
    %2052 = vmatprep.subr.bf16.mxu0 %v1999
    %2053 = vmatpush1.bf16.msra.mxu0 %v1998
    %2054 = vmatprep.subr.bf16.mxu0 %v1995
    %2055 = vmatpush1.bf16.msra.mxu0 %v1994
    %2056 = vmatprep.subr.bf16.mxu0 %v1991
    %2057 = vmatpush1.bf16.msra.mxu0 %v1990
    %2058 = vmatprep.subr.bf16.mxu0 %v1987
    %2059 = vmatpush1.bf16.msra.mxu0 %v1986
    %2060 = vmatprep.subr.bf16.mxu0 %v1983
    %2061 = vmatpush1.bf16.msra.mxu0 %v1982
    %2062 = vmatprep.subr.bf16.mxu0 0
    %2063 = vmatpush2.bf16.msra.mxu0 0
    %2064 = vmatprep.subr.bf16.mxu0 0
    %2065 = vmatpush2.bf16.msra.mxu0 0
    %2066 = vmatprep.subr.bf16.mxu0 0
    %2067 = vmatpush2.bf16.msra.mxu0 0
    %2068 = vmatprep.subr.bf16.mxu0 0
    %2069 = vmatpush2.bf16.msra.mxu0 0
    %2070 = vmatprep.subr.bf16.mxu0 0
    %2071 = vmatpush2.bf16.msra.mxu0 0
    %2072 = vmatprep.subr.bf16.mxu0 0
    %2073 = vmatpush2.bf16.msra.mxu0 0
    %2074 = vmatprep.subr.bf16.mxu0 0
    %2075 = vmatpush2.bf16.msra.mxu0 0
    %2076 = vmatprep.subr.bf16.mxu0 0
    %2077 = vmatpush2.bf16.msra.mxu0 0
    %2078 = vmatprep.mubr.bf16.mxu0 0
    %2079 = vmatmul.mubr.bf16.gmra.mxu0 %v1579
    %v2080 = vpop.f32.mrf.mxu0
    %v2081 = vadd.f32 0.0, %v2080
    %v2082 = vpop.f32.mrf.mxu0
    %v2083 = vadd.f32 0.0, %v2082
    %v2084 = vpop.f32.mrf.mxu0
    %v2085 = vpop.f32.mrf.mxu0
    %2086 = vdwg.mxu0
    %2087 = vmatprep.subr.bf16.mxu0 %v2013
    %2088 = vmatpush1.bf16.msra.mxu0 %v2012
    %2089 = vmatprep.subr.bf16.mxu0 %v2009
    %2090 = vmatpush1.bf16.msra.mxu0 %v2008
    %2091 = vmatprep.subr.bf16.mxu0 %v2005
    %2092 = vmatpush1.bf16.msra.mxu0 %v2004
    %2093 = vmatprep.subr.bf16.mxu0 %v2001
    %2094 = vmatpush1.bf16.msra.mxu0 %v2000
    %2095 = vmatprep.subr.bf16.mxu0 %v1997
    %2096 = vmatpush1.bf16.msra.mxu0 %v1996
    %2097 = vmatprep.subr.bf16.mxu0 %v1993
    %2098 = vmatpush1.bf16.msra.mxu0 %v1992
    %2099 = vmatprep.subr.bf16.mxu0 %v1989
    %2100 = vmatpush1.bf16.msra.mxu0 %v1988
    %2101 = vmatprep.subr.bf16.mxu0 %v1985
    %2102 = vmatpush1.bf16.msra.mxu0 %v1984
    %2103 = vmatprep.subr.bf16.mxu0 0
    %2104 = vmatpush2.bf16.msra.mxu0 0
    %2105 = vmatprep.subr.bf16.mxu0 0
    %2106 = vmatpush2.bf16.msra.mxu0 0
    %2107 = vmatprep.subr.bf16.mxu0 0
    %2108 = vmatpush2.bf16.msra.mxu0 0
    %2109 = vmatprep.subr.bf16.mxu0 0
    %2110 = vmatpush2.bf16.msra.mxu0 0
    %2111 = vmatprep.subr.bf16.mxu0 0
    %2112 = vmatpush2.bf16.msra.mxu0 0
    %2113 = vmatprep.subr.bf16.mxu0 0
    %2114 = vmatpush2.bf16.msra.mxu0 0
    %2115 = vmatprep.subr.bf16.mxu0 0
    %2116 = vmatpush2.bf16.msra.mxu0 0
    %2117 = vmatprep.subr.bf16.mxu0 0
    %2118 = vmatpush2.bf16.msra.mxu0 0
    %2119 = vmatprep.mubr.bf16.mxu0 0
    %2120 = vmatmul.mubr.bf16.gmra.mxu0 %v1579
    %v2121 = vpop.f32.mrf.mxu0
    %v2122 = vadd.f32 0.0, %v2121
    %v2123 = vpop.f32.mrf.mxu0
    %v2124 = vadd.f32 0.0, %v2123
    %v2125 = vpop.f32.mrf.mxu0
    %v2126 = vpop.f32.mrf.mxu0
    %2127 = vdwg.mxu0
    %v2128 = vld [vmem:[#allocation3 + $0x20] sm:$0xff]
    %v2129 = vld [vmem:[#allocation3 + $0x28] sm:$0xff]
    %v2130 = vld [vmem:[#allocation3 + $0x30] sm:$0xff]
    %v2131 = vld [vmem:[#allocation3 + $0x38] sm:$0xff]
    %v2132 = vld [vmem:[#allocation3 + $0x40] sm:$0xff]
    %v2133 = vld [vmem:[#allocation3 + $0x48] sm:$0xff]
    %v2134 = vld [vmem:[#allocation3 + $0x50] sm:$0xff]
    %v2135 = vld [vmem:[#allocation3 + $0x58] sm:$0xff]
    %v2136 = vld [vmem:[#allocation3 + $0x60] sm:$0xff]
    %v2137 = vld [vmem:[#allocation3 + $0x68] sm:$0xff]
    %v2138 = vld [vmem:[#allocation3 + $0x70] sm:$0xff]
    %v2139 = vld [vmem:[#allocation3 + $0x78] sm:$0xff]
    %v2140 = vld [vmem:[#allocation3 + $0x80] sm:$0xff]
    %v2141 = vld [vmem:[#allocation3 + $0x88] sm:$0xff]
    %v2142 = vld [vmem:[#allocation3 + $0x90] sm:$0xff]
    %v2143 = vld [vmem:[#allocation3 + $0x98] sm:$0xff]
    %v2144 = vld [vmem:[#allocation3 + $0xa0] sm:$0xff]
    %v2145 = vld [vmem:[#allocation3 + $0xa8] sm:$0xff]
    %v2146 = vld [vmem:[#allocation3 + $0xb0] sm:$0xff]
    %v2147 = vld [vmem:[#allocation3 + $0xb8] sm:$0xff]
    %v2148 = vld [vmem:[#allocation3 + $0xc0] sm:$0xff]
    %v2149 = vld [vmem:[#allocation3 + $0xc8] sm:$0xff]
    %v2150 = vld [vmem:[#allocation3 + $0xd0] sm:$0xff]
    %v2151 = vld [vmem:[#allocation3 + $0xd8] sm:$0xff]
    %v2152 = vld [vmem:[#allocation3 + $0xe0] sm:$0xff]
    %v2153 = vld [vmem:[#allocation3 + $0xe8] sm:$0xff]
    %v2154 = vld [vmem:[#allocation3 + $0xf0] sm:$0xff]
    %v2155 = vld [vmem:[#allocation3 + $0xf8] sm:$0xff]
    %v2156 = vadd.f32 %v2128, %v2081
    %v2157 = vadd.f32 %v2129, %v2083
    %v2158 = vadd.f32 %v2130, %v2122
    %v2159 = vadd.f32 %v2131, %v2124
    %v2160 = vadd.f32 %v2132, %v2081
    %v2161 = vadd.f32 %v2133, %v2083
    %v2162 = vadd.f32 %v2134, %v2122
    %v2163 = vadd.f32 %v2135, %v2124
    %v2164 = vadd.f32 %v2136, %v2081
    %v2165 = vadd.f32 %v2137, %v2083
    %v2166 = vadd.f32 %v2138, %v2122
    %v2167 = vadd.f32 %v2139, %v2124
    %v2168 = vadd.f32 %v2140, %v2081
    %v2169 = vadd.f32 %v2141, %v2083
    %v2170 = vadd.f32 %v2142, %v2122
    %v2171 = vadd.f32 %v2143, %v2124
    %v2172 = vadd.f32 %v2144, %v2081
    %v2173 = vadd.f32 %v2145, %v2083
    %v2174 = vadd.f32 %v2146, %v2122
    %v2175 = vadd.f32 %v2147, %v2124
    %v2176 = vadd.f32 %v2148, %v2081
    %v2177 = vadd.f32 %v2149, %v2083
    %v2178 = vadd.f32 %v2150, %v2122
    %v2179 = vadd.f32 %v2151, %v2124
    %v2180 = vadd.f32 %v2152, %v2081
    %v2181 = vadd.f32 %v2153, %v2083
    %v2182 = vadd.f32 %v2154, %v2122
    %v2183 = vadd.f32 %v2155, %v2124
    %v2184 = vxor.u32 %v2157, 2147483648
    %v2185 = vxor.u32 %v2161, 2147483648
    %v2186 = vxor.u32 %v2165, 2147483648
    %v2187 = vxor.u32 %v2169, 2147483648
    %v2188 = vxor.u32 %v2173, 2147483648
    %v2189 = vxor.u32 %v2177, 2147483648
    %v2190 = vxor.u32 %v2181, 2147483648
    %v2191 = vmul.f32 %v2184, 1.442695
    %v2192 = vpow.pop %v2191
    %v2193 = vmul.f32 %v2185, 1.442695
    %v2194 = vpow.pop %v2193
    %v2195 = vmul.f32 %v2186, 1.442695
    %v2196 = vpow.pop %v2195
    %v2197 = vmul.f32 %v2187, 1.442695
    %v2198 = vpow.pop %v2197
    %v2199 = vmul.f32 %v2188, 1.442695
    %v2200 = vpow.pop %v2199
    %v2201 = vmul.f32 %v2189, 1.442695
    %v2202 = vpow.pop %v2201
    %v2203 = vmul.f32 %v2190, 1.442695
    %v2204 = vpow.pop %v2203
    %v2205 = vadd.f32 %v2192, 1.0
    %v2206 = vadd.f32 %v2194, 1.0
    %v2207 = vadd.f32 %v2196, 1.0
    %v2208 = vadd.f32 %v2198, 1.0
    %v2209 = vadd.f32 %v2200, 1.0
    %v2210 = vadd.f32 %v2202, 1.0
    %v2211 = vadd.f32 %v2204, 1.0
    %v2212 = vrcp.pop %v2205
    %v2213 = vmul.f32 1.0, %v2212
    %v2214 = vrcp.pop %v2206
    %v2215 = vmul.f32 1.0, %v2214
    %v2216 = vrcp.pop %v2207
    %v2217 = vmul.f32 1.0, %v2216
    %v2218 = vrcp.pop %v2208
    %v2219 = vmul.f32 1.0, %v2218
    %v2220 = vrcp.pop %v2209
    %v2221 = vmul.f32 1.0, %v2220
    %v2222 = vrcp.pop %v2210
    %v2223 = vmul.f32 1.0, %v2222
    %v2224 = vrcp.pop %v2211
    %v2225 = vmul.f32 1.0, %v2224
    %2226 = vst [vmem:[#allocation4] sm:$0xff] %v2213
    %2227 = vst [vmem:[#allocation4 + $0x18] sm:$0xff] %v2215
    %2228 = vst [vmem:[#allocation4 + $0x30] sm:$0xff] %v2217
    %2229 = vst [vmem:[#allocation4 + $0x48] sm:$0xff] %v2219
    %2230 = vst [vmem:[#allocation4 + $0x60] sm:$0xff] %v2221
    %2231 = vst [vmem:[#allocation4 + $0x78] sm:$0xff] %v2223
    %2232 = vst [vmem:[#allocation4 + $0x90] sm:$0xff] %v2225
    %v2233 = vxor.u32 %v2156, 2147483648
    %v2234 = vxor.u32 %v2160, 2147483648
    %v2235 = vxor.u32 %v2164, 2147483648
    %v2236 = vxor.u32 %v2168, 2147483648
    %v2237 = vxor.u32 %v2172, 2147483648
    %v2238 = vxor.u32 %v2176, 2147483648
    %v2239 = vxor.u32 %v2180, 2147483648
    %v2240 = vmul.f32 %v2233, 1.442695
    %v2241 = vpow.pop %v2240
    %v2242 = vmul.f32 %v2234, 1.442695
    %v2243 = vpow.pop %v2242
    %v2244 = vmul.f32 %v2235, 1.442695
    %v2245 = vpow.pop %v2244
    %v2246 = vmul.f32 %v2236, 1.442695
    %v2247 = vpow.pop %v2246
    %v2248 = vmul.f32 %v2237, 1.442695
    %v2249 = vpow.pop %v2248
    %v2250 = vmul.f32 %v2238, 1.442695
    %v2251 = vpow.pop %v2250
    %v2252 = vmul.f32 %v2239, 1.442695
    %v2253 = vpow.pop %v2252
    %v2254 = vadd.f32 %v2241, 1.0
    %v2255 = vadd.f32 %v2243, 1.0
    %v2256 = vadd.f32 %v2245, 1.0
    %v2257 = vadd.f32 %v2247, 1.0
    %v2258 = vadd.f32 %v2249, 1.0
    %v2259 = vadd.f32 %v2251, 1.0
    %v2260 = vadd.f32 %v2253, 1.0
    %v2261 = vrcp.pop %v2254
    %v2262 = vmul.f32 1.0, %v2261
    %v2263 = vrcp.pop %v2255
    %v2264 = vmul.f32 1.0, %v2263
    %v2265 = vrcp.pop %v2256
    %v2266 = vmul.f32 1.0, %v2265
    %v2267 = vrcp.pop %v2257
    %v2268 = vmul.f32 1.0, %v2267
    %v2269 = vrcp.pop %v2258
    %v2270 = vmul.f32 1.0, %v2269
    %v2271 = vrcp.pop %v2259
    %v2272 = vmul.f32 1.0, %v2271
    %v2273 = vrcp.pop %v2260
    %v2274 = vmul.f32 1.0, %v2273
    %v2275 = vtanh.pop %v2158
    %v2276 = vtanh.pop %v2162
    %v2277 = vtanh.pop %v2166
    %v2278 = vtanh.pop %v2170
    %v2279 = vtanh.pop %v2174
    %v2280 = vtanh.pop %v2178
    %v2281 = vtanh.pop %v2182
    %v2282 = vmul.f32 %v2262, %v2275
    %v2283 = vmul.f32 %v2264, %v2276
    %v2284 = vmul.f32 %v2266, %v2277
    %v2285 = vmul.f32 %v2268, %v2278
    %v2286 = vmul.f32 %v2270, %v2279
    %v2287 = vmul.f32 %v2272, %v2280
    %v2288 = vmul.f32 %v2274, %v2281
    %2289 = vst [vmem:[#allocation4 + $0x8] sm:$0xff] %v2282
    %2290 = vst [vmem:[#allocation4 + $0x20] sm:$0xff] %v2283
    %2291 = vst [vmem:[#allocation4 + $0x38] sm:$0xff] %v2284
    %2292 = vst [vmem:[#allocation4 + $0x50] sm:$0xff] %v2285
    %2293 = vst [vmem:[#allocation4 + $0x68] sm:$0xff] %v2286
    %2294 = vst [vmem:[#allocation4 + $0x80] sm:$0xff] %v2287
    %2295 = vst [vmem:[#allocation4 + $0x98] sm:$0xff] %v2288
    %v2296 = vxor.u32 %v2159, 2147483648
    %v2297 = vxor.u32 %v2163, 2147483648
    %v2298 = vxor.u32 %v2167, 2147483648
    %v2299 = vxor.u32 %v2171, 2147483648
    %v2300 = vxor.u32 %v2175, 2147483648
    %v2301 = vxor.u32 %v2179, 2147483648
    %v2302 = vxor.u32 %v2183, 2147483648
    %v2303 = vmul.f32 %v2296, 1.442695
    %v2304 = vpow.pop %v2303
    %v2305 = vmul.f32 %v2297, 1.442695
    %v2306 = vpow.pop %v2305
    %v2307 = vmul.f32 %v2298, 1.442695
    %v2308 = vpow.pop %v2307
    %v2309 = vmul.f32 %v2299, 1.442695
    %v2310 = vpow.pop %v2309
    %v2311 = vmul.f32 %v2300, 1.442695
    %v2312 = vpow.pop %v2311
    %v2313 = vmul.f32 %v2301, 1.442695
    %v2314 = vpow.pop %v2313
    %v2315 = vmul.f32 %v2302, 1.442695
    %v2316 = vpow.pop %v2315
    %v2317 = vadd.f32 %v2304, 1.0
    %v2318 = vadd.f32 %v2306, 1.0
    %v2319 = vadd.f32 %v2308, 1.0
    %v2320 = vadd.f32 %v2310, 1.0
    %v2321 = vadd.f32 %v2312, 1.0
    %v2322 = vadd.f32 %v2314, 1.0
    %v2323 = vadd.f32 %v2316, 1.0
    %v2324 = vrcp.pop %v2317
    %v2325 = vmul.f32 1.0, %v2324
    %v2326 = vrcp.pop %v2318
    %v2327 = vmul.f32 1.0, %v2326
    %v2328 = vrcp.pop %v2319
    %v2329 = vmul.f32 1.0, %v2328
    %v2330 = vrcp.pop %v2320
    %v2331 = vmul.f32 1.0, %v2330
    %v2332 = vrcp.pop %v2321
    %v2333 = vmul.f32 1.0, %v2332
    %v2334 = vrcp.pop %v2322
    %v2335 = vmul.f32 1.0, %v2334
    %v2336 = vrcp.pop %v2323
    %v2337 = vmul.f32 1.0, %v2336
    %2338 = vst [vmem:[#allocation4 + $0x10] sm:$0xff] %v2325
    %2339 = vst [vmem:[#allocation4 + $0x28] sm:$0xff] %v2327
    %2340 = vst [vmem:[#allocation4 + $0x40] sm:$0xff] %v2329
    %2341 = vst [vmem:[#allocation4 + $0x58] sm:$0xff] %v2331
    %2342 = vst [vmem:[#allocation4 + $0x70] sm:$0xff] %v2333
    %2343 = vst [vmem:[#allocation4 + $0x88] sm:$0xff] %v2335
    %2344 = vst [vmem:[#allocation4 + $0xa0] sm:$0xff] %v2337
    %v2345 = vld [vmem:[#allocation4] sm:$0xff]
    %v2346 = vld [vmem:[#allocation4 + $0x8] sm:$0xff]
    %v2347 = vld [vmem:[#allocation4 + $0x10] sm:$0xff]
    %v2348 = vmul.f32 %v2345, %v1544
    %v2349 = vadd.f32 %v2348, %v2346
    %v2350 = vtanh.pop %v2349
    %v2351 = vmul.f32 %v2347, %v2350
    %s2352 = scalar_lea.vmem [#allocation24], 8
    %2353 = vst [vmem:[%s2352] sm:$0xff] %v2349
    %2354 = vst [vmem:[#allocation5] sm:$0xff] %v2351
    %s2355 = scalar_lea.vmem [#allocation4], 24
    %v2356 = vld [vmem:[%s2355] sm:$0xff]
    %v2357 = vld [vmem:[%s2355 + $0x8] sm:$0xff]
    %v2358 = vld [vmem:[%s2355 + $0x10] sm:$0xff]
    %v2359 = vmul.f32 %v2356, %v2349
    %v2360 = vadd.f32 %v2359, %v2357
    %v2361 = vtanh.pop %v2360
    %v2362 = vmul.f32 %v2358, %v2361
    %s2363 = scalar_lea.vmem [#allocation24], 16
    %2364 = vst [vmem:[%s2363] sm:$0xff] %v2360
    %s2365 = scalar_lea.vmem [#allocation5], 8
    %2366 = vst [vmem:[%s2365] sm:$0xff] %v2362
    %s2367 = scalar_lea.vmem [#allocation4], 48
    %v2368 = vld [vmem:[%s2367] sm:$0xff]
    %v2369 = vld [vmem:[%s2367 + $0x8] sm:$0xff]
    %v2370 = vld [vmem:[%s2367 + $0x10] sm:$0xff]
    %v2371 = vmul.f32 %v2368, %v2360
    %v2372 = vadd.f32 %v2371, %v2369
    %v2373 = vtanh.pop %v2372
    %v2374 = vmul.f32 %v2370, %v2373
    %s2375 = scalar_lea.vmem [#allocation24], 24
    %2376 = vst [vmem:[%s2375] sm:$0xff] %v2372
    %s2377 = scalar_lea.vmem [#allocation5], 16
    %2378 = vst [vmem:[%s2377] sm:$0xff] %v2374
    %s2379 = scalar_lea.vmem [#allocation4], 72
    %v2380 = vld [vmem:[%s2379] sm:$0xff]
    %v2381 = vld [vmem:[%s2379 + $0x8] sm:$0xff]
    %v2382 = vld [vmem:[%s2379 + $0x10] sm:$0xff]
    %v2383 = vmul.f32 %v2380, %v2372
    %v2384 = vadd.f32 %v2383, %v2381
    %v2385 = vtanh.pop %v2384
    %v2386 = vmul.f32 %v2382, %v2385
    %s2387 = scalar_lea.vmem [#allocation24], 32
    %2388 = vst [vmem:[%s2387] sm:$0xff] %v2384
    %s2389 = scalar_lea.vmem [#allocation5], 24
    %2390 = vst [vmem:[%s2389] sm:$0xff] %v2386
    %s2391 = scalar_lea.vmem [#allocation4], 96
    %v2392 = vld [vmem:[%s2391] sm:$0xff]
    %v2393 = vld [vmem:[%s2391 + $0x8] sm:$0xff]
    %v2394 = vld [vmem:[%s2391 + $0x10] sm:$0xff]
    %v2395 = vmul.f32 %v2392, %v2384
    %v2396 = vadd.f32 %v2395, %v2393
    %v2397 = vtanh.pop %v2396
    %v2398 = vmul.f32 %v2394, %v2397
    %s2399 = scalar_lea.vmem [#allocation24], 40
    %2400 = vst [vmem:[%s2399] sm:$0xff] %v2396
    %s2401 = scalar_lea.vmem [#allocation5], 32
    %2402 = vst [vmem:[%s2401] sm:$0xff] %v2398
    %s2403 = scalar_lea.vmem [#allocation4], 120
    %v2404 = vld [vmem:[%s2403] sm:$0xff]
    %v2405 = vld [vmem:[%s2403 + $0x8] sm:$0xff]
    %v2406 = vld [vmem:[%s2403 + $0x10] sm:$0xff]
    %v2407 = vmul.f32 %v2404, %v2396
    %v2408 = vadd.f32 %v2407, %v2405
    %v2409 = vtanh.pop %v2408
    %v2410 = vmul.f32 %v2406, %v2409
    %s2411 = scalar_lea.vmem [#allocation24], 48
    %2412 = vst [vmem:[%s2411] sm:$0xff] %v2408
    %s2413 = scalar_lea.vmem [#allocation5], 40
    %2414 = vst [vmem:[%s2413] sm:$0xff] %v2410
    %s2415 = scalar_lea.vmem [#allocation4], 144
    %v2416 = vld [vmem:[%s2415] sm:$0xff]
    %v2417 = vld [vmem:[%s2415 + $0x8] sm:$0xff]
    %v2418 = vld [vmem:[%s2415 + $0x10] sm:$0xff]
    %v2419 = vmul.f32 %v2416, %v2408
    %v2420 = vadd.f32 %v2419, %v2417
    %v2421 = vtanh.pop %v2420
    %v2422 = vmul.f32 %v2418, %v2421
    %s2423 = scalar_lea.vmem [#allocation24], 56
    %2424 = vst [vmem:[%s2423] sm:$0xff] %v2420
    %s2425 = scalar_lea.vmem [#allocation5], 48
    %2426 = vst [vmem:[%s2425] sm:$0xff] %v2422
    %v2427 = vld [vmem:[%s9] sm:$0xf]
    %v2428 = vld [vmem:[#allocation20] sm:$0xff]
    %v2429 = vld [vmem:[#allocation20 + $0x8] sm:$0xff]
    %v2430 = vld [vmem:[#allocation20 + $0x10] sm:$0xff]
    %v2431 = vld [vmem:[#allocation20 + $0x18] sm:$0xff]
    %v2432 = vld [vmem:[#allocation20 + $0x20] sm:$0xff]
    %v2433 = vld [vmem:[#allocation20 + $0x28] sm:$0xff]
    %v2434 = vld [vmem:[#allocation20 + $0x30] sm:$0xff]
    %v2435 = vld [vmem:[#allocation20 + $0x38] sm:$0xff]
    %v2436 = vld [vmem:[#allocation20 + $0x40] sm:$0xff]
    %v2437 = vld [vmem:[#allocation20 + $0x48] sm:$0xff]
    %v2438 = vld [vmem:[#allocation20 + $0x50] sm:$0xff]
    %v2439 = vld [vmem:[#allocation20 + $0x58] sm:$0xff]
    %v2440 = vld [vmem:[#allocation20 + $0x60] sm:$0xff]
    %v2441 = vld [vmem:[#allocation20 + $0x68] sm:$0xff]
    %v2442 = vld [vmem:[#allocation20 + $0x70] sm:$0xff]
    %v2443 = vld [vmem:[#allocation20 + $0x78] sm:$0xff]
    %v2444 = vld [vmem:[#allocation20 + $0x80] sm:$0xff]
    %v2445 = vld [vmem:[#allocation20 + $0x88] sm:$0xff]
    %v2446 = vld [vmem:[#allocation20 + $0x90] sm:$0xff]
    %v2447 = vld [vmem:[#allocation20 + $0x98] sm:$0xff]
    %v2448 = vld [vmem:[#allocation20 + $0xa0] sm:$0xff]
    %v2449 = vld [vmem:[#allocation20 + $0xa8] sm:$0xff]
    %v2450 = vld [vmem:[#allocation20 + $0xb0] sm:$0xff]
    %v2451 = vld [vmem:[#allocation20 + $0xb8] sm:$0xff]
    %v2452 = vld [vmem:[#allocation20 + $0xc0] sm:$0xff]
    %v2453 = vld [vmem:[#allocation20 + $0xc8] sm:$0xff]
    %v2454 = vld [vmem:[#allocation20 + $0xd0] sm:$0xff]
    %v2455 = vld [vmem:[#allocation20 + $0xd8] sm:$0xff]
    %v2456 = vld [vmem:[#allocation20 + $0xe0] sm:$0xff]
    %v2457 = vld [vmem:[#allocation20 + $0xe8] sm:$0xff]
    %v2458 = vld [vmem:[#allocation20 + $0xf0] sm:$0xff]
    %v2459 = vld [vmem:[#allocation20 + $0xf8] sm:$0xff]
    %v2460 = vpack.c.bf16 %v1847, %v1847
    %v2493 = vunpack.c.l.b16 %v2428
    %v2494 = vunpack.c.h.b16 %v2428
    %v2495 = vunpack.c.l.b16 %v2429
    %v2496 = vunpack.c.h.b16 %v2429
    %v2497 = vunpack.c.l.b16 %v2430
    %v2498 = vunpack.c.h.b16 %v2430
    %v2499 = vunpack.c.l.b16 %v2431
    %v2500 = vunpack.c.h.b16 %v2431
    %v2501 = vunpack.c.l.b16 %v2432
    %v2502 = vunpack.c.h.b16 %v2432
    %v2503 = vunpack.c.l.b16 %v2433
    %v2504 = vunpack.c.h.b16 %v2433
    %v2505 = vunpack.c.l.b16 %v2434
    %v2506 = vunpack.c.h.b16 %v2434
    %v2507 = vunpack.c.l.b16 %v2435
    %v2508 = vunpack.c.h.b16 %v2435
    %v2509 = vunpack.c.l.b16 %v2436
    %v2510 = vunpack.c.h.b16 %v2436
    %v2511 = vunpack.c.l.b16 %v2437
    %v2512 = vunpack.c.h.b16 %v2437
    %v2513 = vunpack.c.l.b16 %v2438
    %v2514 = vunpack.c.h.b16 %v2438
    %v2515 = vunpack.c.l.b16 %v2439
    %v2516 = vunpack.c.h.b16 %v2439
    %v2517 = vunpack.c.l.b16 %v2440
    %v2518 = vunpack.c.h.b16 %v2440
    %v2519 = vunpack.c.l.b16 %v2441
    %v2520 = vunpack.c.h.b16 %v2441
    %v2521 = vunpack.c.l.b16 %v2442
    %v2522 = vunpack.c.h.b16 %v2442
    %v2523 = vunpack.c.l.b16 %v2443
    %v2524 = vunpack.c.h.b16 %v2443
    %v2525 = vunpack.c.l.b16 %v2444
    %v2526 = vunpack.c.h.b16 %v2444
    %v2527 = vunpack.c.l.b16 %v2445
    %v2528 = vunpack.c.h.b16 %v2445
    %v2529 = vunpack.c.l.b16 %v2446
    %v2530 = vunpack.c.h.b16 %v2446
    %v2531 = vunpack.c.l.b16 %v2447
    %v2532 = vunpack.c.h.b16 %v2447
    %v2533 = vunpack.c.l.b16 %v2448
    %v2534 = vunpack.c.h.b16 %v2448
    %v2535 = vunpack.c.l.b16 %v2449
    %v2536 = vunpack.c.h.b16 %v2449
    %v2537 = vunpack.c.l.b16 %v2450
    %v2538 = vunpack.c.h.b16 %v2450
    %v2539 = vunpack.c.l.b16 %v2451
    %v2540 = vunpack.c.h.b16 %v2451
    %v2541 = vunpack.c.l.b16 %v2452
    %v2542 = vunpack.c.h.b16 %v2452
    %v2543 = vunpack.c.l.b16 %v2453
    %v2544 = vunpack.c.h.b16 %v2453
    %v2545 = vunpack.c.l.b16 %v2454
    %v2546 = vunpack.c.h.b16 %v2454
    %v2547 = vunpack.c.l.b16 %v2455
    %v2548 = vunpack.c.h.b16 %v2455
    %v2549 = vunpack.c.l.b16 %v2456
    %v2550 = vunpack.c.h.b16 %v2456
    %v2551 = vunpack.c.l.b16 %v2457
    %v2552 = vunpack.c.h.b16 %v2457
    %v2553 = vunpack.c.l.b16 %v2458
    %v2554 = vunpack.c.h.b16 %v2458
    %v2555 = vunpack.c.l.b16 %v2459
    %v2556 = vunpack.c.h.b16 %v2459
    %v2557 = vpack.c.b16 %v2497, %v2493
    %v2558 = vpack.c.b16 %v2498, %v2494
    %v2559 = vpack.c.b16 %v2499, %v2495
    %v2560 = vpack.c.b16 %v2500, %v2496
    %v2561 = vpack.c.b16 %v2505, %v2501
    %v2562 = vpack.c.b16 %v2506, %v2502
    %v2563 = vpack.c.b16 %v2507, %v2503
    %v2564 = vpack.c.b16 %v2508, %v2504
    %v2565 = vpack.c.b16 %v2513, %v2509
    %v2566 = vpack.c.b16 %v2514, %v2510
    %v2567 = vpack.c.b16 %v2515, %v2511
    %v2568 = vpack.c.b16 %v2516, %v2512
    %v2569 = vpack.c.b16 %v2521, %v2517
    %v2570 = vpack.c.b16 %v2522, %v2518
    %v2571 = vpack.c.b16 %v2523, %v2519
    %v2572 = vpack.c.b16 %v2524, %v2520
    %v2573 = vpack.c.b16 %v2529, %v2525
    %v2574 = vpack.c.b16 %v2530, %v2526
    %v2575 = vpack.c.b16 %v2531, %v2527
    %v2576 = vpack.c.b16 %v2532, %v2528
    %v2577 = vpack.c.b16 %v2537, %v2533
    %v2578 = vpack.c.b16 %v2538, %v2534
    %v2579 = vpack.c.b16 %v2539, %v2535
    %v2580 = vpack.c.b16 %v2540, %v2536
    %v2581 = vpack.c.b16 %v2545, %v2541
    %v2582 = vpack.c.b16 %v2546, %v2542
    %v2583 = vpack.c.b16 %v2547, %v2543
    %v2584 = vpack.c.b16 %v2548, %v2544
    %v2585 = vpack.c.b16 %v2553, %v2549
    %v2586 = vpack.c.b16 %v2554, %v2550
    %v2587 = vpack.c.b16 %v2555, %v2551
    %v2588 = vpack.c.b16 %v2556, %v2552
    %2621 = vmatprep.subr.bf16.mxu0 %v2586
    %2622 = vmatpush1.bf16.msra.mxu0 %v2585
    %2623 = vmatprep.subr.bf16.mxu0 %v2582
    %2624 = vmatpush1.bf16.msra.mxu0 %v2581
    %2625 = vmatprep.subr.bf16.mxu0 %v2578
    %2626 = vmatpush1.bf16.msra.mxu0 %v2577
    %2627 = vmatprep.subr.bf16.mxu0 %v2574
    %2628 = vmatpush1.bf16.msra.mxu0 %v2573
    %2629 = vmatprep.subr.bf16.mxu0 %v2570
    %2630 = vmatpush1.bf16.msra.mxu0 %v2569
    %2631 = vmatprep.subr.bf16.mxu0 %v2566
    %2632 = vmatpush1.bf16.msra.mxu0 %v2565
    %2633 = vmatprep.subr.bf16.mxu0 %v2562
    %2634 = vmatpush1.bf16.msra.mxu0 %v2561
    %2635 = vmatprep.subr.bf16.mxu0 %v2558
    %2636 = vmatpush1.bf16.msra.mxu0 %v2557
    %2637 = vmatprep.subr.bf16.mxu0 0
    %2638 = vmatpush2.bf16.msra.mxu0 0
    %2639 = vmatprep.subr.bf16.mxu0 0
    %2640 = vmatpush2.bf16.msra.mxu0 0
    %2641 = vmatprep.subr.bf16.mxu0 0
    %2642 = vmatpush2.bf16.msra.mxu0 0
    %2643 = vmatprep.subr.bf16.mxu0 0
    %2644 = vmatpush2.bf16.msra.mxu0 0
    %2645 = vmatprep.subr.bf16.mxu0 0
    %2646 = vmatpush2.bf16.msra.mxu0 0
    %2647 = vmatprep.subr.bf16.mxu0 0
    %2648 = vmatpush2.bf16.msra.mxu0 0
    %2649 = vmatprep.subr.bf16.mxu0 0
    %2650 = vmatpush2.bf16.msra.mxu0 0
    %2651 = vmatprep.subr.bf16.mxu0 0
    %2652 = vmatpush2.bf16.msra.mxu0 0
    %2653 = vmatprep.mubr.bf16.mxu0 0
    %2654 = vmatmul.mubr.bf16.gmra.mxu0 %v2460
    %v2655 = vpop.f32.mrf.mxu0
    %v2656 = vadd.f32 0.0, %v2655
    %v2657 = vpop.f32.mrf.mxu0
    %v2658 = vadd.f32 0.0, %v2657
    %v2659 = vpop.f32.mrf.mxu0
    %v2660 = vpop.f32.mrf.mxu0
    %2661 = vdwg.mxu0
    %2662 = vmatprep.subr.bf16.mxu0 %v2588
    %2663 = vmatpush1.bf16.msra.mxu0 %v2587
    %2664 = vmatprep.subr.bf16.mxu0 %v2584
    %2665 = vmatpush1.bf16.msra.mxu0 %v2583
    %2666 = vmatprep.subr.bf16.mxu0 %v2580
    %2667 = vmatpush1.bf16.msra.mxu0 %v2579
    %2668 = vmatprep.subr.bf16.mxu0 %v2576
    %2669 = vmatpush1.bf16.msra.mxu0 %v2575
    %2670 = vmatprep.subr.bf16.mxu0 %v2572
    %2671 = vmatpush1.bf16.msra.mxu0 %v2571
    %2672 = vmatprep.subr.bf16.mxu0 %v2568
    %2673 = vmatpush1.bf16.msra.mxu0 %v2567
    %2674 = vmatprep.subr.bf16.mxu0 %v2564
    %2675 = vmatpush1.bf16.msra.mxu0 %v2563
    %2676 = vmatprep.subr.bf16.mxu0 %v2560
    %2677 = vmatpush1.bf16.msra.mxu0 %v2559
    %2678 = vmatprep.subr.bf16.mxu0 0
    %2679 = vmatpush2.bf16.msra.mxu0 0
    %2680 = vmatprep.subr.bf16.mxu0 0
    %2681 = vmatpush2.bf16.msra.mxu0 0
    %2682 = vmatprep.subr.bf16.mxu0 0
    %2683 = vmatpush2.bf16.msra.mxu0 0
    %2684 = vmatprep.subr.bf16.mxu0 0
    %2685 = vmatpush2.bf16.msra.mxu0 0
    %2686 = vmatprep.subr.bf16.mxu0 0
    %2687 = vmatpush2.bf16.msra.mxu0 0
    %2688 = vmatprep.subr.bf16.mxu0 0
    %2689 = vmatpush2.bf16.msra.mxu0 0
    %2690 = vmatprep.subr.bf16.mxu0 0
    %2691 = vmatpush2.bf16.msra.mxu0 0
    %2692 = vmatprep.subr.bf16.mxu0 0
    %2693 = vmatpush2.bf16.msra.mxu0 0
    %2694 = vmatprep.mubr.bf16.mxu0 0
    %2695 = vmatmul.mubr.bf16.gmra.mxu0 %v2460
    %v2696 = vpop.f32.mrf.mxu0
    %v2697 = vadd.f32 0.0, %v2696
    %v2698 = vpop.f32.mrf.mxu0
    %v2699 = vadd.f32 0.0, %v2698
    %v2700 = vpop.f32.mrf.mxu0
    %v2701 = vpop.f32.mrf.mxu0
    %2702 = vdwg.mxu0
    %v2704 = vlaneseq
    %v2705 = vshrl.u32 %v2704, 7
    %v2706 = vsub.s32 0, %v2705
    %v2707 = vrot.slane %v2427, %v2706
    %v2708 = vlaneseq
    %v2709 = vshrl.u32 %v2708, 7
    %v2710 = vsub.s32 1, %v2709
    %v2711 = vrot.slane %v2427, %v2710
    %v2712 = vlaneseq
    %v2713 = vshrl.u32 %v2712, 7
    %v2714 = vsub.s32 2, %v2713
    %v2715 = vrot.slane %v2427, %v2714
    %v2716 = vlaneseq
    %v2717 = vshrl.u32 %v2716, 7
    %v2718 = vsub.s32 3, %v2717
    %v2719 = vrot.slane %v2427, %v2718
    %v2724 = vadd.f32 %v2707, %v2656
    %v2725 = vadd.f32 %v2711, %v2658
    %v2726 = vadd.f32 %v2715, %v2697
    %v2727 = vadd.f32 %v2719, %v2699
    %v2728 = vld [vmem:[#allocation5] sm:$0xff]
    %v2729 = vld [vmem:[#allocation5 + $0x8] sm:$0xff]
    %v2730 = vld [vmem:[#allocation5 + $0x10] sm:$0xff]
    %v2731 = vld [vmem:[#allocation5 + $0x18] sm:$0xff]
    %v2732 = vld [vmem:[#allocation5 + $0x20] sm:$0xff]
    %v2733 = vld [vmem:[#allocation5 + $0x28] sm:$0xff]
    %v2734 = vld [vmem:[#allocation5 + $0x30] sm:$0xff]
    %v2735 = vld [vmem:[#allocation19] sm:$0xff]
    %v2736 = vld [vmem:[#allocation19 + $0x8] sm:$0xff]
    %v2737 = vld [vmem:[#allocation19 + $0x10] sm:$0xff]
    %v2738 = vld [vmem:[#allocation19 + $0x18] sm:$0xff]
    %v2739 = vld [vmem:[#allocation19 + $0x20] sm:$0xff]
    %v2740 = vld [vmem:[#allocation19 + $0x28] sm:$0xff]
    %v2741 = vld [vmem:[#allocation19 + $0x30] sm:$0xff]
    %v2742 = vld [vmem:[#allocation19 + $0x38] sm:$0xff]
    %v2743 = vld [vmem:[#allocation19 + $0x40] sm:$0xff]
    %v2744 = vld [vmem:[#allocation19 + $0x48] sm:$0xff]
    %v2745 = vld [vmem:[#allocation19 + $0x50] sm:$0xff]
    %v2746 = vld [vmem:[#allocation19 + $0x58] sm:$0xff]
    %v2747 = vld [vmem:[#allocation19 + $0x60] sm:$0xff]
    %v2748 = vld [vmem:[#allocation19 + $0x68] sm:$0xff]
    %v2749 = vld [vmem:[#allocation19 + $0x70] sm:$0xff]
    %v2750 = vld [vmem:[#allocation19 + $0x78] sm:$0xff]
    %v2751 = vld [vmem:[#allocation19 + $0x80] sm:$0xff]
    %v2752 = vld [vmem:[#allocation19 + $0x88] sm:$0xff]
    %v2753 = vld [vmem:[#allocation19 + $0x90] sm:$0xff]
    %v2754 = vld [vmem:[#allocation19 + $0x98] sm:$0xff]
    %v2755 = vld [vmem:[#allocation19 + $0xa0] sm:$0xff]
    %v2756 = vld [vmem:[#allocation19 + $0xa8] sm:$0xff]
    %v2757 = vld [vmem:[#allocation19 + $0xb0] sm:$0xff]
    %v2758 = vld [vmem:[#allocation19 + $0xb8] sm:$0xff]
    %v2759 = vld [vmem:[#allocation19 + $0xc0] sm:$0xff]
    %v2760 = vld [vmem:[#allocation19 + $0xc8] sm:$0xff]
    %v2761 = vld [vmem:[#allocation19 + $0xd0] sm:$0xff]
    %v2762 = vld [vmem:[#allocation19 + $0xd8] sm:$0xff]
    %v2763 = vld [vmem:[#allocation19 + $0xe0] sm:$0xff]
    %v2764 = vld [vmem:[#allocation19 + $0xe8] sm:$0xff]
    %v2765 = vld [vmem:[#allocation19 + $0xf0] sm:$0xff]
    %v2766 = vld [vmem:[#allocation19 + $0xf8] sm:$0xff]
    %v2767 = vpack.c.bf16 %v2729, %v2728
    %v2768 = vpack.c.bf16 %v2731, %v2730
    %v2769 = vpack.c.bf16 %v2733, %v2732
    %v2770 = vpack.c.bf16 %v2734, %v2734
    %v2803 = vunpack.c.l.b16 %v2735
    %v2804 = vunpack.c.h.b16 %v2735
    %v2805 = vunpack.c.l.b16 %v2736
    %v2806 = vunpack.c.h.b16 %v2736
    %v2807 = vunpack.c.l.b16 %v2737
    %v2808 = vunpack.c.h.b16 %v2737
    %v2809 = vunpack.c.l.b16 %v2738
    %v2810 = vunpack.c.h.b16 %v2738
    %v2811 = vunpack.c.l.b16 %v2739
    %v2812 = vunpack.c.h.b16 %v2739
    %v2813 = vunpack.c.l.b16 %v2740
    %v2814 = vunpack.c.h.b16 %v2740
    %v2815 = vunpack.c.l.b16 %v2741
    %v2816 = vunpack.c.h.b16 %v2741
    %v2817 = vunpack.c.l.b16 %v2742
    %v2818 = vunpack.c.h.b16 %v2742
    %v2819 = vunpack.c.l.b16 %v2743
    %v2820 = vunpack.c.h.b16 %v2743
    %v2821 = vunpack.c.l.b16 %v2744
    %v2822 = vunpack.c.h.b16 %v2744
    %v2823 = vunpack.c.l.b16 %v2745
    %v2824 = vunpack.c.h.b16 %v2745
    %v2825 = vunpack.c.l.b16 %v2746
    %v2826 = vunpack.c.h.b16 %v2746
    %v2827 = vunpack.c.l.b16 %v2747
    %v2828 = vunpack.c.h.b16 %v2747
    %v2829 = vunpack.c.l.b16 %v2748
    %v2830 = vunpack.c.h.b16 %v2748
    %v2831 = vunpack.c.l.b16 %v2749
    %v2832 = vunpack.c.h.b16 %v2749
    %v2833 = vunpack.c.l.b16 %v2750
    %v2834 = vunpack.c.h.b16 %v2750
    %v2835 = vunpack.c.l.b16 %v2751
    %v2836 = vunpack.c.h.b16 %v2751
    %v2837 = vunpack.c.l.b16 %v2752
    %v2838 = vunpack.c.h.b16 %v2752
    %v2839 = vunpack.c.l.b16 %v2753
    %v2840 = vunpack.c.h.b16 %v2753
    %v2841 = vunpack.c.l.b16 %v2754
    %v2842 = vunpack.c.h.b16 %v2754
    %v2843 = vunpack.c.l.b16 %v2755
    %v2844 = vunpack.c.h.b16 %v2755
    %v2845 = vunpack.c.l.b16 %v2756
    %v2846 = vunpack.c.h.b16 %v2756
    %v2847 = vunpack.c.l.b16 %v2757
    %v2848 = vunpack.c.h.b16 %v2757
    %v2849 = vunpack.c.l.b16 %v2758
    %v2850 = vunpack.c.h.b16 %v2758
    %v2851 = vunpack.c.l.b16 %v2759
    %v2852 = vunpack.c.h.b16 %v2759
    %v2853 = vunpack.c.l.b16 %v2760
    %v2854 = vunpack.c.h.b16 %v2760
    %v2855 = vunpack.c.l.b16 %v2761
    %v2856 = vunpack.c.h.b16 %v2761
    %v2857 = vunpack.c.l.b16 %v2762
    %v2858 = vunpack.c.h.b16 %v2762
    %v2859 = vunpack.c.l.b16 %v2763
    %v2860 = vunpack.c.h.b16 %v2763
    %v2861 = vunpack.c.l.b16 %v2764
    %v2862 = vunpack.c.h.b16 %v2764
    %v2863 = vunpack.c.l.b16 %v2765
    %v2864 = vunpack.c.h.b16 %v2765
    %v2865 = vunpack.c.l.b16 %v2766
    %v2866 = vunpack.c.h.b16 %v2766
    %v2867 = vpack.c.b16 %v2807, %v2803
    %v2868 = vpack.c.b16 %v2808, %v2804
    %v2869 = vpack.c.b16 %v2809, %v2805
    %v2870 = vpack.c.b16 %v2810, %v2806
    %v2871 = vpack.c.b16 %v2815, %v2811
    %v2872 = vpack.c.b16 %v2816, %v2812
    %v2873 = vpack.c.b16 %v2817, %v2813
    %v2874 = vpack.c.b16 %v2818, %v2814
    %v2875 = vpack.c.b16 %v2823, %v2819
    %v2876 = vpack.c.b16 %v2824, %v2820
    %v2877 = vpack.c.b16 %v2825, %v2821
    %v2878 = vpack.c.b16 %v2826, %v2822
    %v2879 = vpack.c.b16 %v2831, %v2827
    %v2880 = vpack.c.b16 %v2832, %v2828
    %v2881 = vpack.c.b16 %v2833, %v2829
    %v2882 = vpack.c.b16 %v2834, %v2830
    %v2883 = vpack.c.b16 %v2839, %v2835
    %v2884 = vpack.c.b16 %v2840, %v2836
    %v2885 = vpack.c.b16 %v2841, %v2837
    %v2886 = vpack.c.b16 %v2842, %v2838
    %v2887 = vpack.c.b16 %v2847, %v2843
    %v2888 = vpack.c.b16 %v2848, %v2844
    %v2889 = vpack.c.b16 %v2849, %v2845
    %v2890 = vpack.c.b16 %v2850, %v2846
    %v2891 = vpack.c.b16 %v2855, %v2851
    %v2892 = vpack.c.b16 %v2856, %v2852
    %v2893 = vpack.c.b16 %v2857, %v2853
    %v2894 = vpack.c.b16 %v2858, %v2854
    %v2895 = vpack.c.b16 %v2863, %v2859
    %v2896 = vpack.c.b16 %v2864, %v2860
    %v2897 = vpack.c.b16 %v2865, %v2861
    %v2898 = vpack.c.b16 %v2866, %v2862
    %2931 = vmatprep.subr.bf16.mxu0 %v2896
    %2932 = vmatpush1.bf16.msra.mxu0 %v2895
    %2933 = vmatprep.subr.bf16.mxu0 %v2892
    %2934 = vmatpush1.bf16.msra.mxu0 %v2891
    %2935 = vmatprep.subr.bf16.mxu0 %v2888
    %2936 = vmatpush1.bf16.msra.mxu0 %v2887
    %2937 = vmatprep.subr.bf16.mxu0 %v2884
    %2938 = vmatpush1.bf16.msra.mxu0 %v2883
    %2939 = vmatprep.subr.bf16.mxu0 %v2880
    %2940 = vmatpush1.bf16.msra.mxu0 %v2879
    %2941 = vmatprep.subr.bf16.mxu0 %v2876
    %2942 = vmatpush1.bf16.msra.mxu0 %v2875
    %2943 = vmatprep.subr.bf16.mxu0 %v2872
    %2944 = vmatpush1.bf16.msra.mxu0 %v2871
    %2945 = vmatprep.subr.bf16.mxu0 %v2868
    %2946 = vmatpush1.bf16.msra.mxu0 %v2867
    %2947 = vmatprep.subr.bf16.mxu0 0
    %2948 = vmatpush2.bf16.msra.mxu0 0
    %2949 = vmatprep.subr.bf16.mxu0 0
    %2950 = vmatpush2.bf16.msra.mxu0 0
    %2951 = vmatprep.subr.bf16.mxu0 0
    %2952 = vmatpush2.bf16.msra.mxu0 0
    %2953 = vmatprep.subr.bf16.mxu0 0
    %2954 = vmatpush2.bf16.msra.mxu0 0
    %2955 = vmatprep.subr.bf16.mxu0 0
    %2956 = vmatpush2.bf16.msra.mxu0 0
    %2957 = vmatprep.subr.bf16.mxu0 0
    %2958 = vmatpush2.bf16.msra.mxu0 0
    %2959 = vmatprep.subr.bf16.mxu0 0
    %2960 = vmatpush2.bf16.msra.mxu0 0
    %2961 = vmatprep.subr.bf16.mxu0 0
    %2962 = vmatpush2.bf16.msra.mxu0 0
    %2963 = vmatprep.mubr.bf16.mxu0 0
    %2964 = vmatmul.mubr.bf16.gmra.mxu0 %v2767
    %v2965 = vpop.f32.mrf.mxu0
    %v2966 = vadd.f32 0.0, %v2965
    %v2967 = vpop.f32.mrf.mxu0
    %v2968 = vadd.f32 0.0, %v2967
    %v2969 = vpop.f32.mrf.mxu0
    %v2970 = vadd.f32 0.0, %v2969
    %v2971 = vpop.f32.mrf.mxu0
    %v2972 = vadd.f32 0.0, %v2971
    %2973 = vmatprep.mubr.bf16.mxu0 0
    %2974 = vmatmul.mubr.bf16.gmra.mxu0 %v2768
    %v2975 = vpop.f32.mrf.mxu0
    %v2976 = vadd.f32 0.0, %v2975
    %v2977 = vpop.f32.mrf.mxu0
    %v2978 = vadd.f32 0.0, %v2977
    %v2979 = vpop.f32.mrf.mxu0
    %v2980 = vadd.f32 0.0, %v2979
    %v2981 = vpop.f32.mrf.mxu0
    %v2982 = vadd.f32 0.0, %v2981
    %2983 = vmatprep.mubr.bf16.mxu0 0
    %2984 = vmatmul.mubr.bf16.gmra.mxu0 %v2769
    %v2985 = vpop.f32.mrf.mxu0
    %v2986 = vadd.f32 0.0, %v2985
    %v2987 = vpop.f32.mrf.mxu0
    %v2988 = vadd.f32 0.0, %v2987
    %v2989 = vpop.f32.mrf.mxu0
    %v2990 = vadd.f32 0.0, %v2989
    %v2991 = vpop.f32.mrf.mxu0
    %v2992 = vadd.f32 0.0, %v2991
    %2993 = vmatprep.mubr.bf16.mxu0 0
    %2994 = vmatmul.mubr.bf16.gmra.mxu0 %v2770
    %v2995 = vpop.f32.mrf.mxu0
    %v2996 = vadd.f32 0.0, %v2995
    %v2997 = vpop.f32.mrf.mxu0
    %v2998 = vadd.f32 0.0, %v2997
    %v2999 = vpop.f32.mrf.mxu0
    %v3000 = vpop.f32.mrf.mxu0
    %3001 = vdwg.mxu0
    %3002 = vmatprep.subr.bf16.mxu0 %v2898
    %3003 = vmatpush1.bf16.msra.mxu0 %v2897
    %3004 = vmatprep.subr.bf16.mxu0 %v2894
    %3005 = vmatpush1.bf16.msra.mxu0 %v2893
    %3006 = vmatprep.subr.bf16.mxu0 %v2890
    %3007 = vmatpush1.bf16.msra.mxu0 %v2889
    %3008 = vmatprep.subr.bf16.mxu0 %v2886
    %3009 = vmatpush1.bf16.msra.mxu0 %v2885
    %3010 = vmatprep.subr.bf16.mxu0 %v2882
    %3011 = vmatpush1.bf16.msra.mxu0 %v2881
    %3012 = vmatprep.subr.bf16.mxu0 %v2878
    %3013 = vmatpush1.bf16.msra.mxu0 %v2877
    %3014 = vmatprep.subr.bf16.mxu0 %v2874
    %3015 = vmatpush1.bf16.msra.mxu0 %v2873
    %3016 = vmatprep.subr.bf16.mxu0 %v2870
    %3017 = vmatpush1.bf16.msra.mxu0 %v2869
    %3018 = vmatprep.subr.bf16.mxu0 0
    %3019 = vmatpush2.bf16.msra.mxu0 0
    %3020 = vmatprep.subr.bf16.mxu0 0
    %3021 = vmatpush2.bf16.msra.mxu0 0
    %3022 = vmatprep.subr.bf16.mxu0 0
    %3023 = vmatpush2.bf16.msra.mxu0 0
    %3024 = vmatprep.subr.bf16.mxu0 0
    %3025 = vmatpush2.bf16.msra.mxu0 0
    %3026 = vmatprep.subr.bf16.mxu0 0
    %3027 = vmatpush2.bf16.msra.mxu0 0
    %3028 = vmatprep.subr.bf16.mxu0 0
    %3029 = vmatpush2.bf16.msra.mxu0 0
    %3030 = vmatprep.subr.bf16.mxu0 0
    %3031 = vmatpush2.bf16.msra.mxu0 0
    %3032 = vmatprep.subr.bf16.mxu0 0
    %3033 = vmatpush2.bf16.msra.mxu0 0
    %3034 = vmatprep.mubr.bf16.mxu0 0
    %3035 = vmatmul.mubr.bf16.gmra.mxu0 %v2767
    %v3036 = vpop.f32.mrf.mxu0
    %v3037 = vadd.f32 0.0, %v3036
    %v3038 = vpop.f32.mrf.mxu0
    %v3039 = vadd.f32 0.0, %v3038
    %v3040 = vpop.f32.mrf.mxu0
    %v3041 = vadd.f32 0.0, %v3040
    %v3042 = vpop.f32.mrf.mxu0
    %v3043 = vadd.f32 0.0, %v3042
    %3044 = vmatprep.mubr.bf16.mxu0 0
    %3045 = vmatmul.mubr.bf16.gmra.mxu0 %v2768
    %v3046 = vpop.f32.mrf.mxu0
    %v3047 = vadd.f32 0.0, %v3046
    %v3048 = vpop.f32.mrf.mxu0
    %v3049 = vadd.f32 0.0, %v3048
    %v3050 = vpop.f32.mrf.mxu0
    %v3051 = vadd.f32 0.0, %v3050
    %v3052 = vpop.f32.mrf.mxu0
    %v3053 = vadd.f32 0.0, %v3052
    %3054 = vmatprep.mubr.bf16.mxu0 0
    %3055 = vmatmul.mubr.bf16.gmra.mxu0 %v2769
    %v3056 = vpop.f32.mrf.mxu0
    %v3057 = vadd.f32 0.0, %v3056
    %v3058 = vpop.f32.mrf.mxu0
    %v3059 = vadd.f32 0.0, %v3058
    %v3060 = vpop.f32.mrf.mxu0
    %v3061 = vadd.f32 0.0, %v3060
    %v3062 = vpop.f32.mrf.mxu0
    %v3063 = vadd.f32 0.0, %v3062
    %3064 = vmatprep.mubr.bf16.mxu0 0
    %3065 = vmatmul.mubr.bf16.gmra.mxu0 %v2770
    %v3066 = vpop.f32.mrf.mxu0
    %v3067 = vadd.f32 0.0, %v3066
    %v3068 = vpop.f32.mrf.mxu0
    %v3069 = vadd.f32 0.0, %v3068
    %v3070 = vpop.f32.mrf.mxu0
    %v3071 = vpop.f32.mrf.mxu0
    %3072 = vdwg.mxu0
    %v3073 = vadd.f32 %v2966, %v2724
    %v3074 = vadd.f32 %v2968, %v2725
    %v3075 = vadd.f32 %v3037, %v2726
    %v3076 = vadd.f32 %v3039, %v2727
    %v3077 = vadd.f32 %v2970, %v2724
    %v3078 = vadd.f32 %v2972, %v2725
    %v3079 = vadd.f32 %v3041, %v2726
    %v3080 = vadd.f32 %v3043, %v2727
    %v3081 = vadd.f32 %v2976, %v2724
    %v3082 = vadd.f32 %v2978, %v2725
    %v3083 = vadd.f32 %v3047, %v2726
    %v3084 = vadd.f32 %v3049, %v2727
    %v3085 = vadd.f32 %v2980, %v2724
    %v3086 = vadd.f32 %v2982, %v2725
    %v3087 = vadd.f32 %v3051, %v2726
    %v3088 = vadd.f32 %v3053, %v2727
    %v3089 = vadd.f32 %v2986, %v2724
    %v3090 = vadd.f32 %v2988, %v2725
    %v3091 = vadd.f32 %v3057, %v2726
    %v3092 = vadd.f32 %v3059, %v2727
    %v3093 = vadd.f32 %v2990, %v2724
    %v3094 = vadd.f32 %v2992, %v2725
    %v3095 = vadd.f32 %v3061, %v2726
    %v3096 = vadd.f32 %v3063, %v2727
    %v3097 = vadd.f32 %v2996, %v2724
    %v3098 = vadd.f32 %v2998, %v2725
    %v3099 = vadd.f32 %v3067, %v2726
    %v3100 = vadd.f32 %v3069, %v2727
    %v3101 = vxor.u32 %v3074, 2147483648
    %v3102 = vxor.u32 %v3078, 2147483648
    %v3103 = vxor.u32 %v3082, 2147483648
    %v3104 = vxor.u32 %v3086, 2147483648
    %v3105 = vxor.u32 %v3090, 2147483648
    %v3106 = vxor.u32 %v3094, 2147483648
    %v3107 = vxor.u32 %v3098, 2147483648
    %v3108 = vmul.f32 %v3101, 1.442695
    %v3109 = vpow.pop %v3108
    %v3110 = vmul.f32 %v3102, 1.442695
    %v3111 = vpow.pop %v3110
    %v3112 = vmul.f32 %v3103, 1.442695
    %v3113 = vpow.pop %v3112
    %v3114 = vmul.f32 %v3104, 1.442695
    %v3115 = vpow.pop %v3114
    %v3116 = vmul.f32 %v3105, 1.442695
    %v3117 = vpow.pop %v3116
    %v3118 = vmul.f32 %v3106, 1.442695
    %v3119 = vpow.pop %v3118
    %v3120 = vmul.f32 %v3107, 1.442695
    %v3121 = vpow.pop %v3120
    %v3122 = vadd.f32 %v3109, 1.0
    %v3123 = vadd.f32 %v3111, 1.0
    %v3124 = vadd.f32 %v3113, 1.0
    %v3125 = vadd.f32 %v3115, 1.0
    %v3126 = vadd.f32 %v3117, 1.0
    %v3127 = vadd.f32 %v3119, 1.0
    %v3128 = vadd.f32 %v3121, 1.0
    %v3129 = vrcp.pop %v3122
    %v3130 = vmul.f32 1.0, %v3129
    %v3131 = vrcp.pop %v3123
    %v3132 = vmul.f32 1.0, %v3131
    %v3133 = vrcp.pop %v3124
    %v3134 = vmul.f32 1.0, %v3133
    %v3135 = vrcp.pop %v3125
    %v3136 = vmul.f32 1.0, %v3135
    %v3137 = vrcp.pop %v3126
    %v3138 = vmul.f32 1.0, %v3137
    %v3139 = vrcp.pop %v3127
    %v3140 = vmul.f32 1.0, %v3139
    %v3141 = vrcp.pop %v3128
    %v3142 = vmul.f32 1.0, %v3141
    %3143 = vst [vmem:[#allocation6] sm:$0xff] %v3130
    %3144 = vst [vmem:[#allocation6 + $0x18] sm:$0xff] %v3132
    %3145 = vst [vmem:[#allocation6 + $0x30] sm:$0xff] %v3134
    %3146 = vst [vmem:[#allocation6 + $0x48] sm:$0xff] %v3136
    %3147 = vst [vmem:[#allocation6 + $0x60] sm:$0xff] %v3138
    %3148 = vst [vmem:[#allocation6 + $0x78] sm:$0xff] %v3140
    %3149 = vst [vmem:[#allocation6 + $0x90] sm:$0xff] %v3142
    %v3150 = vxor.u32 %v3073, 2147483648
    %v3151 = vxor.u32 %v3077, 2147483648
    %v3152 = vxor.u32 %v3081, 2147483648
    %v3153 = vxor.u32 %v3085, 2147483648
    %v3154 = vxor.u32 %v3089, 2147483648
    %v3155 = vxor.u32 %v3093, 2147483648
    %v3156 = vxor.u32 %v3097, 2147483648
    %v3157 = vmul.f32 %v3150, 1.442695
    %v3158 = vpow.pop %v3157
    %v3159 = vmul.f32 %v3151, 1.442695
    %v3160 = vpow.pop %v3159
    %v3161 = vmul.f32 %v3152, 1.442695
    %v3162 = vpow.pop %v3161
    %v3163 = vmul.f32 %v3153, 1.442695
    %v3164 = vpow.pop %v3163
    %v3165 = vmul.f32 %v3154, 1.442695
    %v3166 = vpow.pop %v3165
    %v3167 = vmul.f32 %v3155, 1.442695
    %v3168 = vpow.pop %v3167
    %v3169 = vmul.f32 %v3156, 1.442695
    %v3170 = vpow.pop %v3169
    %v3171 = vadd.f32 %v3158, 1.0
    %v3172 = vadd.f32 %v3160, 1.0
    %v3173 = vadd.f32 %v3162, 1.0
    %v3174 = vadd.f32 %v3164, 1.0
    %v3175 = vadd.f32 %v3166, 1.0
    %v3176 = vadd.f32 %v3168, 1.0
    %v3177 = vadd.f32 %v3170, 1.0
    %v3178 = vrcp.pop %v3171
    %v3179 = vmul.f32 1.0, %v3178
    %v3180 = vrcp.pop %v3172
    %v3181 = vmul.f32 1.0, %v3180
    %v3182 = vrcp.pop %v3173
    %v3183 = vmul.f32 1.0, %v3182
    %v3184 = vrcp.pop %v3174
    %v3185 = vmul.f32 1.0, %v3184
    %v3186 = vrcp.pop %v3175
    %v3187 = vmul.f32 1.0, %v3186
    %v3188 = vrcp.pop %v3176
    %v3189 = vmul.f32 1.0, %v3188
    %v3190 = vrcp.pop %v3177
    %v3191 = vmul.f32 1.0, %v3190
    %v3192 = vtanh.pop %v3075
    %v3193 = vtanh.pop %v3079
    %v3194 = vtanh.pop %v3083
    %v3195 = vtanh.pop %v3087
    %v3196 = vtanh.pop %v3091
    %v3197 = vtanh.pop %v3095
    %v3198 = vtanh.pop %v3099
    %v3199 = vmul.f32 %v3179, %v3192
    %v3200 = vmul.f32 %v3181, %v3193
    %v3201 = vmul.f32 %v3183, %v3194
    %v3202 = vmul.f32 %v3185, %v3195
    %v3203 = vmul.f32 %v3187, %v3196
    %v3204 = vmul.f32 %v3189, %v3197
    %v3205 = vmul.f32 %v3191, %v3198
    %3206 = vst [vmem:[#allocation6 + $0x8] sm:$0xff] %v3199
    %3207 = vst [vmem:[#allocation6 + $0x20] sm:$0xff] %v3200
    %3208 = vst [vmem:[#allocation6 + $0x38] sm:$0xff] %v3201
    %3209 = vst [vmem:[#allocation6 + $0x50] sm:$0xff] %v3202
    %3210 = vst [vmem:[#allocation6 + $0x68] sm:$0xff] %v3203
    %3211 = vst [vmem:[#allocation6 + $0x80] sm:$0xff] %v3204
    %3212 = vst [vmem:[#allocation6 + $0x98] sm:$0xff] %v3205
    %v3213 = vxor.u32 %v3076, 2147483648
    %v3214 = vxor.u32 %v3080, 2147483648
    %v3215 = vxor.u32 %v3084, 2147483648
    %v3216 = vxor.u32 %v3088, 2147483648
    %v3217 = vxor.u32 %v3092, 2147483648
    %v3218 = vxor.u32 %v3096, 2147483648
    %v3219 = vxor.u32 %v3100, 2147483648
    %v3220 = vmul.f32 %v3213, 1.442695
    %v3221 = vpow.pop %v3220
    %v3222 = vmul.f32 %v3214, 1.442695
    %v3223 = vpow.pop %v3222
    %v3224 = vmul.f32 %v3215, 1.442695
    %v3225 = vpow.pop %v3224
    %v3226 = vmul.f32 %v3216, 1.442695
    %v3227 = vpow.pop %v3226
    %v3228 = vmul.f32 %v3217, 1.442695
    %v3229 = vpow.pop %v3228
    %v3230 = vmul.f32 %v3218, 1.442695
    %v3231 = vpow.pop %v3230
    %v3232 = vmul.f32 %v3219, 1.442695
    %v3233 = vpow.pop %v3232
    %v3234 = vadd.f32 %v3221, 1.0
    %v3235 = vadd.f32 %v3223, 1.0
    %v3236 = vadd.f32 %v3225, 1.0
    %v3237 = vadd.f32 %v3227, 1.0
    %v3238 = vadd.f32 %v3229, 1.0
    %v3239 = vadd.f32 %v3231, 1.0
    %v3240 = vadd.f32 %v3233, 1.0
    %v3241 = vrcp.pop %v3234
    %v3242 = vmul.f32 1.0, %v3241
    %v3243 = vrcp.pop %v3235
    %v3244 = vmul.f32 1.0, %v3243
    %v3245 = vrcp.pop %v3236
    %v3246 = vmul.f32 1.0, %v3245
    %v3247 = vrcp.pop %v3237
    %v3248 = vmul.f32 1.0, %v3247
    %v3249 = vrcp.pop %v3238
    %v3250 = vmul.f32 1.0, %v3249
    %v3251 = vrcp.pop %v3239
    %v3252 = vmul.f32 1.0, %v3251
    %v3253 = vrcp.pop %v3240
    %v3254 = vmul.f32 1.0, %v3253
    %3255 = vst [vmem:[#allocation6 + $0x10] sm:$0xff] %v3242
    %3256 = vst [vmem:[#allocation6 + $0x28] sm:$0xff] %v3244
    %3257 = vst [vmem:[#allocation6 + $0x40] sm:$0xff] %v3246
    %3258 = vst [vmem:[#allocation6 + $0x58] sm:$0xff] %v3248
    %3259 = vst [vmem:[#allocation6 + $0x70] sm:$0xff] %v3250
    %3260 = vst [vmem:[#allocation6 + $0x88] sm:$0xff] %v3252
    %3261 = vst [vmem:[#allocation6 + $0xa0] sm:$0xff] %v3254
    %v3262 = vld [vmem:[#allocation6] sm:$0xff]
    %v3263 = vld [vmem:[#allocation6 + $0x8] sm:$0xff]
    %v3264 = vld [vmem:[#allocation6 + $0x10] sm:$0xff]
    %v3265 = vmul.f32 %v3262, %v1845
    %v3266 = vadd.f32 %v3265, %v3263
    %v3267 = vtanh.pop %v3266
    %v3268 = vmul.f32 %v3264, %v3267
    %s3269 = scalar_lea.vmem [#allocation26], 8
    %3270 = vst [vmem:[%s3269] sm:$0xff] %v3266
    %s3271 = scalar_lea.vmem [#allocation7], 8
    %3272 = vst [vmem:[%s3271] sm:$0xff] %v3268
    %s3273 = scalar_lea.vmem [#allocation6], 24
    %v3274 = vld [vmem:[%s3273] sm:$0xff]
    %v3275 = vld [vmem:[%s3273 + $0x8] sm:$0xff]
    %v3276 = vld [vmem:[%s3273 + $0x10] sm:$0xff]
    %v3277 = vmul.f32 %v3274, %v3266
    %v3278 = vadd.f32 %v3277, %v3275
    %v3279 = vtanh.pop %v3278
    %v3280 = vmul.f32 %v3276, %v3279
    %s3281 = scalar_lea.vmem [#allocation26], 16
    %3282 = vst [vmem:[%s3281] sm:$0xff] %v3278
    %s3283 = scalar_lea.vmem [#allocation7], 16
    %3284 = vst [vmem:[%s3283] sm:$0xff] %v3280
    %s3285 = scalar_lea.vmem [#allocation6], 48
    %v3286 = vld [vmem:[%s3285] sm:$0xff]
    %v3287 = vld [vmem:[%s3285 + $0x8] sm:$0xff]
    %v3288 = vld [vmem:[%s3285 + $0x10] sm:$0xff]
    %v3289 = vmul.f32 %v3286, %v3278
    %v3290 = vadd.f32 %v3289, %v3287
    %v3291 = vtanh.pop %v3290
    %v3292 = vmul.f32 %v3288, %v3291
    %s3293 = scalar_lea.vmem [#allocation26], 24
    %3294 = vst [vmem:[%s3293] sm:$0xff] %v3290
    %s3295 = scalar_lea.vmem [#allocation7], 24
    %3296 = vst [vmem:[%s3295] sm:$0xff] %v3292
    %s3297 = scalar_lea.vmem [#allocation6], 72
    %v3298 = vld [vmem:[%s3297] sm:$0xff]
    %v3299 = vld [vmem:[%s3297 + $0x8] sm:$0xff]
    %v3300 = vld [vmem:[%s3297 + $0x10] sm:$0xff]
    %v3301 = vmul.f32 %v3298, %v3290
    %v3302 = vadd.f32 %v3301, %v3299
    %v3303 = vtanh.pop %v3302
    %v3304 = vmul.f32 %v3300, %v3303
    %s3305 = scalar_lea.vmem [#allocation26], 32
    %3306 = vst [vmem:[%s3305] sm:$0xff] %v3302
    %s3307 = scalar_lea.vmem [#allocation7], 32
    %3308 = vst [vmem:[%s3307] sm:$0xff] %v3304
    %s3309 = scalar_lea.vmem [#allocation6], 96
    %v3310 = vld [vmem:[%s3309] sm:$0xff]
    %v3311 = vld [vmem:[%s3309 + $0x8] sm:$0xff]
    %v3312 = vld [vmem:[%s3309 + $0x10] sm:$0xff]
    %v3313 = vmul.f32 %v3310, %v3302
    %v3314 = vadd.f32 %v3313, %v3311
    %v3315 = vtanh.pop %v3314
    %v3316 = vmul.f32 %v3312, %v3315
    %s3317 = scalar_lea.vmem [#allocation26], 40
    %3318 = vst [vmem:[%s3317] sm:$0xff] %v3314
    %s3319 = scalar_lea.vmem [#allocation7], 40
    %3320 = vst [vmem:[%s3319] sm:$0xff] %v3316
    %s3321 = scalar_lea.vmem [#allocation6], 120
    %v3322 = vld [vmem:[%s3321] sm:$0xff]
    %v3323 = vld [vmem:[%s3321 + $0x8] sm:$0xff]
    %v3324 = vld [vmem:[%s3321 + $0x10] sm:$0xff]
    %v3325 = vmul.f32 %v3322, %v3314
    %v3326 = vadd.f32 %v3325, %v3323
    %v3327 = vtanh.pop %v3326
    %v3328 = vmul.f32 %v3324, %v3327
    %s3329 = scalar_lea.vmem [#allocation26], 48
    %3330 = vst [vmem:[%s3329] sm:$0xff] %v3326
    %s3331 = scalar_lea.vmem [#allocation7], 48
    %3332 = vst [vmem:[%s3331] sm:$0xff] %v3328
    %s3333 = scalar_lea.vmem [#allocation6], 144
    %v3334 = vld [vmem:[%s3333] sm:$0xff]
    %v3335 = vld [vmem:[%s3333 + $0x8] sm:$0xff]
    %v3336 = vld [vmem:[%s3333 + $0x10] sm:$0xff]
    %v3337 = vmul.f32 %v3334, %v3326
    %v3338 = vadd.f32 %v3337, %v3335
    %v3339 = vtanh.pop %v3338
    %v3340 = vmul.f32 %v3336, %v3339
    %s3341 = scalar_lea.vmem [#allocation26], 56
    %3342 = vst [vmem:[%s3341] sm:$0xff] %v3338
    %s3343 = scalar_lea.vmem [#allocation7], 56
    %3344 = vst [vmem:[%s3343] sm:$0xff] %v3340
    %v3345 = vld [vmem:[#allocation7] sm:$0xff]
    %v3346 = vld [vmem:[#allocation7 + $0x8] sm:$0xff]
    %v3347 = vld [vmem:[#allocation7 + $0x10] sm:$0xff]
    %v3348 = vld [vmem:[#allocation7 + $0x18] sm:$0xff]
    %v3349 = vld [vmem:[#allocation7 + $0x20] sm:$0xff]
    %v3350 = vld [vmem:[#allocation7 + $0x28] sm:$0xff]
    %v3351 = vld [vmem:[#allocation7 + $0x30] sm:$0xff]
    %v3352 = vld [vmem:[#allocation7 + $0x38] sm:$0xff]
    %v3353 = vld [vmem:[#allocation22] sm:$0xf]
    %v3354 = vld [vmem:[#allocation22 + $0x4] sm:$0xf]
    %v3355 = vld [vmem:[#allocation22 + $0x8] sm:$0xf]
    %v3356 = vld [vmem:[#allocation22 + $0xc] sm:$0xf]
    %v3357 = vld [vmem:[#allocation22 + $0x10] sm:$0xf]
    %v3358 = vld [vmem:[#allocation22 + $0x14] sm:$0xf]
    %v3359 = vld [vmem:[#allocation22 + $0x18] sm:$0xf]
    %v3360 = vld [vmem:[#allocation22 + $0x1c] sm:$0xf]
    %v3361 = vld [vmem:[#allocation22 + $0x20] sm:$0xf]
    %v3362 = vld [vmem:[#allocation22 + $0x24] sm:$0xf]
    %v3363 = vld [vmem:[#allocation22 + $0x28] sm:$0xf]
    %v3364 = vld [vmem:[#allocation22 + $0x2c] sm:$0xf]
    %v3365 = vld [vmem:[#allocation22 + $0x30] sm:$0xf]
    %v3366 = vld [vmem:[#allocation22 + $0x34] sm:$0xf]
    %v3367 = vld [vmem:[#allocation22 + $0x38] sm:$0xf]
    %v3368 = vld [vmem:[#allocation22 + $0x3c] sm:$0xf]
    %v3369 = vpack.c.bf16 %v3346, %v3345
    %v3370 = vpack.c.bf16 %v3348, %v3347
    %v3371 = vpack.c.bf16 %v3350, %v3349
    %v3372 = vpack.c.bf16 %v3352, %v3351
    %v3373 = vld [vmem:[%s11] sm:$0x1]
    %v3375 = vlaneseq
    %v3376 = vshrl.u32 %v3375, 7
    %v3377 = vsub.s32 0, %v3376
    %v3378 = vrot.slane %v3373, %v3377
    %v3396 = vunpack.c.l.b16 %v3353
    %v3397 = vunpack.c.l.b16 %v3354
    %v3398 = vunpack.c.l.b16 %v3355
    %v3399 = vunpack.c.l.b16 %v3356
    %v3400 = vunpack.c.l.b16 %v3357
    %v3401 = vunpack.c.l.b16 %v3358
    %v3402 = vunpack.c.l.b16 %v3359
    %v3403 = vunpack.c.l.b16 %v3360
    %v3404 = vunpack.c.l.b16 %v3361
    %v3405 = vunpack.c.l.b16 %v3362
    %v3406 = vunpack.c.l.b16 %v3363
    %v3407 = vunpack.c.l.b16 %v3364
    %v3408 = vunpack.c.l.b16 %v3365
    %v3409 = vunpack.c.l.b16 %v3366
    %v3410 = vunpack.c.l.b16 %v3367
    %v3411 = vunpack.c.l.b16 %v3368
    %v3412 = vpack.c.b16 %v3397, %v3396
    %v3413 = vpack.c.b16 %v3399, %v3398
    %v3414 = vpack.c.b16 %v3401, %v3400
    %v3415 = vpack.c.b16 %v3403, %v3402
    %v3416 = vpack.c.b16 %v3405, %v3404
    %v3417 = vpack.c.b16 %v3407, %v3406
    %v3418 = vpack.c.b16 %v3409, %v3408
    %v3419 = vpack.c.b16 %v3411, %v3410
    %3428 = vmatprep.subr.bf16.mxu0 0
    %3429 = vmatpush1.bf16.msra.mxu0 %v3419
    %3430 = vmatprep.subr.bf16.mxu0 0
    %3431 = vmatpush1.bf16.msra.mxu0 %v3418
    %3432 = vmatprep.subr.bf16.mxu0 0
    %3433 = vmatpush1.bf16.msra.mxu0 %v3417
    %3434 = vmatprep.subr.bf16.mxu0 0
    %3435 = vmatpush1.bf16.msra.mxu0 %v3416
    %3436 = vmatprep.subr.bf16.mxu0 0
    %3437 = vmatpush1.bf16.msra.mxu0 %v3415
    %3438 = vmatprep.subr.bf16.mxu0 0
    %3439 = vmatpush1.bf16.msra.mxu0 %v3414
    %3440 = vmatprep.subr.bf16.mxu0 0
    %3441 = vmatpush1.bf16.msra.mxu0 %v3413
    %3442 = vmatprep.subr.bf16.mxu0 0
    %3443 = vmatpush1.bf16.msra.mxu0 %v3412
    %3444 = vmatprep.subr.bf16.mxu0 0
    %3445 = vmatpush2.bf16.msra.mxu0 0
    %3446 = vmatprep.subr.bf16.mxu0 0
    %3447 = vmatpush2.bf16.msra.mxu0 0
    %3448 = vmatprep.subr.bf16.mxu0 0
    %3449 = vmatpush2.bf16.msra.mxu0 0
    %3450 = vmatprep.subr.bf16.mxu0 0
    %3451 = vmatpush2.bf16.msra.mxu0 0
    %3452 = vmatprep.subr.bf16.mxu0 0
    %3453 = vmatpush2.bf16.msra.mxu0 0
    %3454 = vmatprep.subr.bf16.mxu0 0
    %3455 = vmatpush2.bf16.msra.mxu0 0
    %3456 = vmatprep.subr.bf16.mxu0 0
    %3457 = vmatpush2.bf16.msra.mxu0 0
    %3458 = vmatprep.subr.bf16.mxu0 0
    %3459 = vmatpush2.bf16.msra.mxu0 0
    %3460 = vmatprep.mubr.bf16.mxu0 0
    %3461 = vmatmul.mubr.bf16.gmra.mxu0 %v3369
    %v3462 = vpop.f32.mrf.mxu0
    %v3463 = vadd.f32 %v3378, %v3462
    %v3464 = vpop.f32.mrf.mxu0
    %v3465 = vpop.f32.mrf.mxu0
    %v3466 = vadd.f32 %v3378, %v3465
    %v3467 = vpop.f32.mrf.mxu0
    %3468 = vmatprep.mubr.bf16.mxu0 0
    %3469 = vmatmul.mubr.bf16.gmra.mxu0 %v3370
    %v3470 = vpop.f32.mrf.mxu0
    %v3471 = vadd.f32 %v3378, %v3470
    %v3472 = vpop.f32.mrf.mxu0
    %v3473 = vpop.f32.mrf.mxu0
    %v3474 = vadd.f32 %v3378, %v3473
    %v3475 = vpop.f32.mrf.mxu0
    %3476 = vmatprep.mubr.bf16.mxu0 0
    %3477 = vmatmul.mubr.bf16.gmra.mxu0 %v3371
    %v3478 = vpop.f32.mrf.mxu0
    %v3479 = vadd.f32 %v3378, %v3478
    %v3480 = vpop.f32.mrf.mxu0
    %v3481 = vpop.f32.mrf.mxu0
    %v3482 = vadd.f32 %v3378, %v3481
    %v3483 = vpop.f32.mrf.mxu0
    %3484 = vmatprep.mubr.bf16.mxu0 0
    %3485 = vmatmul.mubr.bf16.gmra.mxu0 %v3372
    %v3486 = vpop.f32.mrf.mxu0
    %v3487 = vadd.f32 %v3378, %v3486
    %v3488 = vpop.f32.mrf.mxu0
    %v3489 = vpop.f32.mrf.mxu0
    %v3490 = vadd.f32 %v3378, %v3489
    %v3491 = vpop.f32.mrf.mxu0
    %3492 = vdwg.mxu0
    %3493 = vmax.xlane.f32.xlu0 %v3463
    %v3494 = vpop.xlane.xlu0 %3493
    %3495 = vmax.xlane.f32.xlu0 %v3466
    %v3496 = vpop.xlane.xlu0 %3495
    %3497 = vmax.xlane.f32.xlu0 %v3471
    %v3498 = vpop.xlane.xlu0 %3497
    %3499 = vmax.xlane.f32.xlu0 %v3474
    %v3500 = vpop.xlane.xlu0 %3499
    %3501 = vmax.xlane.f32.xlu0 %v3479
    %v3502 = vpop.xlane.xlu0 %3501
    %3503 = vmax.xlane.f32.xlu0 %v3482
    %v3504 = vpop.xlane.xlu0 %3503
    %3505 = vmax.xlane.f32.xlu0 %v3487
    %v3506 = vpop.xlane.xlu0 %3505
    %3507 = vmax.xlane.f32.xlu0 %v3490
    %v3508 = vpop.xlane.xlu0 %3507
    %v3509 = vsub.f32 %v3463, %v3494
    %v3510 = vsub.f32 %v3466, %v3496
    %v3511 = vsub.f32 %v3471, %v3498
    %v3512 = vsub.f32 %v3474, %v3500
    %v3513 = vsub.f32 %v3479, %v3502
    %v3514 = vsub.f32 %v3482, %v3504
    %v3515 = vsub.f32 %v3487, %v3506
    %v3516 = vsub.f32 %v3490, %v3508
    %v3517 = vmul.f32 %v3509, 1.442695
    %v3518 = vpow.pop %v3517
    %v3519 = vmul.f32 %v3510, 1.442695
    %v3520 = vpow.pop %v3519
    %v3521 = vmul.f32 %v3511, 1.442695
    %v3522 = vpow.pop %v3521
    %v3523 = vmul.f32 %v3512, 1.442695
    %v3524 = vpow.pop %v3523
    %v3525 = vmul.f32 %v3513, 1.442695
    %v3526 = vpow.pop %v3525
    %v3527 = vmul.f32 %v3514, 1.442695
    %v3528 = vpow.pop %v3527
    %v3529 = vmul.f32 %v3515, 1.442695
    %v3530 = vpow.pop %v3529
    %v3531 = vmul.f32 %v3516, 1.442695
    %v3532 = vpow.pop %v3531
    %3533 = vadd.xlane.f32.xlu0 %v3518
    %v3534 = vpop.xlane.xlu0 %3533
    %3535 = vadd.xlane.f32.xlu0 %v3520
    %v3536 = vpop.xlane.xlu0 %3535
    %3537 = vadd.xlane.f32.xlu0 %v3522
    %v3538 = vpop.xlane.xlu0 %3537
    %3539 = vadd.xlane.f32.xlu0 %v3524
    %v3540 = vpop.xlane.xlu0 %3539
    %3541 = vadd.xlane.f32.xlu0 %v3526
    %v3542 = vpop.xlane.xlu0 %3541
    %3543 = vadd.xlane.f32.xlu0 %v3528
    %v3544 = vpop.xlane.xlu0 %3543
    %3545 = vadd.xlane.f32.xlu0 %v3530
    %v3546 = vpop.xlane.xlu0 %3545
    %3547 = vadd.xlane.f32.xlu0 %v3532
    %v3548 = vpop.xlane.xlu0 %3547
    %v3549 = vlog2.pop %v3534
    %v3550 = vmul.f32 %v3549, 0.6931472
    %v3551 = vlog2.pop %v3536
    %v3552 = vmul.f32 %v3551, 0.6931472
    %v3553 = vlog2.pop %v3538
    %v3554 = vmul.f32 %v3553, 0.6931472
    %v3555 = vlog2.pop %v3540
    %v3556 = vmul.f32 %v3555, 0.6931472
    %v3557 = vlog2.pop %v3542
    %v3558 = vmul.f32 %v3557, 0.6931472
    %v3559 = vlog2.pop %v3544
    %v3560 = vmul.f32 %v3559, 0.6931472
    %v3561 = vlog2.pop %v3546
    %v3562 = vmul.f32 %v3561, 0.6931472
    %v3563 = vlog2.pop %v3548
    %v3564 = vmul.f32 %v3563, 0.6931472
    %v3565 = vadd.f32 %v3494, %v3550
    %v3566 = vadd.f32 %v3496, %v3552
    %v3567 = vadd.f32 %v3498, %v3554
    %v3568 = vadd.f32 %v3500, %v3556
    %v3569 = vadd.f32 %v3502, %v3558
    %v3570 = vadd.f32 %v3504, %v3560
    %v3571 = vadd.f32 %v3506, %v3562
    %v3572 = vadd.f32 %v3508, %v3564
    %v3573 = vsub.f32 %v3463, %v3565
    %v3574 = vsub.f32 %v3466, %v3566
    %v3575 = vsub.f32 %v3471, %v3567
    %v3576 = vsub.f32 %v3474, %v3568
    %v3577 = vsub.f32 %v3479, %v3569
    %v3578 = vsub.f32 %v3482, %v3570
    %v3579 = vsub.f32 %v3487, %v3571
    %v3580 = vsub.f32 %v3490, %v3572
    %3581 = vst [vmem:[#allocation23] sm:$0xff] %v3573
    %3582 = vst [vmem:[#allocation23 + $0x8] sm:$0xff] %v3574
    %3583 = vst [vmem:[#allocation23 + $0x10] sm:$0xff] %v3575
    %3584 = vst [vmem:[#allocation23 + $0x18] sm:$0xff] %v3576
    %3585 = vst [vmem:[#allocation23 + $0x20] sm:$0xff] %v3577
    %3586 = vst [vmem:[#allocation23 + $0x28] sm:$0xff] %v3578
    %3587 = vst [vmem:[#allocation23 + $0x30] sm:$0xff] %v3579
    %3588 = vst [vmem:[#allocation23 + $0x38] sm:$0xff] %v3580
    // Predicated region
    $region86: #{tpu_custom_call.1} parent=1 // pred_check
      _
    $region87: #{tpu_custom_call.1} parent=1 // pred_check_branch
      %3590 = sbr.rel (0) target = $region89
    $region88: #{tpu_custom_call.1} parent=1 // pred_region
      %s3592 = ssub.s32 1024, 1024
      %3593 = vsyncadd [#allocation10], %s3592
      %s3594 = sshll.u32 [#allocation23], 4
      %s3595 = int_to_ptr.vmem [resolvable:$true] %s3594
      %3600 = dma.vmem_to_hbm [thread:$0]  %s3595, 1024, %s12, [#allocation10], 128, 128, 8
    $region89: #{tpu_custom_call.1} parent=1 // pred_fallthru
      _
    // Predicated region
    $region90: #{tpu_custom_call.1} parent=1 // pred_check
      _
    $region91: #{tpu_custom_call.1} parent=1 // pred_check_branch
      %3602 = sbr.rel (0) target = $region93
    $region92: #{tpu_custom_call.1} parent=1 // pred_region
      %s3604 = ssub.s32 1024, 1024
      %3605 = vsyncadd [#allocation25], %s3604
      %s3606 = sshll.u32 [#allocation24], 4
      %s3607 = int_to_ptr.vmem [resolvable:$true] %s3606
      %3612 = dma.vmem_to_hbm [thread:$0]  %s3607, 1024, %s13, [#allocation25], 128, 128, 8
    $region93: #{tpu_custom_call.1} parent=1 // pred_fallthru
      _
    // Predicated region
    $region94: #{tpu_custom_call.1} parent=1 // pred_check
      _
    $region95: #{tpu_custom_call.1} parent=1 // pred_check_branch
      %3614 = sbr.rel (0) target = $region97
    $region96: #{tpu_custom_call.1} parent=1 // pred_region
      %s3616 = ssub.s32 1024, 1024
      %3617 = vsyncadd [#allocation25], %s3616
      %s3618 = sshll.u32 [#allocation26], 4
      %s3619 = int_to_ptr.vmem [resolvable:$true] %s3618
      %3624 = dma.vmem_to_hbm [thread:$0]  %s3619, 1024, %s14, [#allocation25], 128, 128, 8
    $region97: #{tpu_custom_call.1} parent=1 // pred_fallthru
      _
    // Predicated region
    $region98: #{tpu_custom_call.1} parent=1 // pred_check
      _
    $region99: #{tpu_custom_call.1} parent=1 // pred_check_branch
      %3626 = sbr.rel (0) target = $region101
    $region100: #{tpu_custom_call.1} parent=1 // pred_region
      %s3628 = ssub.s32 256, 256
      %3629 = vsyncadd [#allocation28], %s3628
      %s3630 = sshll.u32 [#allocation27], 4
      %s3631 = int_to_ptr.vmem [resolvable:$true] %s3630
      %3636 = dma.vmem_to_hbm [thread:$0]  %s3631, 256, %s15, [#allocation28], 128, 128, 8
    $region101: #{tpu_custom_call.1} parent=1 // pred_fallthru
      _
    // Predicated region
    $region102: #{tpu_custom_call.1} parent=1 // pred_check
      _
    $region103: #{tpu_custom_call.1} parent=1 // pred_check_branch
      %3638 = sbr.rel (0) target = $region105
    $region104: #{tpu_custom_call.1} parent=1 // pred_region
      %3639 = dma.done [#allocation10], 1024
    $region105: #{tpu_custom_call.1} parent=1 // pred_fallthru
      _
    // Predicated region
    $region106: #{tpu_custom_call.1} parent=1 // pred_check
      _
    $region107: #{tpu_custom_call.1} parent=1 // pred_check_branch
      %3641 = sbr.rel (0) target = $region109
    $region108: #{tpu_custom_call.1} parent=1 // pred_region
      %3642 = dma.done [#allocation25], 1024
    $region109: #{tpu_custom_call.1} parent=1 // pred_fallthru
      _
    // Predicated region
    $region110: #{tpu_custom_call.1} parent=1 // pred_check
      _
    $region111: #{tpu_custom_call.1} parent=1 // pred_check_branch
      %3644 = sbr.rel (0) target = $region113
    $region112: #{tpu_custom_call.1} parent=1 // pred_region
      %3645 = dma.done [#allocation25], 1024
    $region113: #{tpu_custom_call.1} parent=1 // pred_fallthru
      _
    // Predicated region
    $region114: #{tpu_custom_call.1} parent=1 // pred_check
      _
    $region115: #{tpu_custom_call.1} parent=1 // pred_check_branch
      %3647 = sbr.rel (0) target = $region117
    $region116: #{tpu_custom_call.1} parent=1 // pred_region
      %3648 = dma.done [#allocation28], 256
    $region117: #{tpu_custom_call.1} parent=1 // pred_fallthru
      _
    %3649 = vsyncpa [#allocation9], 1
    %3650 = vsyncpa [#allocation12], 1
    %3651 = vsyncpa [#allocation15], 1
    %3652 = vsyncpa [#allocation18], 1
    %3653 = vsyncpa [#allocation21], 1
    %3654 = vsyncpa [#allocation10], 1
    %3655 = vsyncpa [#allocation25], 1
    %3656 = vsyncpa [#allocation28], 1

</llo_original>
